<compile_context>
chip_gen: v6e
topology: v6e:2x2x1
jax: 0.10.0
libtpu: 0.0.40
codegen_flags: <defaults>
</compile_context>

<pallas_src>
import functools
import math

import jax
import jax.numpy as jnp
from jax.experimental import pallas as pl
from jax.experimental.pallas import tpu as pltpu

D_MODEL = 32
D_FEATURE = 8
N_HEADS = 4
D_FF = 64
EPS = 1e-8
HD = N_HEADS * D_FEATURE          # 32

# ---- parameter-slab row layout (everything starts at lane 0) ---------------
ROW_WQKV1 = 0        # (32, 96)  fused self-attn QKV weight (Q part pre-scaled)
ROW_WP1   = 32       # (32, 32)  self-attn output projection
ROW_WQ2   = 64       # (32, 32)  cross-attn Q weight (pre-scaled)
ROW_WKV2  = 96       # (32, 64)  fused cross-attn KV weight
ROW_WP2   = 128      # (32, 32)  cross-attn output projection
ROW_W1    = 160      # (32, 64)  FFN in
ROW_W2    = 192      # (64, 32)  FFN out
ROW_BQKV1 = 256      # (1, 96)
ROW_BP1   = 257      # (1, 32)
ROW_BQ2   = 258      # (1, 32)
ROW_BKV2  = 259      # (1, 64)
ROW_BP2   = 260      # (1, 32)
ROW_G1    = 261      # (1, 32)
ROW_BE1   = 262      # (1, 32)
ROW_G2    = 263      # (1, 32)
ROW_BE2   = 264      # (1, 32)
ROW_BF1   = 265      # (1, 64)
ROW_BF2   = 266      # (1, 32)
PARAM_ROWS = 272     # padded to a multiple of 8 sublanes
PARAM_LANES = 128    # lane-dense slab -> one unmasked DMA


# ---------------------------------------------------------------------------
# Fused kernel
# ---------------------------------------------------------------------------
def _decoder_block_kernel(x_ref, enc_ref, p_ref, o_ref, *, batch, seq_q, seq_kv,
                          n_heads, d_feature):
    df = d_feature
    hd = n_heads * df

    def bias(row, width):
        # (1, width) row of the parameter slab; broadcasts over sublanes.
        return p_ref[row:row + 1, 0:width]

    def ln_residual(x_flat, y_flat, gamma, beta):
        # out = x + LayerNorm(y); matches torch (unbiased std, eps added to std).
        d = y_flat.shape[-1]
        mean = jnp.mean(y_flat, axis=-1, keepdims=True)
        c = y_flat - mean
        std = jnp.sqrt(jnp.sum(c * c, axis=-1, keepdims=True) / (d - 1))
        return x_flat + (gamma * c / (std + EPS) + beta)

    def split_heads(mat, base, s):
        # (B*s, ...) lane blocks [base + h*df, base + (h+1)*df) -> head-major
        # batch (H*B, s, df) so all heads share one batched einsum.
        return jnp.concatenate(
            [mat[:, base + h * df: base + (h + 1) * df].reshape(batch, s, df)
             for h in range(n_heads)], axis=0)

    def merge_heads(ctx, s):
        # (H*B, s, df) -> (B*s, H*df): heads back onto lanes (concat order ==
        # reference torch.cat order) for a single K=HD output projection.
        return jnp.concatenate(
            [ctx[h * batch:(h + 1) * batch].reshape(batch * s, df)
             for h in range(n_heads)], axis=-1)

    def attend(Qh, Kh, Vh, wp, bp, s_q):
        # All-head batched score / softmax / context; 1/sqrt(df) already folded
        # into the Q projection weights at pack time.
        sc = jnp.einsum("bqd,bkd->bqk", Qh, Kh, preferred_element_type=jnp.float32)
        e = jnp.exp(sc)   # reference quirk: exp/sum softmax without max-subtraction
        attn = e / jnp.sum(e, axis=-1, keepdims=True)
        ctx = jnp.einsum("bqk,bkd->bqd", attn, Vh, preferred_element_type=jnp.float32)
        return jnp.dot(merge_heads(ctx, s_q), wp,
                       preferred_element_type=jnp.float32) + bp

    x = x_ref[...]        # (B*Sq, D)
    enc = enc_ref[...]    # (B*Skv, D)

    g1, be1 = bias(ROW_G1, D_MODEL), bias(ROW_BE1, D_MODEL)
    g2, be2 = bias(ROW_G2, D_MODEL), bias(ROW_BE2, D_MODEL)

    # ---- masked (self) attention: single fused QKV projection --------------
    wqkv1 = p_ref[ROW_WQKV1:ROW_WQKV1 + D_MODEL, 0:3 * hd]
    qkv = jnp.dot(x, wqkv1, preferred_element_type=jnp.float32) + bias(ROW_BQKV1, 3 * hd)
    Qh = split_heads(qkv, 0, seq_q)
    Kh = split_heads(qkv, hd, seq_q)
    Vh = split_heads(qkv, 2 * hd, seq_q)
    wp1 = p_ref[ROW_WP1:ROW_WP1 + hd, 0:D_MODEL]
    att = attend(Qh, Kh, Vh, wp1, bias(ROW_BP1, D_MODEL), seq_q)
    x = ln_residual(x, att, g1, be1)

    # ---- cross attention: Q from decoder state, fused KV from encoder ------
    wq2 = p_ref[ROW_WQ2:ROW_WQ2 + D_MODEL, 0:hd]
    wkv2 = p_ref[ROW_WKV2:ROW_WKV2 + D_MODEL, 0:2 * hd]
    q = jnp.dot(x, wq2, preferred_element_type=jnp.float32) + bias(ROW_BQ2, hd)
    kv = jnp.dot(enc, wkv2, preferred_element_type=jnp.float32) + bias(ROW_BKV2, 2 * hd)
    Qh = split_heads(q, 0, seq_q)
    Kh = split_heads(kv, 0, seq_kv)
    Vh = split_heads(kv, hd, seq_kv)
    wp2 = p_ref[ROW_WP2:ROW_WP2 + hd, 0:D_MODEL]
    att = attend(Qh, Kh, Vh, wp2, bias(ROW_BP2, D_MODEL), seq_q)
    x = ln_residual(x, att, g2, be2)

    # ---- position-wise feed-forward -----------------------------------------
    w1 = p_ref[ROW_W1:ROW_W1 + D_MODEL, 0:D_FF]
    w2 = p_ref[ROW_W2:ROW_W2 + D_FF, 0:D_MODEL]
    h = jnp.dot(x, w1, preferred_element_type=jnp.float32) + bias(ROW_BF1, D_FF)
    h = jnp.maximum(h, 0.0)
    pos = jnp.dot(h, w2, preferred_element_type=jnp.float32) + bias(ROW_BF2, D_MODEL)
    # NOTE: original module applies layer_norm2 (not layer_norm3) here -> preserved.
    x = ln_residual(x, pos, g2, be2)

    o_ref[...] = x


# ---------------------------------------------------------------------------
# Wrapper
# ---------------------------------------------------------------------------
def decoder_block(x, enc_out, param_slab):
    B, Sq, D = x.shape
    Skv = enc_out.shape[1]
    kern = functools.partial(_decoder_block_kernel, batch=B, seq_q=Sq, seq_kv=Skv,
                             n_heads=N_HEADS, d_feature=D_FEATURE)
    out = pl.pallas_call(
        kern,
        out_shape=jax.ShapeDtypeStruct((B * Sq, D), jnp.float32),
        # No grid: everything resident in VMEM for the single fused invocation.
        # 3 input DMAs total (x, enc_out, one packed parameter slab).
        in_specs=[pl.BlockSpec(memory_space=pltpu.MemorySpace.VMEM)] * 3,
        out_specs=pl.BlockSpec(memory_space=pltpu.MemorySpace.VMEM),
    )(x.reshape(B * Sq, D), enc_out.reshape(B * Skv, D), param_slab)
    return out.reshape(B, Sq, D)


def pack_params(params):
    """One-time packing of all weights/biases into a single (272,128) VMEM slab.

    Fuses QKV (self-attn) and KV (cross-attn) weights and folds 1/sqrt(d_feature)
    into the Q projections so the kernel never multiplies by the scale.
    """
    scale = 1.0 / math.sqrt(D_FEATURE)
    m1, m2, f = params["mha1"], params["mha2"], params["ffn"]
    slab = jnp.zeros((PARAM_ROWS, PARAM_LANES), jnp.float32)

    def put(s, row, arr):
        arr = jnp.asarray(arr, jnp.float32)
        if arr.ndim == 1:
            arr = arr.reshape(1, -1)
        return s.at[row:row + arr.shape[0], 0:arr.shape[1]].set(arr)

    wqkv1 = jnp.concatenate([m1["wq"] * scale, m1["wk"], m1["wv"]], axis=1)  # (32,96)
    bqkv1 = jnp.concatenate([m1["bq"] * scale, m1["bk"], m1["bv"]], axis=1)  # (1,96)
    wkv2 = jnp.concatenate([m2["wk"], m2["wv"]], axis=1)                     # (32,64)
    bkv2 = jnp.concatenate([m2["bk"], m2["bv"]], axis=1)                     # (1,64)

    slab = put(slab, ROW_WQKV1, wqkv1)
    slab = put(slab, ROW_WP1, m1["wp"])
    slab = put(slab, ROW_WQ2, m2["wq"] * scale)
    slab = put(slab, ROW_WKV2, wkv2)
    slab = put(slab, ROW_WP2, m2["wp"])
    slab = put(slab, ROW_W1, f["w1"])
    slab = put(slab, ROW_W2, f["w2"])
    slab = put(slab, ROW_BQKV1, bqkv1)
    slab = put(slab, ROW_BP1, m1["bp"])
    slab = put(slab, ROW_BQ2, m2["bq"] * scale)
    slab = put(slab, ROW_BKV2, bkv2)
    slab = put(slab, ROW_BP2, m2["bp"])
    slab = put(slab, ROW_G1, params["ln1"]["gamma"])
    slab = put(slab, ROW_BE1, params["ln1"]["beta"])
    slab = put(slab, ROW_G2, params["ln2"]["gamma"])
    slab = put(slab, ROW_BE2, params["ln2"]["beta"])
    slab = put(slab, ROW_BF1, f["b1"])
    slab = put(slab, ROW_BF2, f["b2"])
    return slab


# ---------------------------------------------------------------------------
# Deterministic parameter init + pure-JAX reference (unpacked, unscaled)
# ---------------------------------------------------------------------------
def init_params(key):
    ks = iter(jax.random.split(key, 32))

    def lin(kin, kout):
        kw, kb = next(ks), next(ks)
        w = jax.random.normal(kw, (kin, kout), jnp.float32) * 0.05
        b = jax.random.normal(kb, (1, kout), jnp.float32) * 0.05
        return w, b

    def mha_params():
        wq, bq = lin(D_MODEL, HD)
        wk, bk = lin(D_MODEL, HD)
        wv, bv = lin(D_MODEL, HD)
        wp, bp = lin(HD, D_MODEL)
        return dict(wq=wq, bq=bq, wk=wk, bk=bk, wv=wv, bv=bv, wp=wp, bp=bp)

    def ln_params():
        return dict(gamma=jnp.ones((1, D_MODEL), jnp.float32),
                    beta=jnp.zeros((1, D_MODEL), jnp.float32))

    w1, b1 = lin(D_MODEL, D_FF)
    w2, b2 = lin(D_FF, D_MODEL)
    return dict(
        mha1=mha_params(), mha2=mha_params(),
        ffn=dict(w1=w1, b1=b1, w2=w2, b2=b2),
        ln1=ln_params(), ln2=ln_params(), ln3=ln_params(),  # ln3 unused (module quirk)
    )


def _ref_mha(q, kv, p):
    Q = q @ p["wq"] + p["bq"]
    K = kv @ p["wk"] + p["bk"]
    V = kv @ p["wv"] + p["bv"]
    outs = []
    for h in range(N_HEADS):
        sl = slice(h * D_FEATURE, (h + 1) * D_FEATURE)
        a = jnp.einsum("bqd,bkd->bqk", Q[..., sl], K[..., sl]) / math.sqrt(D_FEATURE)
        a = jnp.exp(a)
        a = a / a.sum(-1, keepdims=True)
        outs.append(jnp.einsum("bqk,bkd->bqd", a, V[..., sl]))
    return jnp.concatenate(outs, axis=-1) @ p["wp"] + p["bp"]


def _ref_ln_res(x, y, p):
    mean = y.mean(-1, keepdims=True)
    std = jnp.sqrt(((y - mean) ** 2).sum(-1, keepdims=True) / (y.shape[-1] - 1))
    return x + (p["gamma"] * (y - mean) / (std + EPS) + p["beta"])


def _ref_decoder(x, enc_out, params):
    att = _ref_mha(x, x, params["mha1"])
    x = _ref_ln_res(x, att, params["ln1"])
    att = _ref_mha(x, enc_out, params["mha2"])
    x = _ref_ln_res(x, att, params["ln2"])
    p = params["ffn"]
    pos = jnp.maximum(x @ p["w1"] + p["b1"], 0.0) @ p["w2"] + p["b2"]
    return _ref_ln_res(x, pos, params["ln2"])


# ---------------------------------------------------------------------------
if __name__ == "__main__":
    key = jax.random.PRNGKey(0)
    kx, ke, kp = jax.random.split(key, 3)

    B, S_Q, S_KV = 2, 8, 8
    x = jax.random.normal(kx, (B, S_Q, D_MODEL), jnp.float32)
    enc_out = jax.random.normal(ke, (B, S_KV, D_MODEL), jnp.float32)
    params = init_params(kp)
    param_slab = jax.block_until_ready(pack_params(params))  # one-time packing

    out = jax.block_until_ready(decoder_block(x, enc_out, param_slab))
    ref = jax.block_until_ready(_ref_decoder(x, enc_out, params))

    assert out.shape == (B, S_Q, D_MODEL)
    assert jnp.allclose(out, ref, atol=1e-4, rtol=1e-4), "mismatch vs JAX reference"
    print("KERNEL_OK")
</pallas_src>

<mosaic_0001>
module attributes {stable_mosaic.version = 11 : i64} {
  func.func @_decoder_block_kernel(%arg0: memref<16x32xf32, #tpu.memory_space<vmem>>, %arg1: memref<16x32xf32, #tpu.memory_space<vmem>>, %arg2: memref<272x128xf32, #tpu.memory_space<vmem>>, %arg3: memref<16x32xf32, #tpu.memory_space<vmem>>) attributes {dimension_semantics = [], scalar_prefetch = 0 : i64, scratch_operands = 0 : i64, tpu.core_type = #tpu.core_type<tc>} {
    %c0 = arith.constant 0 : index
    %c0_0 = arith.constant 0 : index
    %0 = vector.load %arg0[%c0, %c0_0] : memref<16x32xf32, #tpu.memory_space<vmem>>, vector<16x32xf32>
    %c0_1 = arith.constant 0 : index
    %c0_2 = arith.constant 0 : index
    %1 = vector.load %arg1[%c0_1, %c0_2] : memref<16x32xf32, #tpu.memory_space<vmem>>, vector<16x32xf32>
    %c261 = arith.constant 261 : index
    %c0_3 = arith.constant 0 : index
    %2 = vector.load %arg2[%c261, %c0_3] : memref<272x128xf32, #tpu.memory_space<vmem>>, vector<1x32xf32>
    %c262 = arith.constant 262 : index
    %c0_4 = arith.constant 0 : index
    %3 = vector.load %arg2[%c262, %c0_4] : memref<272x128xf32, #tpu.memory_space<vmem>>, vector<1x32xf32>
    %c263 = arith.constant 263 : index
    %c0_5 = arith.constant 0 : index
    %4 = vector.load %arg2[%c263, %c0_5] : memref<272x128xf32, #tpu.memory_space<vmem>>, vector<1x32xf32>
    %c264 = arith.constant 264 : index
    %c0_6 = arith.constant 0 : index
    %5 = vector.load %arg2[%c264, %c0_6] : memref<272x128xf32, #tpu.memory_space<vmem>>, vector<1x32xf32>
    %c0_7 = arith.constant 0 : index
    %c0_8 = arith.constant 0 : index
    %6 = vector.load %arg2[%c0_7, %c0_8] : memref<272x128xf32, #tpu.memory_space<vmem>>, vector<32x96xf32>
    %cst = arith.constant dense<0.000000e+00> : vector<16x96xf32>
    %7 = tpu.matmul %0, %6, %cst {dimension_numbers = #tpu.dot_dimension_numbers<[1], [0], [0], [1], [0, 0, 1, 1], [], []>} : vector<16x32xf32>, vector<32x96xf32>, vector<16x96xf32> -> vector<16x96xf32>
    %c256 = arith.constant 256 : index
    %c0_9 = arith.constant 0 : index
    %8 = vector.load %arg2[%c256, %c0_9] : memref<272x128xf32, #tpu.memory_space<vmem>>, vector<1x96xf32>
    %9 = vector.broadcast %8 : vector<1x96xf32> to vector<16x96xf32>
    %10 = arith.addf %7, %9 : vector<16x96xf32>
    %11 = vector.extract_strided_slice %10 {offsets = [0, 0], sizes = [16, 8], strides = [1, 1]} : vector<16x96xf32> to vector<16x8xf32>
    %12 = vector.shape_cast %11 : vector<16x8xf32> to vector<2x8x8xf32>
    %13 = vector.extract_strided_slice %10 {offsets = [0, 8], sizes = [16, 8], strides = [1, 1]} : vector<16x96xf32> to vector<16x8xf32>
    %14 = vector.shape_cast %13 : vector<16x8xf32> to vector<2x8x8xf32>
    %15 = vector.extract_strided_slice %10 {offsets = [0, 16], sizes = [16, 8], strides = [1, 1]} : vector<16x96xf32> to vector<16x8xf32>
    %16 = vector.shape_cast %15 : vector<16x8xf32> to vector<2x8x8xf32>
    %17 = vector.extract_strided_slice %10 {offsets = [0, 24], sizes = [16, 8], strides = [1, 1]} : vector<16x96xf32> to vector<16x8xf32>
    %18 = vector.shape_cast %17 : vector<16x8xf32> to vector<2x8x8xf32>
    %19 = tpu.concatenate %12, %14, %16, %18 in 0 : vector<2x8x8xf32>, vector<2x8x8xf32>, vector<2x8x8xf32>, vector<2x8x8xf32> -> vector<8x8x8xf32>
    %20 = vector.extract_strided_slice %10 {offsets = [0, 32], sizes = [16, 8], strides = [1, 1]} : vector<16x96xf32> to vector<16x8xf32>
    %21 = vector.shape_cast %20 : vector<16x8xf32> to vector<2x8x8xf32>
    %22 = vector.extract_strided_slice %10 {offsets = [0, 40], sizes = [16, 8], strides = [1, 1]} : vector<16x96xf32> to vector<16x8xf32>
    %23 = vector.shape_cast %22 : vector<16x8xf32> to vector<2x8x8xf32>
    %24 = vector.extract_strided_slice %10 {offsets = [0, 48], sizes = [16, 8], strides = [1, 1]} : vector<16x96xf32> to vector<16x8xf32>
    %25 = vector.shape_cast %24 : vector<16x8xf32> to vector<2x8x8xf32>
    %26 = vector.extract_strided_slice %10 {offsets = [0, 56], sizes = [16, 8], strides = [1, 1]} : vector<16x96xf32> to vector<16x8xf32>
    %27 = vector.shape_cast %26 : vector<16x8xf32> to vector<2x8x8xf32>
    %28 = tpu.concatenate %21, %23, %25, %27 in 0 : vector<2x8x8xf32>, vector<2x8x8xf32>, vector<2x8x8xf32>, vector<2x8x8xf32> -> vector<8x8x8xf32>
    %29 = vector.extract_strided_slice %10 {offsets = [0, 64], sizes = [16, 8], strides = [1, 1]} : vector<16x96xf32> to vector<16x8xf32>
    %30 = vector.shape_cast %29 : vector<16x8xf32> to vector<2x8x8xf32>
    %31 = vector.extract_strided_slice %10 {offsets = [0, 72], sizes = [16, 8], strides = [1, 1]} : vector<16x96xf32> to vector<16x8xf32>
    %32 = vector.shape_cast %31 : vector<16x8xf32> to vector<2x8x8xf32>
    %33 = vector.extract_strided_slice %10 {offsets = [0, 80], sizes = [16, 8], strides = [1, 1]} : vector<16x96xf32> to vector<16x8xf32>
    %34 = vector.shape_cast %33 : vector<16x8xf32> to vector<2x8x8xf32>
    %35 = vector.extract_strided_slice %10 {offsets = [0, 88], sizes = [16, 8], strides = [1, 1]} : vector<16x96xf32> to vector<16x8xf32>
    %36 = vector.shape_cast %35 : vector<16x8xf32> to vector<2x8x8xf32>
    %37 = tpu.concatenate %30, %32, %34, %36 in 0 : vector<2x8x8xf32>, vector<2x8x8xf32>, vector<2x8x8xf32>, vector<2x8x8xf32> -> vector<8x8x8xf32>
    %c32 = arith.constant 32 : index
    %c0_10 = arith.constant 0 : index
    %38 = vector.load %arg2[%c32, %c0_10] : memref<272x128xf32, #tpu.memory_space<vmem>>, vector<32x32xf32>
    %c257 = arith.constant 257 : index
    %c0_11 = arith.constant 0 : index
    %39 = vector.load %arg2[%c257, %c0_11] : memref<272x128xf32, #tpu.memory_space<vmem>>, vector<1x32xf32>
    "tpu.trace_start"() <{level = 10 : i32, message = "bqd,bkd->bqk"}> : () -> ()
    %cst_12 = arith.constant dense<0.000000e+00> : vector<8x8x8xf32>
    %40 = tpu.matmul %19, %28, %cst_12 {dimension_numbers = #tpu.dot_dimension_numbers<[2], [2], [1], [1], [0, 0, 0, 1, 1, 1], [0], [0]>} : vector<8x8x8xf32>, vector<8x8x8xf32>, vector<8x8x8xf32> -> vector<8x8x8xf32>
    "tpu.trace_stop"() : () -> ()
    %41 = math.exp %40 : vector<8x8x8xf32>
    %cst_13 = arith.constant dense<0.000000e+00> : vector<8x8xf32>
    %42 = vector.multi_reduction <add>, %41, %cst_13 [2] : vector<8x8x8xf32> to vector<8x8xf32>
    %43 = vector.shape_cast %42 : vector<8x8xf32> to vector<8x8x1xf32>
    %44 = vector.broadcast %43 : vector<8x8x1xf32> to vector<8x8x8xf32>
    %45 = arith.divf %41, %44 : vector<8x8x8xf32>
    "tpu.trace_start"() <{level = 10 : i32, message = "bqk,bkd->bqd"}> : () -> ()
    %cst_14 = arith.constant dense<0.000000e+00> : vector<8x8x8xf32>
    %46 = tpu.matmul %45, %37, %cst_14 {dimension_numbers = #tpu.dot_dimension_numbers<[2], [1], [1], [2], [0, 0, 0, 1, 1, 2], [0], [0]>} : vector<8x8x8xf32>, vector<8x8x8xf32>, vector<8x8x8xf32> -> vector<8x8x8xf32>
    "tpu.trace_stop"() : () -> ()
    %47 = vector.extract_strided_slice %46 {offsets = [0, 0, 0], sizes = [2, 8, 8], strides = [1, 1, 1]} : vector<8x8x8xf32> to vector<2x8x8xf32>
    %48 = vector.shape_cast %47 : vector<2x8x8xf32> to vector<16x8xf32>
    %49 = vector.extract_strided_slice %46 {offsets = [2, 0, 0], sizes = [2, 8, 8], strides = [1, 1, 1]} : vector<8x8x8xf32> to vector<2x8x8xf32>
    %50 = vector.shape_cast %49 : vector<2x8x8xf32> to vector<16x8xf32>
    %51 = vector.extract_strided_slice %46 {offsets = [4, 0, 0], sizes = [2, 8, 8], strides = [1, 1, 1]} : vector<8x8x8xf32> to vector<2x8x8xf32>
    %52 = vector.shape_cast %51 : vector<2x8x8xf32> to vector<16x8xf32>
    %53 = vector.extract_strided_slice %46 {offsets = [6, 0, 0], sizes = [2, 8, 8], strides = [1, 1, 1]} : vector<8x8x8xf32> to vector<2x8x8xf32>
    %54 = vector.shape_cast %53 : vector<2x8x8xf32> to vector<16x8xf32>
    %55 = tpu.concatenate %48, %50, %52, %54 in 1 : vector<16x8xf32>, vector<16x8xf32>, vector<16x8xf32>, vector<16x8xf32> -> vector<16x32xf32>
    %cst_15 = arith.constant dense<0.000000e+00> : vector<16x32xf32>
    %56 = tpu.matmul %55, %38, %cst_15 {dimension_numbers = #tpu.dot_dimension_numbers<[1], [0], [0], [1], [0, 0, 1, 1], [], []>} : vector<16x32xf32>, vector<32x32xf32>, vector<16x32xf32> -> vector<16x32xf32>
    %57 = vector.broadcast %39 : vector<1x32xf32> to vector<16x32xf32>
    %58 = arith.addf %56, %57 : vector<16x32xf32>
    %cst_16 = arith.constant dense<0.000000e+00> : vector<16xf32>
    %59 = vector.multi_reduction <add>, %58, %cst_16 [1] : vector<16x32xf32> to vector<16xf32>
    %60 = vector.shape_cast %59 : vector<16xf32> to vector<16x1xf32>
    %cst_17 = arith.constant 3.200000e+01 : f32
    %61 = vector.broadcast %cst_17 : f32 to vector<16x1xf32>
    %62 = arith.divf %60, %61 : vector<16x1xf32>
    %63 = vector.broadcast %62 : vector<16x1xf32> to vector<16x32xf32>
    %64 = arith.subf %58, %63 : vector<16x32xf32>
    %65 = arith.mulf %64, %64 : vector<16x32xf32>
    %cst_18 = arith.constant dense<0.000000e+00> : vector<16xf32>
    %66 = vector.multi_reduction <add>, %65, %cst_18 [1] : vector<16x32xf32> to vector<16xf32>
    %67 = vector.shape_cast %66 : vector<16xf32> to vector<16x1xf32>
    %cst_19 = arith.constant 3.100000e+01 : f32
    %68 = vector.broadcast %cst_19 : f32 to vector<16x1xf32>
    %69 = arith.divf %67, %68 : vector<16x1xf32>
    %70 = math.sqrt %69 : vector<16x1xf32>
    %71 = vector.broadcast %2 : vector<1x32xf32> to vector<16x32xf32>
    %72 = arith.mulf %71, %64 : vector<16x32xf32>
    %cst_20 = arith.constant 9.99999993E-9 : f32
    %73 = vector.broadcast %cst_20 : f32 to vector<16x1xf32>
    %74 = arith.addf %70, %73 : vector<16x1xf32>
    %75 = vector.broadcast %74 : vector<16x1xf32> to vector<16x32xf32>
    %76 = arith.divf %72, %75 : vector<16x32xf32>
    %77 = vector.broadcast %3 : vector<1x32xf32> to vector<16x32xf32>
    %78 = arith.addf %76, %77 : vector<16x32xf32>
    %79 = arith.addf %0, %78 : vector<16x32xf32>
    %c64 = arith.constant 64 : index
    %c0_21 = arith.constant 0 : index
    %80 = vector.load %arg2[%c64, %c0_21] : memref<272x128xf32, #tpu.memory_space<vmem>>, vector<32x32xf32>
    %c96 = arith.constant 96 : index
    %c0_22 = arith.constant 0 : index
    %81 = vector.load %arg2[%c96, %c0_22] : memref<272x128xf32, #tpu.memory_space<vmem>>, vector<32x64xf32>
    %cst_23 = arith.constant dense<0.000000e+00> : vector<16x32xf32>
    %82 = tpu.matmul %79, %80, %cst_23 {dimension_numbers = #tpu.dot_dimension_numbers<[1], [0], [0], [1], [0, 0, 1, 1], [], []>} : vector<16x32xf32>, vector<32x32xf32>, vector<16x32xf32> -> vector<16x32xf32>
    %c258 = arith.constant 258 : index
    %c0_24 = arith.constant 0 : index
    %83 = vector.load %arg2[%c258, %c0_24] : memref<272x128xf32, #tpu.memory_space<vmem>>, vector<1x32xf32>
    %84 = vector.broadcast %83 : vector<1x32xf32> to vector<16x32xf32>
    %85 = arith.addf %82, %84 : vector<16x32xf32>
    %cst_25 = arith.constant dense<0.000000e+00> : vector<16x64xf32>
    %86 = tpu.matmul %1, %81, %cst_25 {dimension_numbers = #tpu.dot_dimension_numbers<[1], [0], [0], [1], [0, 0, 1, 1], [], []>} : vector<16x32xf32>, vector<32x64xf32>, vector<16x64xf32> -> vector<16x64xf32>
    %c259 = arith.constant 259 : index
    %c0_26 = arith.constant 0 : index
    %87 = vector.load %arg2[%c259, %c0_26] : memref<272x128xf32, #tpu.memory_space<vmem>>, vector<1x64xf32>
    %88 = vector.broadcast %87 : vector<1x64xf32> to vector<16x64xf32>
    %89 = arith.addf %86, %88 : vector<16x64xf32>
    %90 = vector.extract_strided_slice %85 {offsets = [0, 0], sizes = [16, 8], strides = [1, 1]} : vector<16x32xf32> to vector<16x8xf32>
    %91 = vector.shape_cast %90 : vector<16x8xf32> to vector<2x8x8xf32>
    %92 = vector.extract_strided_slice %85 {offsets = [0, 8], sizes = [16, 8], strides = [1, 1]} : vector<16x32xf32> to vector<16x8xf32>
    %93 = vector.shape_cast %92 : vector<16x8xf32> to vector<2x8x8xf32>
    %94 = vector.extract_strided_slice %85 {offsets = [0, 16], sizes = [16, 8], strides = [1, 1]} : vector<16x32xf32> to vector<16x8xf32>
    %95 = vector.shape_cast %94 : vector<16x8xf32> to vector<2x8x8xf32>
    %96 = vector.extract_strided_slice %85 {offsets = [0, 24], sizes = [16, 8], strides = [1, 1]} : vector<16x32xf32> to vector<16x8xf32>
    %97 = vector.shape_cast %96 : vector<16x8xf32> to vector<2x8x8xf32>
    %98 = tpu.concatenate %91, %93, %95, %97 in 0 : vector<2x8x8xf32>, vector<2x8x8xf32>, vector<2x8x8xf32>, vector<2x8x8xf32> -> vector<8x8x8xf32>
    %99 = vector.extract_strided_slice %89 {offsets = [0, 0], sizes = [16, 8], strides = [1, 1]} : vector<16x64xf32> to vector<16x8xf32>
    %100 = vector.shape_cast %99 : vector<16x8xf32> to vector<2x8x8xf32>
    %101 = vector.extract_strided_slice %89 {offsets = [0, 8], sizes = [16, 8], strides = [1, 1]} : vector<16x64xf32> to vector<16x8xf32>
    %102 = vector.shape_cast %101 : vector<16x8xf32> to vector<2x8x8xf32>
    %103 = vector.extract_strided_slice %89 {offsets = [0, 16], sizes = [16, 8], strides = [1, 1]} : vector<16x64xf32> to vector<16x8xf32>
    %104 = vector.shape_cast %103 : vector<16x8xf32> to vector<2x8x8xf32>
    %105 = vector.extract_strided_slice %89 {offsets = [0, 24], sizes = [16, 8], strides = [1, 1]} : vector<16x64xf32> to vector<16x8xf32>
    %106 = vector.shape_cast %105 : vector<16x8xf32> to vector<2x8x8xf32>
    %107 = tpu.concatenate %100, %102, %104, %106 in 0 : vector<2x8x8xf32>, vector<2x8x8xf32>, vector<2x8x8xf32>, vector<2x8x8xf32> -> vector<8x8x8xf32>
    %108 = vector.extract_strided_slice %89 {offsets = [0, 32], sizes = [16, 8], strides = [1, 1]} : vector<16x64xf32> to vector<16x8xf32>
    %109 = vector.shape_cast %108 : vector<16x8xf32> to vector<2x8x8xf32>
    %110 = vector.extract_strided_slice %89 {offsets = [0, 40], sizes = [16, 8], strides = [1, 1]} : vector<16x64xf32> to vector<16x8xf32>
    %111 = vector.shape_cast %110 : vector<16x8xf32> to vector<2x8x8xf32>
    %112 = vector.extract_strided_slice %89 {offsets = [0, 48], sizes = [16, 8], strides = [1, 1]} : vector<16x64xf32> to vector<16x8xf32>
    %113 = vector.shape_cast %112 : vector<16x8xf32> to vector<2x8x8xf32>
    %114 = vector.extract_strided_slice %89 {offsets = [0, 56], sizes = [16, 8], strides = [1, 1]} : vector<16x64xf32> to vector<16x8xf32>
    %115 = vector.shape_cast %114 : vector<16x8xf32> to vector<2x8x8xf32>
    %116 = tpu.concatenate %109, %111, %113, %115 in 0 : vector<2x8x8xf32>, vector<2x8x8xf32>, vector<2x8x8xf32>, vector<2x8x8xf32> -> vector<8x8x8xf32>
    %c128 = arith.constant 128 : index
    %c0_27 = arith.constant 0 : index
    %117 = vector.load %arg2[%c128, %c0_27] : memref<272x128xf32, #tpu.memory_space<vmem>>, vector<32x32xf32>
    %c260 = arith.constant 260 : index
    %c0_28 = arith.constant 0 : index
    %118 = vector.load %arg2[%c260, %c0_28] : memref<272x128xf32, #tpu.memory_space<vmem>>, vector<1x32xf32>
    "tpu.trace_start"() <{level = 10 : i32, message = "bqd,bkd->bqk"}> : () -> ()
    %cst_29 = arith.constant dense<0.000000e+00> : vector<8x8x8xf32>
    %119 = tpu.matmul %98, %107, %cst_29 {dimension_numbers = #tpu.dot_dimension_numbers<[2], [2], [1], [1], [0, 0, 0, 1, 1, 1], [0], [0]>} : vector<8x8x8xf32>, vector<8x8x8xf32>, vector<8x8x8xf32> -> vector<8x8x8xf32>
    "tpu.trace_stop"() : () -> ()
    %120 = math.exp %119 : vector<8x8x8xf32>
    %cst_30 = arith.constant dense<0.000000e+00> : vector<8x8xf32>
    %121 = vector.multi_reduction <add>, %120, %cst_30 [2] : vector<8x8x8xf32> to vector<8x8xf32>
    %122 = vector.shape_cast %121 : vector<8x8xf32> to vector<8x8x1xf32>
    %123 = vector.broadcast %122 : vector<8x8x1xf32> to vector<8x8x8xf32>
    %124 = arith.divf %120, %123 : vector<8x8x8xf32>
    "tpu.trace_start"() <{level = 10 : i32, message = "bqk,bkd->bqd"}> : () -> ()
    %cst_31 = arith.constant dense<0.000000e+00> : vector<8x8x8xf32>
    %125 = tpu.matmul %124, %116, %cst_31 {dimension_numbers = #tpu.dot_dimension_numbers<[2], [1], [1], [2], [0, 0, 0, 1, 1, 2], [0], [0]>} : vector<8x8x8xf32>, vector<8x8x8xf32>, vector<8x8x8xf32> -> vector<8x8x8xf32>
    "tpu.trace_stop"() : () -> ()
    %126 = vector.extract_strided_slice %125 {offsets = [0, 0, 0], sizes = [2, 8, 8], strides = [1, 1, 1]} : vector<8x8x8xf32> to vector<2x8x8xf32>
    %127 = vector.shape_cast %126 : vector<2x8x8xf32> to vector<16x8xf32>
    %128 = vector.extract_strided_slice %125 {offsets = [2, 0, 0], sizes = [2, 8, 8], strides = [1, 1, 1]} : vector<8x8x8xf32> to vector<2x8x8xf32>
    %129 = vector.shape_cast %128 : vector<2x8x8xf32> to vector<16x8xf32>
    %130 = vector.extract_strided_slice %125 {offsets = [4, 0, 0], sizes = [2, 8, 8], strides = [1, 1, 1]} : vector<8x8x8xf32> to vector<2x8x8xf32>
    %131 = vector.shape_cast %130 : vector<2x8x8xf32> to vector<16x8xf32>
    %132 = vector.extract_strided_slice %125 {offsets = [6, 0, 0], sizes = [2, 8, 8], strides = [1, 1, 1]} : vector<8x8x8xf32> to vector<2x8x8xf32>
    %133 = vector.shape_cast %132 : vector<2x8x8xf32> to vector<16x8xf32>
    %134 = tpu.concatenate %127, %129, %131, %133 in 1 : vector<16x8xf32>, vector<16x8xf32>, vector<16x8xf32>, vector<16x8xf32> -> vector<16x32xf32>
    %cst_32 = arith.constant dense<0.000000e+00> : vector<16x32xf32>
    %135 = tpu.matmul %134, %117, %cst_32 {dimension_numbers = #tpu.dot_dimension_numbers<[1], [0], [0], [1], [0, 0, 1, 1], [], []>} : vector<16x32xf32>, vector<32x32xf32>, vector<16x32xf32> -> vector<16x32xf32>
    %136 = vector.broadcast %118 : vector<1x32xf32> to vector<16x32xf32>
    %137 = arith.addf %135, %136 : vector<16x32xf32>
    %cst_33 = arith.constant dense<0.000000e+00> : vector<16xf32>
    %138 = vector.multi_reduction <add>, %137, %cst_33 [1] : vector<16x32xf32> to vector<16xf32>
    %139 = vector.shape_cast %138 : vector<16xf32> to vector<16x1xf32>
    %cst_34 = arith.constant 3.200000e+01 : f32
    %140 = vector.broadcast %cst_34 : f32 to vector<16x1xf32>
    %141 = arith.divf %139, %140 : vector<16x1xf32>
    %142 = vector.broadcast %141 : vector<16x1xf32> to vector<16x32xf32>
    %143 = arith.subf %137, %142 : vector<16x32xf32>
    %144 = arith.mulf %143, %143 : vector<16x32xf32>
    %cst_35 = arith.constant dense<0.000000e+00> : vector<16xf32>
    %145 = vector.multi_reduction <add>, %144, %cst_35 [1] : vector<16x32xf32> to vector<16xf32>
    %146 = vector.shape_cast %145 : vector<16xf32> to vector<16x1xf32>
    %cst_36 = arith.constant 3.100000e+01 : f32
    %147 = vector.broadcast %cst_36 : f32 to vector<16x1xf32>
    %148 = arith.divf %146, %147 : vector<16x1xf32>
    %149 = math.sqrt %148 : vector<16x1xf32>
    %150 = vector.broadcast %4 : vector<1x32xf32> to vector<16x32xf32>
    %151 = arith.mulf %150, %143 : vector<16x32xf32>
    %cst_37 = arith.constant 9.99999993E-9 : f32
    %152 = vector.broadcast %cst_37 : f32 to vector<16x1xf32>
    %153 = arith.addf %149, %152 : vector<16x1xf32>
    %154 = vector.broadcast %153 : vector<16x1xf32> to vector<16x32xf32>
    %155 = arith.divf %151, %154 : vector<16x32xf32>
    %156 = vector.broadcast %5 : vector<1x32xf32> to vector<16x32xf32>
    %157 = arith.addf %155, %156 : vector<16x32xf32>
    %158 = arith.addf %79, %157 : vector<16x32xf32>
    %c160 = arith.constant 160 : index
    %c0_38 = arith.constant 0 : index
    %159 = vector.load %arg2[%c160, %c0_38] : memref<272x128xf32, #tpu.memory_space<vmem>>, vector<32x64xf32>
    %c192 = arith.constant 192 : index
    %c0_39 = arith.constant 0 : index
    %160 = vector.load %arg2[%c192, %c0_39] : memref<272x128xf32, #tpu.memory_space<vmem>>, vector<64x32xf32>
    %cst_40 = arith.constant dense<0.000000e+00> : vector<16x64xf32>
    %161 = tpu.matmul %158, %159, %cst_40 {dimension_numbers = #tpu.dot_dimension_numbers<[1], [0], [0], [1], [0, 0, 1, 1], [], []>} : vector<16x32xf32>, vector<32x64xf32>, vector<16x64xf32> -> vector<16x64xf32>
    %c265 = arith.constant 265 : index
    %c0_41 = arith.constant 0 : index
    %162 = vector.load %arg2[%c265, %c0_41] : memref<272x128xf32, #tpu.memory_space<vmem>>, vector<1x64xf32>
    %163 = vector.broadcast %162 : vector<1x64xf32> to vector<16x64xf32>
    %164 = arith.addf %161, %163 : vector<16x64xf32>
    %cst_42 = arith.constant 0.000000e+00 : f32
    %165 = vector.broadcast %cst_42 : f32 to vector<16x64xf32>
    %166 = arith.maximumf %164, %165 : vector<16x64xf32>
    %cst_43 = arith.constant dense<0.000000e+00> : vector<16x32xf32>
    %167 = tpu.matmul %166, %160, %cst_43 {dimension_numbers = #tpu.dot_dimension_numbers<[1], [0], [0], [1], [0, 0, 1, 1], [], []>} : vector<16x64xf32>, vector<64x32xf32>, vector<16x32xf32> -> vector<16x32xf32>
    %c266 = arith.constant 266 : index
    %c0_44 = arith.constant 0 : index
    %168 = vector.load %arg2[%c266, %c0_44] : memref<272x128xf32, #tpu.memory_space<vmem>>, vector<1x32xf32>
    %169 = vector.broadcast %168 : vector<1x32xf32> to vector<16x32xf32>
    %170 = arith.addf %167, %169 : vector<16x32xf32>
    %cst_45 = arith.constant dense<0.000000e+00> : vector<16xf32>
    %171 = vector.multi_reduction <add>, %170, %cst_45 [1] : vector<16x32xf32> to vector<16xf32>
    %172 = vector.shape_cast %171 : vector<16xf32> to vector<16x1xf32>
    %cst_46 = arith.constant 3.200000e+01 : f32
    %173 = vector.broadcast %cst_46 : f32 to vector<16x1xf32>
    %174 = arith.divf %172, %173 : vector<16x1xf32>
    %175 = vector.broadcast %174 : vector<16x1xf32> to vector<16x32xf32>
    %176 = arith.subf %170, %175 : vector<16x32xf32>
    %177 = arith.mulf %176, %176 : vector<16x32xf32>
    %cst_47 = arith.constant dense<0.000000e+00> : vector<16xf32>
    %178 = vector.multi_reduction <add>, %177, %cst_47 [1] : vector<16x32xf32> to vector<16xf32>
    %179 = vector.shape_cast %178 : vector<16xf32> to vector<16x1xf32>
    %cst_48 = arith.constant 3.100000e+01 : f32
    %180 = vector.broadcast %cst_48 : f32 to vector<16x1xf32>
    %181 = arith.divf %179, %180 : vector<16x1xf32>
    %182 = math.sqrt %181 : vector<16x1xf32>
    %183 = vector.broadcast %4 : vector<1x32xf32> to vector<16x32xf32>
    %184 = arith.mulf %183, %176 : vector<16x32xf32>
    %cst_49 = arith.constant 9.99999993E-9 : f32
    %185 = vector.broadcast %cst_49 : f32 to vector<16x1xf32>
    %186 = arith.addf %182, %185 : vector<16x1xf32>
    %187 = vector.broadcast %186 : vector<16x1xf32> to vector<16x32xf32>
    %188 = arith.divf %184, %187 : vector<16x32xf32>
    %189 = vector.broadcast %5 : vector<1x32xf32> to vector<16x32xf32>
    %190 = arith.addf %188, %189 : vector<16x32xf32>
    %191 = arith.addf %158, %190 : vector<16x32xf32>
    %c0_50 = arith.constant 0 : index
    %c0_51 = arith.constant 0 : index
    %192 = vector.load %arg3[%c0_50, %c0_51] : memref<16x32xf32, #tpu.memory_space<vmem>>, vector<16x32xf32>
    tpu.vector_store %arg3[%c0_50, %c0_51], %191 {strides = array<i32>} : memref<16x32xf32, #tpu.memory_space<vmem>>, vector<16x32xf32>,
    return
  }
}

</mosaic_0001>

<llo_original>
// kernel: tpu_custom_call.1
$region0: #{tpu_custom_call.1}
  #allocation0 [shape = 'u32[]', space=smem, size = 0x4, offset = 0x4, fixed_abs, tag = 'smem constant byte address 0x4 - core index']
  #allocation1 [shape = 'u32[144,128]{1,0:T(1,128)}', space=vmem, size = 0x12000, scoped, tag = 'internal scratch']
  %s0 = inlined_call_operand.hbm [shape: f32[16,32], index: 0, kind: input, shape index: {}]
  %s1 = inlined_call_operand.hbm [shape: f32[16,32], index: 1, kind: input, shape index: {}]
  %s2 = inlined_call_operand.hbm [shape: f32[272,128], index: 2, kind: input, shape index: {}]
  %s3 = inlined_call_operand.hbm [shape: f32[16,32], index: 3, kind: output, shape index: {}]
  %s4 = sld [smem:[#allocation0]]
  $region34: #{tpu_custom_call.1} parent=0
    _
  %s6 = ssub.s32 1, %s4
  %s7 = scalar_select 0, %s6, %s4
  $region1: #{tpu_custom_call.1} parent=0
    #allocation2 [shape = 'u8[8192]{0}', space=vmem, size = 0x2000, scoped, tag = 'input window, operand 0, single buffered']
    #allocation3 [shape = 's32[1]{0}', space=sflag, size = 0x4, scoped, tag = 'scoped memory for tpu_custom_call.1']
    #allocation4 [shape = 's32[1]{0}', space=sflag, size = 0x4, scoped, tag = 'scoped memory for tpu_custom_call.1']
    #allocation5 [shape = 'u8[8192]{0}', space=vmem, size = 0x2000, scoped, tag = 'input window, operand 1, single buffered']
    #allocation6 [shape = 's32[1]{0}', space=sflag, size = 0x4, scoped, tag = 'scoped memory for tpu_custom_call.1']
    #allocation7 [shape = 'u8[139264]{0}', space=vmem, size = 0x22000, scoped, tag = 'input window, operand 2, single buffered']
    #allocation8 [shape = 'u8[8192]{0}', space=vmem, size = 0x2000, scoped, tag = 'output window, operand 0, single buffered']
    %8 = vsyncpa [#allocation3], 0
    %9 = vsyncpa [#allocation6], 0
    %10 = vsyncpa [#allocation4], 0
    // Predicated region
    $region2: #{tpu_custom_call.1} parent=1 // pred_check
      _
    $region3: #{tpu_custom_call.1} parent=1 // pred_check_branch
      %12 = sbr.rel (0) target = $region5
    $region4: #{tpu_custom_call.1} parent=1 // pred_region
      %s14 = ssub.s32 256, 256
      %15 = vsyncadd [#allocation3], %s14
      %s16 = sshll.u32 [#allocation2], 4
      %s17 = int_to_ptr.vmem [resolvable:$true] %s16
      %22 = dma.hbm_to_vmem [thread:$0]  %s0, 256, %s17, [#allocation3], 128, 128, 8
    $region5: #{tpu_custom_call.1} parent=1 // pred_fallthru
      _
    // Predicated region
    $region6: #{tpu_custom_call.1} parent=1 // pred_check
      _
    $region7: #{tpu_custom_call.1} parent=1 // pred_check_branch
      %24 = sbr.rel (0) target = $region9
    $region8: #{tpu_custom_call.1} parent=1 // pred_region
      %s26 = ssub.s32 256, 256
      %27 = vsyncadd [#allocation6], %s26
      %s28 = sshll.u32 [#allocation5], 4
      %s29 = int_to_ptr.vmem [resolvable:$true] %s28
      %34 = dma.hbm_to_vmem [thread:$0]  %s1, 256, %s29, [#allocation6], 128, 128, 8
    $region9: #{tpu_custom_call.1} parent=1 // pred_fallthru
      _
    // Predicated region
    $region10: #{tpu_custom_call.1} parent=1 // pred_check
      _
    $region11: #{tpu_custom_call.1} parent=1 // pred_check_branch
      %36 = sbr.rel (0) target = $region13
    $region12: #{tpu_custom_call.1} parent=1 // pred_region
      %s38 = ssub.s32 4352, 4352
      %39 = vsyncadd [#allocation6], %s38
      %s40 = sshll.u32 [#allocation7], 4
      %s41 = int_to_ptr.vmem [resolvable:$true] %s40
      %46 = dma.hbm_to_vmem [thread:$0]  %s2, 4352, %s41, [#allocation6], 128, 128, 8
    $region13: #{tpu_custom_call.1} parent=1 // pred_fallthru
      _
    // Predicated region
    $region14: #{tpu_custom_call.1} parent=1 // pred_check
      _
    $region15: #{tpu_custom_call.1} parent=1 // pred_check_branch
      %48 = sbr.rel (0) target = $region17
    $region16: #{tpu_custom_call.1} parent=1 // pred_region
      %49 = dma.done [#allocation3], 256
    $region17: #{tpu_custom_call.1} parent=1 // pred_fallthru
      _
    // Predicated region
    $region18: #{tpu_custom_call.1} parent=1 // pred_check
      _
    $region19: #{tpu_custom_call.1} parent=1 // pred_check_branch
      %51 = sbr.rel (0) target = $region21
    $region20: #{tpu_custom_call.1} parent=1 // pred_region
      %52 = dma.done [#allocation6], 256
    $region21: #{tpu_custom_call.1} parent=1 // pred_fallthru
      _
    // Predicated region
    $region22: #{tpu_custom_call.1} parent=1 // pred_check
      _
    $region23: #{tpu_custom_call.1} parent=1 // pred_check_branch
      %54 = sbr.rel (0) target = $region25
    $region24: #{tpu_custom_call.1} parent=1 // pred_region
      %55 = dma.done [#allocation6], 4352
    $region25: #{tpu_custom_call.1} parent=1 // pred_fallthru
      _
    %v56 = vld [vmem:[#allocation2] sm:$0xff]
    %v57 = vld [vmem:[#allocation2 + $0x8] sm:$0xff]
    %v58 = vld [vmem:[#allocation5] sm:$0xff]
    %v59 = vld [vmem:[#allocation5 + $0x8] sm:$0xff]
    %v60 = vld [vmem:[#allocation7 + $0x105] sm:$0x1]
    %v61 = vld [vmem:[#allocation7 + $0x106] sm:$0x1]
    %v62 = vld [vmem:[#allocation7 + $0x107] sm:$0x1]
    %v63 = vld [vmem:[#allocation7 + $0x108] sm:$0x1]
    %v64 = vld [vmem:[#allocation7] sm:$0xff]
    %v65 = vld [vmem:[#allocation7 + $0x8] sm:$0xff]
    %v66 = vld [vmem:[#allocation7 + $0x10] sm:$0xff]
    %v67 = vld [vmem:[#allocation7 + $0x18] sm:$0xff]
    %v68 = vld [vmem:[#allocation7 + $0x100] sm:$0x1]
    %v69 = vlaneseq
    %v70 = vshrl.u32 %v69, 7
    %v71 = vsub.s32 0, %v70
    %v72 = vrot.slane %v68, %v71
    %vm73 = vcmask 261120
    %v75 = vsel %vm73, %v56, 0
    %v78 = vsel %vm73, %v57, 0
    %80 = vmatprep.subr.mxu0 0.0
    %81 = vmatpush1.msra.mxu0 0.0
    %82 = vmatprep.subr.mxu0 0.0
    %83 = vmatpush1.msra.mxu0 0.0
    %84 = vmatprep.subr.mxu0 0.0
    %85 = vmatpush1.msra.mxu0 0.0
    %86 = vmatprep.subr.mxu0 0.0
    %87 = vmatpush1.msra.mxu0 0.0
    %88 = vmatprep.subr.mxu0 0.0
    %89 = vmatpush1.msra.mxu0 0.0
    %90 = vmatprep.subr.mxu0 0.0
    %91 = vmatpush1.msra.mxu0 0.0
    %92 = vmatprep.subr.mxu0 0.0
    %93 = vmatpush1.msra.mxu0 0.0
    %94 = vmatprep.subr.mxu0 0.0
    %95 = vmatpush1.msra.mxu0 0.0
    %96 = vmatprep.subr.mxu0 0.0
    %97 = vmatpush1.msra.mxu0 0.0
    %98 = vmatprep.subr.mxu0 0.0
    %99 = vmatpush1.msra.mxu0 0.0
    %100 = vmatprep.subr.mxu0 0.0
    %101 = vmatpush1.msra.mxu0 0.0
    %102 = vmatprep.subr.mxu0 0.0
    %103 = vmatpush1.msra.mxu0 0.0
    %104 = vmatprep.subr.mxu0 0.0
    %105 = vmatpush1.msra.mxu0 %v67
    %106 = vmatprep.subr.mxu0 0.0
    %107 = vmatpush1.msra.mxu0 %v66
    %108 = vmatprep.subr.mxu0 0.0
    %109 = vmatpush1.msra.mxu0 %v65
    %110 = vmatprep.subr.mxu0 0.0
    %111 = vmatpush1.msra.mxu0 %v64
    %112 = vmatprep.subr.mxu0 0.0
    %113 = vmatpush2.msra.mxu0 0.0
    %114 = vmatprep.subr.mxu0 0.0
    %115 = vmatpush2.msra.mxu0 0.0
    %116 = vmatprep.subr.mxu0 0.0
    %117 = vmatpush2.msra.mxu0 0.0
    %118 = vmatprep.subr.mxu0 0.0
    %119 = vmatpush2.msra.mxu0 0.0
    %120 = vmatprep.subr.mxu0 0.0
    %121 = vmatpush2.msra.mxu0 0.0
    %122 = vmatprep.subr.mxu0 0.0
    %123 = vmatpush2.msra.mxu0 0.0
    %124 = vmatprep.subr.mxu0 0.0
    %125 = vmatpush2.msra.mxu0 0.0
    %126 = vmatprep.subr.mxu0 0.0
    %127 = vmatpush2.msra.mxu0 0.0
    %128 = vmatprep.subr.mxu0 0.0
    %129 = vmatpush2.msra.mxu0 0.0
    %130 = vmatprep.subr.mxu0 0.0
    %131 = vmatpush2.msra.mxu0 0.0
    %132 = vmatprep.subr.mxu0 0.0
    %133 = vmatpush2.msra.mxu0 0.0
    %134 = vmatprep.subr.mxu0 0.0
    %135 = vmatpush2.msra.mxu0 0.0
    %136 = vmatprep.subr.mxu0 0.0
    %137 = vmatpush2.msra.mxu0 0.0
    %138 = vmatprep.subr.mxu0 0.0
    %139 = vmatpush2.msra.mxu0 0.0
    %140 = vmatprep.subr.mxu0 0.0
    %141 = vmatpush2.msra.mxu0 0.0
    %142 = vmatprep.subr.mxu0 0.0
    %143 = vmatpush2.msra.mxu0 0.0
    %144 = vmatprep.mubr.f32.mxu0 0.0
    %145 = vmatmul.mubr.f32.gmra.mxu0 %v75
    %v146 = vpop.f32.mrf.mxu0
    %v147 = vadd.f32 %v72, %v146
    %v148 = vpop.f32.mrf.mxu0
    %149 = vmatprep.mubr.f32.mxu0 0.0
    %150 = vmatmul.mubr.f32.gmra.mxu0 %v78
    %v151 = vpop.f32.mrf.mxu0
    %v152 = vadd.f32 %v72, %v151
    %v153 = vpop.f32.mrf.mxu0
    %154 = vdwg.mxu0
    %157 = vrot.lane.b32.xlu0 %v147, 120
    %v158 = vpop.permute.xlu0 %157
    %159 = vrot.lane.b32.xlu0 %v152, 120
    %v160 = vpop.permute.xlu0 %159
    %161 = vrot.lane.b32.xlu0 %v147, 112
    %v162 = vpop.permute.xlu0 %161
    %163 = vrot.lane.b32.xlu0 %v152, 112
    %v164 = vpop.permute.xlu0 %163
    %165 = vrot.lane.b32.xlu0 %v147, 104
    %v166 = vpop.permute.xlu0 %165
    %167 = vrot.lane.b32.xlu0 %v152, 104
    %v168 = vpop.permute.xlu0 %167
    %v169 = vld [vmem:[#allocation7 + $0x20] sm:$0xff]
    %v170 = vld [vmem:[#allocation7 + $0x28] sm:$0xff]
    %v171 = vld [vmem:[#allocation7 + $0x30] sm:$0xff]
    %v172 = vld [vmem:[#allocation7 + $0x38] sm:$0xff]
    %v173 = vld [vmem:[#allocation7 + $0x101] sm:$0x1]
    %174 = vrot.lane.b32.xlu0 %v147, 96
    %v175 = vpop.permute.xlu0 %174
    %vm176 = vcmask 64512
    %v177 = vsel %vm176, %v147, 0
    %v179 = vsel %vm176, %v175, 0
    %181 = vmatprep.subr.mxu0 0.0
    %182 = vmatpush1.xpose.msra.mxu0 0.0
    %183 = vmatprep.subr.mxu0 0.0
    %184 = vmatpush1.xpose.msra.mxu0 0.0
    %185 = vmatprep.subr.mxu0 0.0
    %186 = vmatpush1.xpose.msra.mxu0 0.0
    %187 = vmatprep.subr.mxu0 0.0
    %188 = vmatpush1.xpose.msra.mxu0 0.0
    %189 = vmatprep.subr.mxu0 0.0
    %190 = vmatpush1.xpose.msra.mxu0 0.0
    %191 = vmatprep.subr.mxu0 0.0
    %192 = vmatpush1.xpose.msra.mxu0 0.0
    %193 = vmatprep.subr.mxu0 0.0
    %194 = vmatpush1.xpose.msra.mxu0 0.0
    %195 = vmatprep.subr.mxu0 0.0
    %196 = vmatpush1.xpose.msra.mxu0 0.0
    %197 = vmatprep.subr.mxu0 0.0
    %198 = vmatpush1.xpose.msra.mxu0 0.0
    %199 = vmatprep.subr.mxu0 0.0
    %200 = vmatpush1.xpose.msra.mxu0 0.0
    %201 = vmatprep.subr.mxu0 0.0
    %202 = vmatpush1.xpose.msra.mxu0 0.0
    %203 = vmatprep.subr.mxu0 0.0
    %204 = vmatpush1.xpose.msra.mxu0 0.0
    %205 = vmatprep.subr.mxu0 0.0
    %206 = vmatpush1.xpose.msra.mxu0 0.0
    %207 = vmatprep.subr.mxu0 0.0
    %208 = vmatpush1.xpose.msra.mxu0 0.0
    %209 = vmatprep.subr.mxu0 0.0
    %210 = vmatpush1.xpose.msra.mxu0 0.0
    %211 = vmatprep.subr.mxu0 0.0
    %212 = vmatpush1.xpose.msra.mxu0 %v179
    %213 = vmatprep.subr.mxu0 0.0
    %214 = vmatpush2.xpose.msra.mxu0 0.0
    %215 = vmatprep.subr.mxu0 0.0
    %216 = vmatpush2.xpose.msra.mxu0 0.0
    %217 = vmatprep.subr.mxu0 0.0
    %218 = vmatpush2.xpose.msra.mxu0 0.0
    %219 = vmatprep.subr.mxu0 0.0
    %220 = vmatpush2.xpose.msra.mxu0 0.0
    %221 = vmatprep.subr.mxu0 0.0
    %222 = vmatpush2.xpose.msra.mxu0 0.0
    %223 = vmatprep.subr.mxu0 0.0
    %224 = vmatpush2.xpose.msra.mxu0 0.0
    %225 = vmatprep.subr.mxu0 0.0
    %226 = vmatpush2.xpose.msra.mxu0 0.0
    %227 = vmatprep.subr.mxu0 0.0
    %228 = vmatpush2.xpose.msra.mxu0 0.0
    %229 = vmatprep.subr.mxu0 0.0
    %230 = vmatpush2.xpose.msra.mxu0 0.0
    %231 = vmatprep.subr.mxu0 0.0
    %232 = vmatpush2.xpose.msra.mxu0 0.0
    %233 = vmatprep.subr.mxu0 0.0
    %234 = vmatpush2.xpose.msra.mxu0 0.0
    %235 = vmatprep.subr.mxu0 0.0
    %236 = vmatpush2.xpose.msra.mxu0 0.0
    %237 = vmatprep.subr.mxu0 0.0
    %238 = vmatpush2.xpose.msra.mxu0 0.0
    %239 = vmatprep.subr.mxu0 0.0
    %240 = vmatpush2.xpose.msra.mxu0 0.0
    %241 = vmatprep.subr.mxu0 0.0
    %242 = vmatpush2.xpose.msra.mxu0 0.0
    %243 = vmatprep.subr.mxu0 0.0
    %244 = vmatpush2.xpose.msra.mxu0 0.0
    %245 = vmatprep.mubr.f32.mxu0 0.0
    %246 = vmatmul.mubr.f32.gmra.mxu0 %v177
    %v247 = vpop.f32.mrf.mxu0
    %v248 = vadd.f32 0.0, %v247
    %v249 = vpop.f32.mrf.mxu0
    %250 = vdwg.mxu0
    %251 = vrot.lane.b32.xlu0 %v152, 96
    %v252 = vpop.permute.xlu0 %251
    %v253 = vsel %vm176, %v152, 0
    %v255 = vsel %vm176, %v252, 0
    %257 = vmatprep.subr.mxu0 0.0
    %258 = vmatpush1.xpose.msra.mxu0 0.0
    %259 = vmatprep.subr.mxu0 0.0
    %260 = vmatpush1.xpose.msra.mxu0 0.0
    %261 = vmatprep.subr.mxu0 0.0
    %262 = vmatpush1.xpose.msra.mxu0 0.0
    %263 = vmatprep.subr.mxu0 0.0
    %264 = vmatpush1.xpose.msra.mxu0 0.0
    %265 = vmatprep.subr.mxu0 0.0
    %266 = vmatpush1.xpose.msra.mxu0 0.0
    %267 = vmatprep.subr.mxu0 0.0
    %268 = vmatpush1.xpose.msra.mxu0 0.0
    %269 = vmatprep.subr.mxu0 0.0
    %270 = vmatpush1.xpose.msra.mxu0 0.0
    %271 = vmatprep.subr.mxu0 0.0
    %272 = vmatpush1.xpose.msra.mxu0 0.0
    %273 = vmatprep.subr.mxu0 0.0
    %274 = vmatpush1.xpose.msra.mxu0 0.0
    %275 = vmatprep.subr.mxu0 0.0
    %276 = vmatpush1.xpose.msra.mxu0 0.0
    %277 = vmatprep.subr.mxu0 0.0
    %278 = vmatpush1.xpose.msra.mxu0 0.0
    %279 = vmatprep.subr.mxu0 0.0
    %280 = vmatpush1.xpose.msra.mxu0 0.0
    %281 = vmatprep.subr.mxu0 0.0
    %282 = vmatpush1.xpose.msra.mxu0 0.0
    %283 = vmatprep.subr.mxu0 0.0
    %284 = vmatpush1.xpose.msra.mxu0 0.0
    %285 = vmatprep.subr.mxu0 0.0
    %286 = vmatpush1.xpose.msra.mxu0 0.0
    %287 = vmatprep.subr.mxu0 0.0
    %288 = vmatpush1.xpose.msra.mxu0 %v255
    %289 = vmatprep.subr.mxu0 0.0
    %290 = vmatpush2.xpose.msra.mxu0 0.0
    %291 = vmatprep.subr.mxu0 0.0
    %292 = vmatpush2.xpose.msra.mxu0 0.0
    %293 = vmatprep.subr.mxu0 0.0
    %294 = vmatpush2.xpose.msra.mxu0 0.0
    %295 = vmatprep.subr.mxu0 0.0
    %296 = vmatpush2.xpose.msra.mxu0 0.0
    %297 = vmatprep.subr.mxu0 0.0
    %298 = vmatpush2.xpose.msra.mxu0 0.0
    %299 = vmatprep.subr.mxu0 0.0
    %300 = vmatpush2.xpose.msra.mxu0 0.0
    %301 = vmatprep.subr.mxu0 0.0
    %302 = vmatpush2.xpose.msra.mxu0 0.0
    %303 = vmatprep.subr.mxu0 0.0
    %304 = vmatpush2.xpose.msra.mxu0 0.0
    %305 = vmatprep.subr.mxu0 0.0
    %306 = vmatpush2.xpose.msra.mxu0 0.0
    %307 = vmatprep.subr.mxu0 0.0
    %308 = vmatpush2.xpose.msra.mxu0 0.0
    %309 = vmatprep.subr.mxu0 0.0
    %310 = vmatpush2.xpose.msra.mxu0 0.0
    %311 = vmatprep.subr.mxu0 0.0
    %312 = vmatpush2.xpose.msra.mxu0 0.0
    %313 = vmatprep.subr.mxu0 0.0
    %314 = vmatpush2.xpose.msra.mxu0 0.0
    %315 = vmatprep.subr.mxu0 0.0
    %316 = vmatpush2.xpose.msra.mxu0 0.0
    %317 = vmatprep.subr.mxu0 0.0
    %318 = vmatpush2.xpose.msra.mxu0 0.0
    %319 = vmatprep.subr.mxu0 0.0
    %320 = vmatpush2.xpose.msra.mxu0 0.0
    %321 = vmatprep.mubr.f32.mxu0 0.0
    %322 = vmatmul.mubr.f32.gmra.mxu0 %v253
    %v323 = vpop.f32.mrf.mxu0
    %v324 = vadd.f32 0.0, %v323
    %v325 = vpop.f32.mrf.mxu0
    %326 = vdwg.mxu0
    %327 = vrot.lane.b32.xlu0 %v158, 96
    %v328 = vpop.permute.xlu0 %327
    %v329 = vsel %vm176, %v158, 0
    %v331 = vsel %vm176, %v328, 0
    %333 = vmatprep.subr.mxu0 0.0
    %334 = vmatpush1.xpose.msra.mxu0 0.0
    %335 = vmatprep.subr.mxu0 0.0
    %336 = vmatpush1.xpose.msra.mxu0 0.0
    %337 = vmatprep.subr.mxu0 0.0
    %338 = vmatpush1.xpose.msra.mxu0 0.0
    %339 = vmatprep.subr.mxu0 0.0
    %340 = vmatpush1.xpose.msra.mxu0 0.0
    %341 = vmatprep.subr.mxu0 0.0
    %342 = vmatpush1.xpose.msra.mxu0 0.0
    %343 = vmatprep.subr.mxu0 0.0
    %344 = vmatpush1.xpose.msra.mxu0 0.0
    %345 = vmatprep.subr.mxu0 0.0
    %346 = vmatpush1.xpose.msra.mxu0 0.0
    %347 = vmatprep.subr.mxu0 0.0
    %348 = vmatpush1.xpose.msra.mxu0 0.0
    %349 = vmatprep.subr.mxu0 0.0
    %350 = vmatpush1.xpose.msra.mxu0 0.0
    %351 = vmatprep.subr.mxu0 0.0
    %352 = vmatpush1.xpose.msra.mxu0 0.0
    %353 = vmatprep.subr.mxu0 0.0
    %354 = vmatpush1.xpose.msra.mxu0 0.0
    %355 = vmatprep.subr.mxu0 0.0
    %356 = vmatpush1.xpose.msra.mxu0 0.0
    %357 = vmatprep.subr.mxu0 0.0
    %358 = vmatpush1.xpose.msra.mxu0 0.0
    %359 = vmatprep.subr.mxu0 0.0
    %360 = vmatpush1.xpose.msra.mxu0 0.0
    %361 = vmatprep.subr.mxu0 0.0
    %362 = vmatpush1.xpose.msra.mxu0 0.0
    %363 = vmatprep.subr.mxu0 0.0
    %364 = vmatpush1.xpose.msra.mxu0 %v331
    %365 = vmatprep.subr.mxu0 0.0
    %366 = vmatpush2.xpose.msra.mxu0 0.0
    %367 = vmatprep.subr.mxu0 0.0
    %368 = vmatpush2.xpose.msra.mxu0 0.0
    %369 = vmatprep.subr.mxu0 0.0
    %370 = vmatpush2.xpose.msra.mxu0 0.0
    %371 = vmatprep.subr.mxu0 0.0
    %372 = vmatpush2.xpose.msra.mxu0 0.0
    %373 = vmatprep.subr.mxu0 0.0
    %374 = vmatpush2.xpose.msra.mxu0 0.0
    %375 = vmatprep.subr.mxu0 0.0
    %376 = vmatpush2.xpose.msra.mxu0 0.0
    %377 = vmatprep.subr.mxu0 0.0
    %378 = vmatpush2.xpose.msra.mxu0 0.0
    %379 = vmatprep.subr.mxu0 0.0
    %380 = vmatpush2.xpose.msra.mxu0 0.0
    %381 = vmatprep.subr.mxu0 0.0
    %382 = vmatpush2.xpose.msra.mxu0 0.0
    %383 = vmatprep.subr.mxu0 0.0
    %384 = vmatpush2.xpose.msra.mxu0 0.0
    %385 = vmatprep.subr.mxu0 0.0
    %386 = vmatpush2.xpose.msra.mxu0 0.0
    %387 = vmatprep.subr.mxu0 0.0
    %388 = vmatpush2.xpose.msra.mxu0 0.0
    %389 = vmatprep.subr.mxu0 0.0
    %390 = vmatpush2.xpose.msra.mxu0 0.0
    %391 = vmatprep.subr.mxu0 0.0
    %392 = vmatpush2.xpose.msra.mxu0 0.0
    %393 = vmatprep.subr.mxu0 0.0
    %394 = vmatpush2.xpose.msra.mxu0 0.0
    %395 = vmatprep.subr.mxu0 0.0
    %396 = vmatpush2.xpose.msra.mxu0 0.0
    %397 = vmatprep.mubr.f32.mxu0 0.0
    %398 = vmatmul.mubr.f32.gmra.mxu0 %v329
    %v399 = vpop.f32.mrf.mxu0
    %v400 = vadd.f32 0.0, %v399
    %v401 = vpop.f32.mrf.mxu0
    %402 = vdwg.mxu0
    %403 = vrot.lane.b32.xlu0 %v160, 96
    %v404 = vpop.permute.xlu0 %403
    %v405 = vsel %vm176, %v160, 0
    %v407 = vsel %vm176, %v404, 0
    %409 = vmatprep.subr.mxu0 0.0
    %410 = vmatpush1.xpose.msra.mxu0 0.0
    %411 = vmatprep.subr.mxu0 0.0
    %412 = vmatpush1.xpose.msra.mxu0 0.0
    %413 = vmatprep.subr.mxu0 0.0
    %414 = vmatpush1.xpose.msra.mxu0 0.0
    %415 = vmatprep.subr.mxu0 0.0
    %416 = vmatpush1.xpose.msra.mxu0 0.0
    %417 = vmatprep.subr.mxu0 0.0
    %418 = vmatpush1.xpose.msra.mxu0 0.0
    %419 = vmatprep.subr.mxu0 0.0
    %420 = vmatpush1.xpose.msra.mxu0 0.0
    %421 = vmatprep.subr.mxu0 0.0
    %422 = vmatpush1.xpose.msra.mxu0 0.0
    %423 = vmatprep.subr.mxu0 0.0
    %424 = vmatpush1.xpose.msra.mxu0 0.0
    %425 = vmatprep.subr.mxu0 0.0
    %426 = vmatpush1.xpose.msra.mxu0 0.0
    %427 = vmatprep.subr.mxu0 0.0
    %428 = vmatpush1.xpose.msra.mxu0 0.0
    %429 = vmatprep.subr.mxu0 0.0
    %430 = vmatpush1.xpose.msra.mxu0 0.0
    %431 = vmatprep.subr.mxu0 0.0
    %432 = vmatpush1.xpose.msra.mxu0 0.0
    %433 = vmatprep.subr.mxu0 0.0
    %434 = vmatpush1.xpose.msra.mxu0 0.0
    %435 = vmatprep.subr.mxu0 0.0
    %436 = vmatpush1.xpose.msra.mxu0 0.0
    %437 = vmatprep.subr.mxu0 0.0
    %438 = vmatpush1.xpose.msra.mxu0 0.0
    %439 = vmatprep.subr.mxu0 0.0
    %440 = vmatpush1.xpose.msra.mxu0 %v407
    %441 = vmatprep.subr.mxu0 0.0
    %442 = vmatpush2.xpose.msra.mxu0 0.0
    %443 = vmatprep.subr.mxu0 0.0
    %444 = vmatpush2.xpose.msra.mxu0 0.0
    %445 = vmatprep.subr.mxu0 0.0
    %446 = vmatpush2.xpose.msra.mxu0 0.0
    %447 = vmatprep.subr.mxu0 0.0
    %448 = vmatpush2.xpose.msra.mxu0 0.0
    %449 = vmatprep.subr.mxu0 0.0
    %450 = vmatpush2.xpose.msra.mxu0 0.0
    %451 = vmatprep.subr.mxu0 0.0
    %452 = vmatpush2.xpose.msra.mxu0 0.0
    %453 = vmatprep.subr.mxu0 0.0
    %454 = vmatpush2.xpose.msra.mxu0 0.0
    %455 = vmatprep.subr.mxu0 0.0
    %456 = vmatpush2.xpose.msra.mxu0 0.0
    %457 = vmatprep.subr.mxu0 0.0
    %458 = vmatpush2.xpose.msra.mxu0 0.0
    %459 = vmatprep.subr.mxu0 0.0
    %460 = vmatpush2.xpose.msra.mxu0 0.0
    %461 = vmatprep.subr.mxu0 0.0
    %462 = vmatpush2.xpose.msra.mxu0 0.0
    %463 = vmatprep.subr.mxu0 0.0
    %464 = vmatpush2.xpose.msra.mxu0 0.0
    %465 = vmatprep.subr.mxu0 0.0
    %466 = vmatpush2.xpose.msra.mxu0 0.0
    %467 = vmatprep.subr.mxu0 0.0
    %468 = vmatpush2.xpose.msra.mxu0 0.0
    %469 = vmatprep.subr.mxu0 0.0
    %470 = vmatpush2.xpose.msra.mxu0 0.0
    %471 = vmatprep.subr.mxu0 0.0
    %472 = vmatpush2.xpose.msra.mxu0 0.0
    %473 = vmatprep.mubr.f32.mxu0 0.0
    %474 = vmatmul.mubr.f32.gmra.mxu0 %v405
    %v475 = vpop.f32.mrf.mxu0
    %v476 = vadd.f32 0.0, %v475
    %v477 = vpop.f32.mrf.mxu0
    %478 = vdwg.mxu0
    %479 = vrot.lane.b32.xlu0 %v162, 96
    %v480 = vpop.permute.xlu0 %479
    %v481 = vsel %vm176, %v162, 0
    %v483 = vsel %vm176, %v480, 0
    %485 = vmatprep.subr.mxu0 0.0
    %486 = vmatpush1.xpose.msra.mxu0 0.0
    %487 = vmatprep.subr.mxu0 0.0
    %488 = vmatpush1.xpose.msra.mxu0 0.0
    %489 = vmatprep.subr.mxu0 0.0
    %490 = vmatpush1.xpose.msra.mxu0 0.0
    %491 = vmatprep.subr.mxu0 0.0
    %492 = vmatpush1.xpose.msra.mxu0 0.0
    %493 = vmatprep.subr.mxu0 0.0
    %494 = vmatpush1.xpose.msra.mxu0 0.0
    %495 = vmatprep.subr.mxu0 0.0
    %496 = vmatpush1.xpose.msra.mxu0 0.0
    %497 = vmatprep.subr.mxu0 0.0
    %498 = vmatpush1.xpose.msra.mxu0 0.0
    %499 = vmatprep.subr.mxu0 0.0
    %500 = vmatpush1.xpose.msra.mxu0 0.0
    %501 = vmatprep.subr.mxu0 0.0
    %502 = vmatpush1.xpose.msra.mxu0 0.0
    %503 = vmatprep.subr.mxu0 0.0
    %504 = vmatpush1.xpose.msra.mxu0 0.0
    %505 = vmatprep.subr.mxu0 0.0
    %506 = vmatpush1.xpose.msra.mxu0 0.0
    %507 = vmatprep.subr.mxu0 0.0
    %508 = vmatpush1.xpose.msra.mxu0 0.0
    %509 = vmatprep.subr.mxu0 0.0
    %510 = vmatpush1.xpose.msra.mxu0 0.0
    %511 = vmatprep.subr.mxu0 0.0
    %512 = vmatpush1.xpose.msra.mxu0 0.0
    %513 = vmatprep.subr.mxu0 0.0
    %514 = vmatpush1.xpose.msra.mxu0 0.0
    %515 = vmatprep.subr.mxu0 0.0
    %516 = vmatpush1.xpose.msra.mxu0 %v483
    %517 = vmatprep.subr.mxu0 0.0
    %518 = vmatpush2.xpose.msra.mxu0 0.0
    %519 = vmatprep.subr.mxu0 0.0
    %520 = vmatpush2.xpose.msra.mxu0 0.0
    %521 = vmatprep.subr.mxu0 0.0
    %522 = vmatpush2.xpose.msra.mxu0 0.0
    %523 = vmatprep.subr.mxu0 0.0
    %524 = vmatpush2.xpose.msra.mxu0 0.0
    %525 = vmatprep.subr.mxu0 0.0
    %526 = vmatpush2.xpose.msra.mxu0 0.0
    %527 = vmatprep.subr.mxu0 0.0
    %528 = vmatpush2.xpose.msra.mxu0 0.0
    %529 = vmatprep.subr.mxu0 0.0
    %530 = vmatpush2.xpose.msra.mxu0 0.0
    %531 = vmatprep.subr.mxu0 0.0
    %532 = vmatpush2.xpose.msra.mxu0 0.0
    %533 = vmatprep.subr.mxu0 0.0
    %534 = vmatpush2.xpose.msra.mxu0 0.0
    %535 = vmatprep.subr.mxu0 0.0
    %536 = vmatpush2.xpose.msra.mxu0 0.0
    %537 = vmatprep.subr.mxu0 0.0
    %538 = vmatpush2.xpose.msra.mxu0 0.0
    %539 = vmatprep.subr.mxu0 0.0
    %540 = vmatpush2.xpose.msra.mxu0 0.0
    %541 = vmatprep.subr.mxu0 0.0
    %542 = vmatpush2.xpose.msra.mxu0 0.0
    %543 = vmatprep.subr.mxu0 0.0
    %544 = vmatpush2.xpose.msra.mxu0 0.0
    %545 = vmatprep.subr.mxu0 0.0
    %546 = vmatpush2.xpose.msra.mxu0 0.0
    %547 = vmatprep.subr.mxu0 0.0
    %548 = vmatpush2.xpose.msra.mxu0 0.0
    %549 = vmatprep.mubr.f32.mxu0 0.0
    %550 = vmatmul.mubr.f32.gmra.mxu0 %v481
    %v551 = vpop.f32.mrf.mxu0
    %v552 = vadd.f32 0.0, %v551
    %v553 = vpop.f32.mrf.mxu0
    %554 = vdwg.mxu0
    %555 = vrot.lane.b32.xlu0 %v164, 96
    %v556 = vpop.permute.xlu0 %555
    %v557 = vsel %vm176, %v164, 0
    %v559 = vsel %vm176, %v556, 0
    %561 = vmatprep.subr.mxu0 0.0
    %562 = vmatpush1.xpose.msra.mxu0 0.0
    %563 = vmatprep.subr.mxu0 0.0
    %564 = vmatpush1.xpose.msra.mxu0 0.0
    %565 = vmatprep.subr.mxu0 0.0
    %566 = vmatpush1.xpose.msra.mxu0 0.0
    %567 = vmatprep.subr.mxu0 0.0
    %568 = vmatpush1.xpose.msra.mxu0 0.0
    %569 = vmatprep.subr.mxu0 0.0
    %570 = vmatpush1.xpose.msra.mxu0 0.0
    %571 = vmatprep.subr.mxu0 0.0
    %572 = vmatpush1.xpose.msra.mxu0 0.0
    %573 = vmatprep.subr.mxu0 0.0
    %574 = vmatpush1.xpose.msra.mxu0 0.0
    %575 = vmatprep.subr.mxu0 0.0
    %576 = vmatpush1.xpose.msra.mxu0 0.0
    %577 = vmatprep.subr.mxu0 0.0
    %578 = vmatpush1.xpose.msra.mxu0 0.0
    %579 = vmatprep.subr.mxu0 0.0
    %580 = vmatpush1.xpose.msra.mxu0 0.0
    %581 = vmatprep.subr.mxu0 0.0
    %582 = vmatpush1.xpose.msra.mxu0 0.0
    %583 = vmatprep.subr.mxu0 0.0
    %584 = vmatpush1.xpose.msra.mxu0 0.0
    %585 = vmatprep.subr.mxu0 0.0
    %586 = vmatpush1.xpose.msra.mxu0 0.0
    %587 = vmatprep.subr.mxu0 0.0
    %588 = vmatpush1.xpose.msra.mxu0 0.0
    %589 = vmatprep.subr.mxu0 0.0
    %590 = vmatpush1.xpose.msra.mxu0 0.0
    %591 = vmatprep.subr.mxu0 0.0
    %592 = vmatpush1.xpose.msra.mxu0 %v559
    %593 = vmatprep.subr.mxu0 0.0
    %594 = vmatpush2.xpose.msra.mxu0 0.0
    %595 = vmatprep.subr.mxu0 0.0
    %596 = vmatpush2.xpose.msra.mxu0 0.0
    %597 = vmatprep.subr.mxu0 0.0
    %598 = vmatpush2.xpose.msra.mxu0 0.0
    %599 = vmatprep.subr.mxu0 0.0
    %600 = vmatpush2.xpose.msra.mxu0 0.0
    %601 = vmatprep.subr.mxu0 0.0
    %602 = vmatpush2.xpose.msra.mxu0 0.0
    %603 = vmatprep.subr.mxu0 0.0
    %604 = vmatpush2.xpose.msra.mxu0 0.0
    %605 = vmatprep.subr.mxu0 0.0
    %606 = vmatpush2.xpose.msra.mxu0 0.0
    %607 = vmatprep.subr.mxu0 0.0
    %608 = vmatpush2.xpose.msra.mxu0 0.0
    %609 = vmatprep.subr.mxu0 0.0
    %610 = vmatpush2.xpose.msra.mxu0 0.0
    %611 = vmatprep.subr.mxu0 0.0
    %612 = vmatpush2.xpose.msra.mxu0 0.0
    %613 = vmatprep.subr.mxu0 0.0
    %614 = vmatpush2.xpose.msra.mxu0 0.0
    %615 = vmatprep.subr.mxu0 0.0
    %616 = vmatpush2.xpose.msra.mxu0 0.0
    %617 = vmatprep.subr.mxu0 0.0
    %618 = vmatpush2.xpose.msra.mxu0 0.0
    %619 = vmatprep.subr.mxu0 0.0
    %620 = vmatpush2.xpose.msra.mxu0 0.0
    %621 = vmatprep.subr.mxu0 0.0
    %622 = vmatpush2.xpose.msra.mxu0 0.0
    %623 = vmatprep.subr.mxu0 0.0
    %624 = vmatpush2.xpose.msra.mxu0 0.0
    %625 = vmatprep.mubr.f32.mxu0 0.0
    %626 = vmatmul.mubr.f32.gmra.mxu0 %v557
    %v627 = vpop.f32.mrf.mxu0
    %v628 = vadd.f32 0.0, %v627
    %v629 = vpop.f32.mrf.mxu0
    %630 = vdwg.mxu0
    %631 = vrot.lane.b32.xlu0 %v166, 96
    %v632 = vpop.permute.xlu0 %631
    %v633 = vsel %vm176, %v166, 0
    %v635 = vsel %vm176, %v632, 0
    %637 = vmatprep.subr.mxu0 0.0
    %638 = vmatpush1.xpose.msra.mxu0 0.0
    %639 = vmatprep.subr.mxu0 0.0
    %640 = vmatpush1.xpose.msra.mxu0 0.0
    %641 = vmatprep.subr.mxu0 0.0
    %642 = vmatpush1.xpose.msra.mxu0 0.0
    %643 = vmatprep.subr.mxu0 0.0
    %644 = vmatpush1.xpose.msra.mxu0 0.0
    %645 = vmatprep.subr.mxu0 0.0
    %646 = vmatpush1.xpose.msra.mxu0 0.0
    %647 = vmatprep.subr.mxu0 0.0
    %648 = vmatpush1.xpose.msra.mxu0 0.0
    %649 = vmatprep.subr.mxu0 0.0
    %650 = vmatpush1.xpose.msra.mxu0 0.0
    %651 = vmatprep.subr.mxu0 0.0
    %652 = vmatpush1.xpose.msra.mxu0 0.0
    %653 = vmatprep.subr.mxu0 0.0
    %654 = vmatpush1.xpose.msra.mxu0 0.0
    %655 = vmatprep.subr.mxu0 0.0
    %656 = vmatpush1.xpose.msra.mxu0 0.0
    %657 = vmatprep.subr.mxu0 0.0
    %658 = vmatpush1.xpose.msra.mxu0 0.0
    %659 = vmatprep.subr.mxu0 0.0
    %660 = vmatpush1.xpose.msra.mxu0 0.0
    %661 = vmatprep.subr.mxu0 0.0
    %662 = vmatpush1.xpose.msra.mxu0 0.0
    %663 = vmatprep.subr.mxu0 0.0
    %664 = vmatpush1.xpose.msra.mxu0 0.0
    %665 = vmatprep.subr.mxu0 0.0
    %666 = vmatpush1.xpose.msra.mxu0 0.0
    %667 = vmatprep.subr.mxu0 0.0
    %668 = vmatpush1.xpose.msra.mxu0 %v635
    %669 = vmatprep.subr.mxu0 0.0
    %670 = vmatpush2.xpose.msra.mxu0 0.0
    %671 = vmatprep.subr.mxu0 0.0
    %672 = vmatpush2.xpose.msra.mxu0 0.0
    %673 = vmatprep.subr.mxu0 0.0
    %674 = vmatpush2.xpose.msra.mxu0 0.0
    %675 = vmatprep.subr.mxu0 0.0
    %676 = vmatpush2.xpose.msra.mxu0 0.0
    %677 = vmatprep.subr.mxu0 0.0
    %678 = vmatpush2.xpose.msra.mxu0 0.0
    %679 = vmatprep.subr.mxu0 0.0
    %680 = vmatpush2.xpose.msra.mxu0 0.0
    %681 = vmatprep.subr.mxu0 0.0
    %682 = vmatpush2.xpose.msra.mxu0 0.0
    %683 = vmatprep.subr.mxu0 0.0
    %684 = vmatpush2.xpose.msra.mxu0 0.0
    %685 = vmatprep.subr.mxu0 0.0
    %686 = vmatpush2.xpose.msra.mxu0 0.0
    %687 = vmatprep.subr.mxu0 0.0
    %688 = vmatpush2.xpose.msra.mxu0 0.0
    %689 = vmatprep.subr.mxu0 0.0
    %690 = vmatpush2.xpose.msra.mxu0 0.0
    %691 = vmatprep.subr.mxu0 0.0
    %692 = vmatpush2.xpose.msra.mxu0 0.0
    %693 = vmatprep.subr.mxu0 0.0
    %694 = vmatpush2.xpose.msra.mxu0 0.0
    %695 = vmatprep.subr.mxu0 0.0
    %696 = vmatpush2.xpose.msra.mxu0 0.0
    %697 = vmatprep.subr.mxu0 0.0
    %698 = vmatpush2.xpose.msra.mxu0 0.0
    %699 = vmatprep.subr.mxu0 0.0
    %700 = vmatpush2.xpose.msra.mxu0 0.0
    %701 = vmatprep.mubr.f32.mxu0 0.0
    %702 = vmatmul.mubr.f32.gmra.mxu0 %v633
    %v703 = vpop.f32.mrf.mxu0
    %v704 = vadd.f32 0.0, %v703
    %v705 = vpop.f32.mrf.mxu0
    %706 = vdwg.mxu0
    %707 = vrot.lane.b32.xlu0 %v168, 96
    %v708 = vpop.permute.xlu0 %707
    %v709 = vsel %vm176, %v168, 0
    %v711 = vsel %vm176, %v708, 0
    %713 = vmatprep.subr.mxu0 0.0
    %714 = vmatpush1.xpose.msra.mxu0 0.0
    %715 = vmatprep.subr.mxu0 0.0
    %716 = vmatpush1.xpose.msra.mxu0 0.0
    %717 = vmatprep.subr.mxu0 0.0
    %718 = vmatpush1.xpose.msra.mxu0 0.0
    %719 = vmatprep.subr.mxu0 0.0
    %720 = vmatpush1.xpose.msra.mxu0 0.0
    %721 = vmatprep.subr.mxu0 0.0
    %722 = vmatpush1.xpose.msra.mxu0 0.0
    %723 = vmatprep.subr.mxu0 0.0
    %724 = vmatpush1.xpose.msra.mxu0 0.0
    %725 = vmatprep.subr.mxu0 0.0
    %726 = vmatpush1.xpose.msra.mxu0 0.0
    %727 = vmatprep.subr.mxu0 0.0
    %728 = vmatpush1.xpose.msra.mxu0 0.0
    %729 = vmatprep.subr.mxu0 0.0
    %730 = vmatpush1.xpose.msra.mxu0 0.0
    %731 = vmatprep.subr.mxu0 0.0
    %732 = vmatpush1.xpose.msra.mxu0 0.0
    %733 = vmatprep.subr.mxu0 0.0
    %734 = vmatpush1.xpose.msra.mxu0 0.0
    %735 = vmatprep.subr.mxu0 0.0
    %736 = vmatpush1.xpose.msra.mxu0 0.0
    %737 = vmatprep.subr.mxu0 0.0
    %738 = vmatpush1.xpose.msra.mxu0 0.0
    %739 = vmatprep.subr.mxu0 0.0
    %740 = vmatpush1.xpose.msra.mxu0 0.0
    %741 = vmatprep.subr.mxu0 0.0
    %742 = vmatpush1.xpose.msra.mxu0 0.0
    %743 = vmatprep.subr.mxu0 0.0
    %744 = vmatpush1.xpose.msra.mxu0 %v711
    %745 = vmatprep.subr.mxu0 0.0
    %746 = vmatpush2.xpose.msra.mxu0 0.0
    %747 = vmatprep.subr.mxu0 0.0
    %748 = vmatpush2.xpose.msra.mxu0 0.0
    %749 = vmatprep.subr.mxu0 0.0
    %750 = vmatpush2.xpose.msra.mxu0 0.0
    %751 = vmatprep.subr.mxu0 0.0
    %752 = vmatpush2.xpose.msra.mxu0 0.0
    %753 = vmatprep.subr.mxu0 0.0
    %754 = vmatpush2.xpose.msra.mxu0 0.0
    %755 = vmatprep.subr.mxu0 0.0
    %756 = vmatpush2.xpose.msra.mxu0 0.0
    %757 = vmatprep.subr.mxu0 0.0
    %758 = vmatpush2.xpose.msra.mxu0 0.0
    %759 = vmatprep.subr.mxu0 0.0
    %760 = vmatpush2.xpose.msra.mxu0 0.0
    %761 = vmatprep.subr.mxu0 0.0
    %762 = vmatpush2.xpose.msra.mxu0 0.0
    %763 = vmatprep.subr.mxu0 0.0
    %764 = vmatpush2.xpose.msra.mxu0 0.0
    %765 = vmatprep.subr.mxu0 0.0
    %766 = vmatpush2.xpose.msra.mxu0 0.0
    %767 = vmatprep.subr.mxu0 0.0
    %768 = vmatpush2.xpose.msra.mxu0 0.0
    %769 = vmatprep.subr.mxu0 0.0
    %770 = vmatpush2.xpose.msra.mxu0 0.0
    %771 = vmatprep.subr.mxu0 0.0
    %772 = vmatpush2.xpose.msra.mxu0 0.0
    %773 = vmatprep.subr.mxu0 0.0
    %774 = vmatpush2.xpose.msra.mxu0 0.0
    %775 = vmatprep.subr.mxu0 0.0
    %776 = vmatpush2.xpose.msra.mxu0 0.0
    %777 = vmatprep.mubr.f32.mxu0 0.0
    %778 = vmatmul.mubr.f32.gmra.mxu0 %v709
    %v779 = vpop.f32.mrf.mxu0
    %v780 = vadd.f32 0.0, %v779
    %v781 = vpop.f32.mrf.mxu0
    %782 = vdwg.mxu0
    %v783 = vmul.f32 %v248, 1.442695
    %v784 = vpow.pop %v783
    %v785 = vmul.f32 %v324, 1.442695
    %v786 = vpow.pop %v785
    %v787 = vmul.f32 %v400, 1.442695
    %v788 = vpow.pop %v787
    %v789 = vmul.f32 %v476, 1.442695
    %v790 = vpow.pop %v789
    %v791 = vmul.f32 %v552, 1.442695
    %v792 = vpow.pop %v791
    %v793 = vmul.f32 %v628, 1.442695
    %v794 = vpow.pop %v793
    %v795 = vmul.f32 %v704, 1.442695
    %v796 = vpow.pop %v795
    %v797 = vmul.f32 %v780, 1.442695
    %v798 = vpow.pop %v797
    %v799 = vsel %vm176, %v784, 0.0
    %800 = vadd.xlane.f32.xlu0 %v799
    %v801 = vpop.xlane.xlu0 %800
    %v802 = vsel %vm176, %v786, 0.0
    %803 = vadd.xlane.f32.xlu0 %v802
    %v804 = vpop.xlane.xlu0 %803
    %v805 = vsel %vm176, %v788, 0.0
    %806 = vadd.xlane.f32.xlu0 %v805
    %v807 = vpop.xlane.xlu0 %806
    %v808 = vsel %vm176, %v790, 0.0
    %809 = vadd.xlane.f32.xlu0 %v808
    %v810 = vpop.xlane.xlu0 %809
    %v811 = vsel %vm176, %v792, 0.0
    %812 = vadd.xlane.f32.xlu0 %v811
    %v813 = vpop.xlane.xlu0 %812
    %v814 = vsel %vm176, %v794, 0.0
    %815 = vadd.xlane.f32.xlu0 %v814
    %v816 = vpop.xlane.xlu0 %815
    %v817 = vsel %vm176, %v796, 0.0
    %818 = vadd.xlane.f32.xlu0 %v817
    %v819 = vpop.xlane.xlu0 %818
    %v820 = vsel %vm176, %v798, 0.0
    %821 = vadd.xlane.f32.xlu0 %v820
    %v822 = vpop.xlane.xlu0 %821
    %v823 = vrcp.pop %v801
    %v824 = vmul.f32 %v784, %v823
    %v825 = vrcp.pop %v804
    %v826 = vmul.f32 %v786, %v825
    %v827 = vrcp.pop %v807
    %v828 = vmul.f32 %v788, %v827
    %v829 = vrcp.pop %v810
    %v830 = vmul.f32 %v790, %v829
    %v831 = vrcp.pop %v813
    %v832 = vmul.f32 %v792, %v831
    %v833 = vrcp.pop %v816
    %v834 = vmul.f32 %v794, %v833
    %v835 = vrcp.pop %v819
    %v836 = vmul.f32 %v796, %v835
    %v837 = vrcp.pop %v822
    %v838 = vmul.f32 %v798, %v837
    %839 = vrot.lane.b32.xlu0 %v147, 64
    %v840 = vpop.permute.xlu0 %839
    %v843 = vsel %vm176, %v824, 0
    %845 = vmatprep.subr.mxu0 0.0
    %846 = vmatpush1.msra.mxu0 0.0
    %847 = vmatprep.subr.mxu0 0.0
    %848 = vmatpush1.msra.mxu0 0.0
    %849 = vmatprep.subr.mxu0 0.0
    %850 = vmatpush1.msra.mxu0 0.0
    %851 = vmatprep.subr.mxu0 0.0
    %852 = vmatpush1.msra.mxu0 0.0
    %853 = vmatprep.subr.mxu0 0.0
    %854 = vmatpush1.msra.mxu0 0.0
    %855 = vmatprep.subr.mxu0 0.0
    %856 = vmatpush1.msra.mxu0 0.0
    %857 = vmatprep.subr.mxu0 0.0
    %858 = vmatpush1.msra.mxu0 0.0
    %859 = vmatprep.subr.mxu0 0.0
    %860 = vmatpush1.msra.mxu0 0.0
    %861 = vmatprep.subr.mxu0 0.0
    %862 = vmatpush1.msra.mxu0 0.0
    %863 = vmatprep.subr.mxu0 0.0
    %864 = vmatpush1.msra.mxu0 0.0
    %865 = vmatprep.subr.mxu0 0.0
    %866 = vmatpush1.msra.mxu0 0.0
    %867 = vmatprep.subr.mxu0 0.0
    %868 = vmatpush1.msra.mxu0 0.0
    %869 = vmatprep.subr.mxu0 0.0
    %870 = vmatpush1.msra.mxu0 0.0
    %871 = vmatprep.subr.mxu0 0.0
    %872 = vmatpush1.msra.mxu0 0.0
    %873 = vmatprep.subr.mxu0 0.0
    %874 = vmatpush1.msra.mxu0 0.0
    %875 = vmatprep.subr.mxu0 0.0
    %876 = vmatpush1.msra.mxu0 %v840
    %877 = vmatprep.subr.mxu0 0.0
    %878 = vmatpush2.msra.mxu0 0.0
    %879 = vmatprep.subr.mxu0 0.0
    %880 = vmatpush2.msra.mxu0 0.0
    %881 = vmatprep.subr.mxu0 0.0
    %882 = vmatpush2.msra.mxu0 0.0
    %883 = vmatprep.subr.mxu0 0.0
    %884 = vmatpush2.msra.mxu0 0.0
    %885 = vmatprep.subr.mxu0 0.0
    %886 = vmatpush2.msra.mxu0 0.0
    %887 = vmatprep.subr.mxu0 0.0
    %888 = vmatpush2.msra.mxu0 0.0
    %889 = vmatprep.subr.mxu0 0.0
    %890 = vmatpush2.msra.mxu0 0.0
    %891 = vmatprep.subr.mxu0 0.0
    %892 = vmatpush2.msra.mxu0 0.0
    %893 = vmatprep.subr.mxu0 0.0
    %894 = vmatpush2.msra.mxu0 0.0
    %895 = vmatprep.subr.mxu0 0.0
    %896 = vmatpush2.msra.mxu0 0.0
    %897 = vmatprep.subr.mxu0 0.0
    %898 = vmatpush2.msra.mxu0 0.0
    %899 = vmatprep.subr.mxu0 0.0
    %900 = vmatpush2.msra.mxu0 0.0
    %901 = vmatprep.subr.mxu0 0.0
    %902 = vmatpush2.msra.mxu0 0.0
    %903 = vmatprep.subr.mxu0 0.0
    %904 = vmatpush2.msra.mxu0 0.0
    %905 = vmatprep.subr.mxu0 0.0
    %906 = vmatpush2.msra.mxu0 0.0
    %907 = vmatprep.subr.mxu0 0.0
    %908 = vmatpush2.msra.mxu0 0.0
    %909 = vmatprep.mubr.f32.mxu0 0.0
    %910 = vmatmul.mubr.f32.gmra.mxu0 %v843
    %v911 = vpop.f32.mrf.mxu0
    %v912 = vadd.f32 0.0, %v911
    %v913 = vpop.f32.mrf.mxu0
    %914 = vdwg.mxu0
    %915 = vrot.lane.b32.xlu0 %v152, 64
    %v916 = vpop.permute.xlu0 %915
    %v919 = vsel %vm176, %v826, 0
    %921 = vmatprep.subr.mxu0 0.0
    %922 = vmatpush1.msra.mxu0 0.0
    %923 = vmatprep.subr.mxu0 0.0
    %924 = vmatpush1.msra.mxu0 0.0
    %925 = vmatprep.subr.mxu0 0.0
    %926 = vmatpush1.msra.mxu0 0.0
    %927 = vmatprep.subr.mxu0 0.0
    %928 = vmatpush1.msra.mxu0 0.0
    %929 = vmatprep.subr.mxu0 0.0
    %930 = vmatpush1.msra.mxu0 0.0
    %931 = vmatprep.subr.mxu0 0.0
    %932 = vmatpush1.msra.mxu0 0.0
    %933 = vmatprep.subr.mxu0 0.0
    %934 = vmatpush1.msra.mxu0 0.0
    %935 = vmatprep.subr.mxu0 0.0
    %936 = vmatpush1.msra.mxu0 0.0
    %937 = vmatprep.subr.mxu0 0.0
    %938 = vmatpush1.msra.mxu0 0.0
    %939 = vmatprep.subr.mxu0 0.0
    %940 = vmatpush1.msra.mxu0 0.0
    %941 = vmatprep.subr.mxu0 0.0
    %942 = vmatpush1.msra.mxu0 0.0
    %943 = vmatprep.subr.mxu0 0.0
    %944 = vmatpush1.msra.mxu0 0.0
    %945 = vmatprep.subr.mxu0 0.0
    %946 = vmatpush1.msra.mxu0 0.0
    %947 = vmatprep.subr.mxu0 0.0
    %948 = vmatpush1.msra.mxu0 0.0
    %949 = vmatprep.subr.mxu0 0.0
    %950 = vmatpush1.msra.mxu0 0.0
    %951 = vmatprep.subr.mxu0 0.0
    %952 = vmatpush1.msra.mxu0 %v916
    %953 = vmatprep.subr.mxu0 0.0
    %954 = vmatpush2.msra.mxu0 0.0
    %955 = vmatprep.subr.mxu0 0.0
    %956 = vmatpush2.msra.mxu0 0.0
    %957 = vmatprep.subr.mxu0 0.0
    %958 = vmatpush2.msra.mxu0 0.0
    %959 = vmatprep.subr.mxu0 0.0
    %960 = vmatpush2.msra.mxu0 0.0
    %961 = vmatprep.subr.mxu0 0.0
    %962 = vmatpush2.msra.mxu0 0.0
    %963 = vmatprep.subr.mxu0 0.0
    %964 = vmatpush2.msra.mxu0 0.0
    %965 = vmatprep.subr.mxu0 0.0
    %966 = vmatpush2.msra.mxu0 0.0
    %967 = vmatprep.subr.mxu0 0.0
    %968 = vmatpush2.msra.mxu0 0.0
    %969 = vmatprep.subr.mxu0 0.0
    %970 = vmatpush2.msra.mxu0 0.0
    %971 = vmatprep.subr.mxu0 0.0
    %972 = vmatpush2.msra.mxu0 0.0
    %973 = vmatprep.subr.mxu0 0.0
    %974 = vmatpush2.msra.mxu0 0.0
    %975 = vmatprep.subr.mxu0 0.0
    %976 = vmatpush2.msra.mxu0 0.0
    %977 = vmatprep.subr.mxu0 0.0
    %978 = vmatpush2.msra.mxu0 0.0
    %979 = vmatprep.subr.mxu0 0.0
    %980 = vmatpush2.msra.mxu0 0.0
    %981 = vmatprep.subr.mxu0 0.0
    %982 = vmatpush2.msra.mxu0 0.0
    %983 = vmatprep.subr.mxu0 0.0
    %984 = vmatpush2.msra.mxu0 0.0
    %985 = vmatprep.mubr.f32.mxu0 0.0
    %986 = vmatmul.mubr.f32.gmra.mxu0 %v919
    %v987 = vpop.f32.mrf.mxu0
    %v988 = vadd.f32 0.0, %v987
    %v989 = vpop.f32.mrf.mxu0
    %990 = vdwg.mxu0
    %991 = vrot.lane.b32.xlu0 %v158, 64
    %v992 = vpop.permute.xlu0 %991
    %v995 = vsel %vm176, %v828, 0
    %997 = vmatprep.subr.mxu0 0.0
    %998 = vmatpush1.msra.mxu0 0.0
    %999 = vmatprep.subr.mxu0 0.0
    %1000 = vmatpush1.msra.mxu0 0.0
    %1001 = vmatprep.subr.mxu0 0.0
    %1002 = vmatpush1.msra.mxu0 0.0
    %1003 = vmatprep.subr.mxu0 0.0
    %1004 = vmatpush1.msra.mxu0 0.0
    %1005 = vmatprep.subr.mxu0 0.0
    %1006 = vmatpush1.msra.mxu0 0.0
    %1007 = vmatprep.subr.mxu0 0.0
    %1008 = vmatpush1.msra.mxu0 0.0
    %1009 = vmatprep.subr.mxu0 0.0
    %1010 = vmatpush1.msra.mxu0 0.0
    %1011 = vmatprep.subr.mxu0 0.0
    %1012 = vmatpush1.msra.mxu0 0.0
    %1013 = vmatprep.subr.mxu0 0.0
    %1014 = vmatpush1.msra.mxu0 0.0
    %1015 = vmatprep.subr.mxu0 0.0
    %1016 = vmatpush1.msra.mxu0 0.0
    %1017 = vmatprep.subr.mxu0 0.0
    %1018 = vmatpush1.msra.mxu0 0.0
    %1019 = vmatprep.subr.mxu0 0.0
    %1020 = vmatpush1.msra.mxu0 0.0
    %1021 = vmatprep.subr.mxu0 0.0
    %1022 = vmatpush1.msra.mxu0 0.0
    %1023 = vmatprep.subr.mxu0 0.0
    %1024 = vmatpush1.msra.mxu0 0.0
    %1025 = vmatprep.subr.mxu0 0.0
    %1026 = vmatpush1.msra.mxu0 0.0
    %1027 = vmatprep.subr.mxu0 0.0
    %1028 = vmatpush1.msra.mxu0 %v992
    %1029 = vmatprep.subr.mxu0 0.0
    %1030 = vmatpush2.msra.mxu0 0.0
    %1031 = vmatprep.subr.mxu0 0.0
    %1032 = vmatpush2.msra.mxu0 0.0
    %1033 = vmatprep.subr.mxu0 0.0
    %1034 = vmatpush2.msra.mxu0 0.0
    %1035 = vmatprep.subr.mxu0 0.0
    %1036 = vmatpush2.msra.mxu0 0.0
    %1037 = vmatprep.subr.mxu0 0.0
    %1038 = vmatpush2.msra.mxu0 0.0
    %1039 = vmatprep.subr.mxu0 0.0
    %1040 = vmatpush2.msra.mxu0 0.0
    %1041 = vmatprep.subr.mxu0 0.0
    %1042 = vmatpush2.msra.mxu0 0.0
    %1043 = vmatprep.subr.mxu0 0.0
    %1044 = vmatpush2.msra.mxu0 0.0
    %1045 = vmatprep.subr.mxu0 0.0
    %1046 = vmatpush2.msra.mxu0 0.0
    %1047 = vmatprep.subr.mxu0 0.0
    %1048 = vmatpush2.msra.mxu0 0.0
    %1049 = vmatprep.subr.mxu0 0.0
    %1050 = vmatpush2.msra.mxu0 0.0
    %1051 = vmatprep.subr.mxu0 0.0
    %1052 = vmatpush2.msra.mxu0 0.0
    %1053 = vmatprep.subr.mxu0 0.0
    %1054 = vmatpush2.msra.mxu0 0.0
    %1055 = vmatprep.subr.mxu0 0.0
    %1056 = vmatpush2.msra.mxu0 0.0
    %1057 = vmatprep.subr.mxu0 0.0
    %1058 = vmatpush2.msra.mxu0 0.0
    %1059 = vmatprep.subr.mxu0 0.0
    %1060 = vmatpush2.msra.mxu0 0.0
    %1061 = vmatprep.mubr.f32.mxu0 0.0
    %1062 = vmatmul.mubr.f32.gmra.mxu0 %v995
    %v1063 = vpop.f32.mrf.mxu0
    %v1064 = vadd.f32 0.0, %v1063
    %v1065 = vpop.f32.mrf.mxu0
    %1066 = vdwg.mxu0
    %1067 = vrot.lane.b32.xlu0 %v160, 64
    %v1068 = vpop.permute.xlu0 %1067
    %v1071 = vsel %vm176, %v830, 0
    %1073 = vmatprep.subr.mxu0 0.0
    %1074 = vmatpush1.msra.mxu0 0.0
    %1075 = vmatprep.subr.mxu0 0.0
    %1076 = vmatpush1.msra.mxu0 0.0
    %1077 = vmatprep.subr.mxu0 0.0
    %1078 = vmatpush1.msra.mxu0 0.0
    %1079 = vmatprep.subr.mxu0 0.0
    %1080 = vmatpush1.msra.mxu0 0.0
    %1081 = vmatprep.subr.mxu0 0.0
    %1082 = vmatpush1.msra.mxu0 0.0
    %1083 = vmatprep.subr.mxu0 0.0
    %1084 = vmatpush1.msra.mxu0 0.0
    %1085 = vmatprep.subr.mxu0 0.0
    %1086 = vmatpush1.msra.mxu0 0.0
    %1087 = vmatprep.subr.mxu0 0.0
    %1088 = vmatpush1.msra.mxu0 0.0
    %1089 = vmatprep.subr.mxu0 0.0
    %1090 = vmatpush1.msra.mxu0 0.0
    %1091 = vmatprep.subr.mxu0 0.0
    %1092 = vmatpush1.msra.mxu0 0.0
    %1093 = vmatprep.subr.mxu0 0.0
    %1094 = vmatpush1.msra.mxu0 0.0
    %1095 = vmatprep.subr.mxu0 0.0
    %1096 = vmatpush1.msra.mxu0 0.0
    %1097 = vmatprep.subr.mxu0 0.0
    %1098 = vmatpush1.msra.mxu0 0.0
    %1099 = vmatprep.subr.mxu0 0.0
    %1100 = vmatpush1.msra.mxu0 0.0
    %1101 = vmatprep.subr.mxu0 0.0
    %1102 = vmatpush1.msra.mxu0 0.0
    %1103 = vmatprep.subr.mxu0 0.0
    %1104 = vmatpush1.msra.mxu0 %v1068
    %1105 = vmatprep.subr.mxu0 0.0
    %1106 = vmatpush2.msra.mxu0 0.0
    %1107 = vmatprep.subr.mxu0 0.0
    %1108 = vmatpush2.msra.mxu0 0.0
    %1109 = vmatprep.subr.mxu0 0.0
    %1110 = vmatpush2.msra.mxu0 0.0
    %1111 = vmatprep.subr.mxu0 0.0
    %1112 = vmatpush2.msra.mxu0 0.0
    %1113 = vmatprep.subr.mxu0 0.0
    %1114 = vmatpush2.msra.mxu0 0.0
    %1115 = vmatprep.subr.mxu0 0.0
    %1116 = vmatpush2.msra.mxu0 0.0
    %1117 = vmatprep.subr.mxu0 0.0
    %1118 = vmatpush2.msra.mxu0 0.0
    %1119 = vmatprep.subr.mxu0 0.0
    %1120 = vmatpush2.msra.mxu0 0.0
    %1121 = vmatprep.subr.mxu0 0.0
    %1122 = vmatpush2.msra.mxu0 0.0
    %1123 = vmatprep.subr.mxu0 0.0
    %1124 = vmatpush2.msra.mxu0 0.0
    %1125 = vmatprep.subr.mxu0 0.0
    %1126 = vmatpush2.msra.mxu0 0.0
    %1127 = vmatprep.subr.mxu0 0.0
    %1128 = vmatpush2.msra.mxu0 0.0
    %1129 = vmatprep.subr.mxu0 0.0
    %1130 = vmatpush2.msra.mxu0 0.0
    %1131 = vmatprep.subr.mxu0 0.0
    %1132 = vmatpush2.msra.mxu0 0.0
    %1133 = vmatprep.subr.mxu0 0.0
    %1134 = vmatpush2.msra.mxu0 0.0
    %1135 = vmatprep.subr.mxu0 0.0
    %1136 = vmatpush2.msra.mxu0 0.0
    %1137 = vmatprep.mubr.f32.mxu0 0.0
    %1138 = vmatmul.mubr.f32.gmra.mxu0 %v1071
    %v1139 = vpop.f32.mrf.mxu0
    %v1140 = vadd.f32 0.0, %v1139
    %v1141 = vpop.f32.mrf.mxu0
    %1142 = vdwg.mxu0
    %1143 = vrot.lane.b32.xlu0 %v162, 64
    %v1144 = vpop.permute.xlu0 %1143
    %v1147 = vsel %vm176, %v832, 0
    %1149 = vmatprep.subr.mxu0 0.0
    %1150 = vmatpush1.msra.mxu0 0.0
    %1151 = vmatprep.subr.mxu0 0.0
    %1152 = vmatpush1.msra.mxu0 0.0
    %1153 = vmatprep.subr.mxu0 0.0
    %1154 = vmatpush1.msra.mxu0 0.0
    %1155 = vmatprep.subr.mxu0 0.0
    %1156 = vmatpush1.msra.mxu0 0.0
    %1157 = vmatprep.subr.mxu0 0.0
    %1158 = vmatpush1.msra.mxu0 0.0
    %1159 = vmatprep.subr.mxu0 0.0
    %1160 = vmatpush1.msra.mxu0 0.0
    %1161 = vmatprep.subr.mxu0 0.0
    %1162 = vmatpush1.msra.mxu0 0.0
    %1163 = vmatprep.subr.mxu0 0.0
    %1164 = vmatpush1.msra.mxu0 0.0
    %1165 = vmatprep.subr.mxu0 0.0
    %1166 = vmatpush1.msra.mxu0 0.0
    %1167 = vmatprep.subr.mxu0 0.0
    %1168 = vmatpush1.msra.mxu0 0.0
    %1169 = vmatprep.subr.mxu0 0.0
    %1170 = vmatpush1.msra.mxu0 0.0
    %1171 = vmatprep.subr.mxu0 0.0
    %1172 = vmatpush1.msra.mxu0 0.0
    %1173 = vmatprep.subr.mxu0 0.0
    %1174 = vmatpush1.msra.mxu0 0.0
    %1175 = vmatprep.subr.mxu0 0.0
    %1176 = vmatpush1.msra.mxu0 0.0
    %1177 = vmatprep.subr.mxu0 0.0
    %1178 = vmatpush1.msra.mxu0 0.0
    %1179 = vmatprep.subr.mxu0 0.0
    %1180 = vmatpush1.msra.mxu0 %v1144
    %1181 = vmatprep.subr.mxu0 0.0
    %1182 = vmatpush2.msra.mxu0 0.0
    %1183 = vmatprep.subr.mxu0 0.0
    %1184 = vmatpush2.msra.mxu0 0.0
    %1185 = vmatprep.subr.mxu0 0.0
    %1186 = vmatpush2.msra.mxu0 0.0
    %1187 = vmatprep.subr.mxu0 0.0
    %1188 = vmatpush2.msra.mxu0 0.0
    %1189 = vmatprep.subr.mxu0 0.0
    %1190 = vmatpush2.msra.mxu0 0.0
    %1191 = vmatprep.subr.mxu0 0.0
    %1192 = vmatpush2.msra.mxu0 0.0
    %1193 = vmatprep.subr.mxu0 0.0
    %1194 = vmatpush2.msra.mxu0 0.0
    %1195 = vmatprep.subr.mxu0 0.0
    %1196 = vmatpush2.msra.mxu0 0.0
    %1197 = vmatprep.subr.mxu0 0.0
    %1198 = vmatpush2.msra.mxu0 0.0
    %1199 = vmatprep.subr.mxu0 0.0
    %1200 = vmatpush2.msra.mxu0 0.0
    %1201 = vmatprep.subr.mxu0 0.0
    %1202 = vmatpush2.msra.mxu0 0.0
    %1203 = vmatprep.subr.mxu0 0.0
    %1204 = vmatpush2.msra.mxu0 0.0
    %1205 = vmatprep.subr.mxu0 0.0
    %1206 = vmatpush2.msra.mxu0 0.0
    %1207 = vmatprep.subr.mxu0 0.0
    %1208 = vmatpush2.msra.mxu0 0.0
    %1209 = vmatprep.subr.mxu0 0.0
    %1210 = vmatpush2.msra.mxu0 0.0
    %1211 = vmatprep.subr.mxu0 0.0
    %1212 = vmatpush2.msra.mxu0 0.0
    %1213 = vmatprep.mubr.f32.mxu0 0.0
    %1214 = vmatmul.mubr.f32.gmra.mxu0 %v1147
    %v1215 = vpop.f32.mrf.mxu0
    %v1216 = vadd.f32 0.0, %v1215
    %v1217 = vpop.f32.mrf.mxu0
    %1218 = vdwg.mxu0
    %1219 = vrot.lane.b32.xlu0 %v164, 64
    %v1220 = vpop.permute.xlu0 %1219
    %v1223 = vsel %vm176, %v834, 0
    %1225 = vmatprep.subr.mxu0 0.0
    %1226 = vmatpush1.msra.mxu0 0.0
    %1227 = vmatprep.subr.mxu0 0.0
    %1228 = vmatpush1.msra.mxu0 0.0
    %1229 = vmatprep.subr.mxu0 0.0
    %1230 = vmatpush1.msra.mxu0 0.0
    %1231 = vmatprep.subr.mxu0 0.0
    %1232 = vmatpush1.msra.mxu0 0.0
    %1233 = vmatprep.subr.mxu0 0.0
    %1234 = vmatpush1.msra.mxu0 0.0
    %1235 = vmatprep.subr.mxu0 0.0
    %1236 = vmatpush1.msra.mxu0 0.0
    %1237 = vmatprep.subr.mxu0 0.0
    %1238 = vmatpush1.msra.mxu0 0.0
    %1239 = vmatprep.subr.mxu0 0.0
    %1240 = vmatpush1.msra.mxu0 0.0
    %1241 = vmatprep.subr.mxu0 0.0
    %1242 = vmatpush1.msra.mxu0 0.0
    %1243 = vmatprep.subr.mxu0 0.0
    %1244 = vmatpush1.msra.mxu0 0.0
    %1245 = vmatprep.subr.mxu0 0.0
    %1246 = vmatpush1.msra.mxu0 0.0
    %1247 = vmatprep.subr.mxu0 0.0
    %1248 = vmatpush1.msra.mxu0 0.0
    %1249 = vmatprep.subr.mxu0 0.0
    %1250 = vmatpush1.msra.mxu0 0.0
    %1251 = vmatprep.subr.mxu0 0.0
    %1252 = vmatpush1.msra.mxu0 0.0
    %1253 = vmatprep.subr.mxu0 0.0
    %1254 = vmatpush1.msra.mxu0 0.0
    %1255 = vmatprep.subr.mxu0 0.0
    %1256 = vmatpush1.msra.mxu0 %v1220
    %1257 = vmatprep.subr.mxu0 0.0
    %1258 = vmatpush2.msra.mxu0 0.0
    %1259 = vmatprep.subr.mxu0 0.0
    %1260 = vmatpush2.msra.mxu0 0.0
    %1261 = vmatprep.subr.mxu0 0.0
    %1262 = vmatpush2.msra.mxu0 0.0
    %1263 = vmatprep.subr.mxu0 0.0
    %1264 = vmatpush2.msra.mxu0 0.0
    %1265 = vmatprep.subr.mxu0 0.0
    %1266 = vmatpush2.msra.mxu0 0.0
    %1267 = vmatprep.subr.mxu0 0.0
    %1268 = vmatpush2.msra.mxu0 0.0
    %1269 = vmatprep.subr.mxu0 0.0
    %1270 = vmatpush2.msra.mxu0 0.0
    %1271 = vmatprep.subr.mxu0 0.0
    %1272 = vmatpush2.msra.mxu0 0.0
    %1273 = vmatprep.subr.mxu0 0.0
    %1274 = vmatpush2.msra.mxu0 0.0
    %1275 = vmatprep.subr.mxu0 0.0
    %1276 = vmatpush2.msra.mxu0 0.0
    %1277 = vmatprep.subr.mxu0 0.0
    %1278 = vmatpush2.msra.mxu0 0.0
    %1279 = vmatprep.subr.mxu0 0.0
    %1280 = vmatpush2.msra.mxu0 0.0
    %1281 = vmatprep.subr.mxu0 0.0
    %1282 = vmatpush2.msra.mxu0 0.0
    %1283 = vmatprep.subr.mxu0 0.0
    %1284 = vmatpush2.msra.mxu0 0.0
    %1285 = vmatprep.subr.mxu0 0.0
    %1286 = vmatpush2.msra.mxu0 0.0
    %1287 = vmatprep.subr.mxu0 0.0
    %1288 = vmatpush2.msra.mxu0 0.0
    %1289 = vmatprep.mubr.f32.mxu0 0.0
    %1290 = vmatmul.mubr.f32.gmra.mxu0 %v1223
    %v1291 = vpop.f32.mrf.mxu0
    %v1292 = vadd.f32 0.0, %v1291
    %v1293 = vpop.f32.mrf.mxu0
    %1294 = vdwg.mxu0
    %1295 = vrot.lane.b32.xlu0 %v166, 64
    %v1296 = vpop.permute.xlu0 %1295
    %v1299 = vsel %vm176, %v836, 0
    %1301 = vmatprep.subr.mxu0 0.0
    %1302 = vmatpush1.msra.mxu0 0.0
    %1303 = vmatprep.subr.mxu0 0.0
    %1304 = vmatpush1.msra.mxu0 0.0
    %1305 = vmatprep.subr.mxu0 0.0
    %1306 = vmatpush1.msra.mxu0 0.0
    %1307 = vmatprep.subr.mxu0 0.0
    %1308 = vmatpush1.msra.mxu0 0.0
    %1309 = vmatprep.subr.mxu0 0.0
    %1310 = vmatpush1.msra.mxu0 0.0
    %1311 = vmatprep.subr.mxu0 0.0
    %1312 = vmatpush1.msra.mxu0 0.0
    %1313 = vmatprep.subr.mxu0 0.0
    %1314 = vmatpush1.msra.mxu0 0.0
    %1315 = vmatprep.subr.mxu0 0.0
    %1316 = vmatpush1.msra.mxu0 0.0
    %1317 = vmatprep.subr.mxu0 0.0
    %1318 = vmatpush1.msra.mxu0 0.0
    %1319 = vmatprep.subr.mxu0 0.0
    %1320 = vmatpush1.msra.mxu0 0.0
    %1321 = vmatprep.subr.mxu0 0.0
    %1322 = vmatpush1.msra.mxu0 0.0
    %1323 = vmatprep.subr.mxu0 0.0
    %1324 = vmatpush1.msra.mxu0 0.0
    %1325 = vmatprep.subr.mxu0 0.0
    %1326 = vmatpush1.msra.mxu0 0.0
    %1327 = vmatprep.subr.mxu0 0.0
    %1328 = vmatpush1.msra.mxu0 0.0
    %1329 = vmatprep.subr.mxu0 0.0
    %1330 = vmatpush1.msra.mxu0 0.0
    %1331 = vmatprep.subr.mxu0 0.0
    %1332 = vmatpush1.msra.mxu0 %v1296
    %1333 = vmatprep.subr.mxu0 0.0
    %1334 = vmatpush2.msra.mxu0 0.0
    %1335 = vmatprep.subr.mxu0 0.0
    %1336 = vmatpush2.msra.mxu0 0.0
    %1337 = vmatprep.subr.mxu0 0.0
    %1338 = vmatpush2.msra.mxu0 0.0
    %1339 = vmatprep.subr.mxu0 0.0
    %1340 = vmatpush2.msra.mxu0 0.0
    %1341 = vmatprep.subr.mxu0 0.0
    %1342 = vmatpush2.msra.mxu0 0.0
    %1343 = vmatprep.subr.mxu0 0.0
    %1344 = vmatpush2.msra.mxu0 0.0
    %1345 = vmatprep.subr.mxu0 0.0
    %1346 = vmatpush2.msra.mxu0 0.0
    %1347 = vmatprep.subr.mxu0 0.0
    %1348 = vmatpush2.msra.mxu0 0.0
    %1349 = vmatprep.subr.mxu0 0.0
    %1350 = vmatpush2.msra.mxu0 0.0
    %1351 = vmatprep.subr.mxu0 0.0
    %1352 = vmatpush2.msra.mxu0 0.0
    %1353 = vmatprep.subr.mxu0 0.0
    %1354 = vmatpush2.msra.mxu0 0.0
    %1355 = vmatprep.subr.mxu0 0.0
    %1356 = vmatpush2.msra.mxu0 0.0
    %1357 = vmatprep.subr.mxu0 0.0
    %1358 = vmatpush2.msra.mxu0 0.0
    %1359 = vmatprep.subr.mxu0 0.0
    %1360 = vmatpush2.msra.mxu0 0.0
    %1361 = vmatprep.subr.mxu0 0.0
    %1362 = vmatpush2.msra.mxu0 0.0
    %1363 = vmatprep.subr.mxu0 0.0
    %1364 = vmatpush2.msra.mxu0 0.0
    %1365 = vmatprep.mubr.f32.mxu0 0.0
    %1366 = vmatmul.mubr.f32.gmra.mxu0 %v1299
    %v1367 = vpop.f32.mrf.mxu0
    %v1368 = vadd.f32 0.0, %v1367
    %v1369 = vpop.f32.mrf.mxu0
    %1370 = vdwg.mxu0
    %1371 = vrot.lane.b32.xlu0 %v168, 64
    %v1372 = vpop.permute.xlu0 %1371
    %v1375 = vsel %vm176, %v838, 0
    %1377 = vmatprep.subr.mxu0 0.0
    %1378 = vmatpush1.msra.mxu0 0.0
    %1379 = vmatprep.subr.mxu0 0.0
    %1380 = vmatpush1.msra.mxu0 0.0
    %1381 = vmatprep.subr.mxu0 0.0
    %1382 = vmatpush1.msra.mxu0 0.0
    %1383 = vmatprep.subr.mxu0 0.0
    %1384 = vmatpush1.msra.mxu0 0.0
    %1385 = vmatprep.subr.mxu0 0.0
    %1386 = vmatpush1.msra.mxu0 0.0
    %1387 = vmatprep.subr.mxu0 0.0
    %1388 = vmatpush1.msra.mxu0 0.0
    %1389 = vmatprep.subr.mxu0 0.0
    %1390 = vmatpush1.msra.mxu0 0.0
    %1391 = vmatprep.subr.mxu0 0.0
    %1392 = vmatpush1.msra.mxu0 0.0
    %1393 = vmatprep.subr.mxu0 0.0
    %1394 = vmatpush1.msra.mxu0 0.0
    %1395 = vmatprep.subr.mxu0 0.0
    %1396 = vmatpush1.msra.mxu0 0.0
    %1397 = vmatprep.subr.mxu0 0.0
    %1398 = vmatpush1.msra.mxu0 0.0
    %1399 = vmatprep.subr.mxu0 0.0
    %1400 = vmatpush1.msra.mxu0 0.0
    %1401 = vmatprep.subr.mxu0 0.0
    %1402 = vmatpush1.msra.mxu0 0.0
    %1403 = vmatprep.subr.mxu0 0.0
    %1404 = vmatpush1.msra.mxu0 0.0
    %1405 = vmatprep.subr.mxu0 0.0
    %1406 = vmatpush1.msra.mxu0 0.0
    %1407 = vmatprep.subr.mxu0 0.0
    %1408 = vmatpush1.msra.mxu0 %v1372
    %1409 = vmatprep.subr.mxu0 0.0
    %1410 = vmatpush2.msra.mxu0 0.0
    %1411 = vmatprep.subr.mxu0 0.0
    %1412 = vmatpush2.msra.mxu0 0.0
    %1413 = vmatprep.subr.mxu0 0.0
    %1414 = vmatpush2.msra.mxu0 0.0
    %1415 = vmatprep.subr.mxu0 0.0
    %1416 = vmatpush2.msra.mxu0 0.0
    %1417 = vmatprep.subr.mxu0 0.0
    %1418 = vmatpush2.msra.mxu0 0.0
    %1419 = vmatprep.subr.mxu0 0.0
    %1420 = vmatpush2.msra.mxu0 0.0
    %1421 = vmatprep.subr.mxu0 0.0
    %1422 = vmatpush2.msra.mxu0 0.0
    %1423 = vmatprep.subr.mxu0 0.0
    %1424 = vmatpush2.msra.mxu0 0.0
    %1425 = vmatprep.subr.mxu0 0.0
    %1426 = vmatpush2.msra.mxu0 0.0
    %1427 = vmatprep.subr.mxu0 0.0
    %1428 = vmatpush2.msra.mxu0 0.0
    %1429 = vmatprep.subr.mxu0 0.0
    %1430 = vmatpush2.msra.mxu0 0.0
    %1431 = vmatprep.subr.mxu0 0.0
    %1432 = vmatpush2.msra.mxu0 0.0
    %1433 = vmatprep.subr.mxu0 0.0
    %1434 = vmatpush2.msra.mxu0 0.0
    %1435 = vmatprep.subr.mxu0 0.0
    %1436 = vmatpush2.msra.mxu0 0.0
    %1437 = vmatprep.subr.mxu0 0.0
    %1438 = vmatpush2.msra.mxu0 0.0
    %1439 = vmatprep.subr.mxu0 0.0
    %1440 = vmatpush2.msra.mxu0 0.0
    %1441 = vmatprep.mubr.f32.mxu0 0.0
    %1442 = vmatmul.mubr.f32.gmra.mxu0 %v1375
    %v1443 = vpop.f32.mrf.mxu0
    %v1444 = vadd.f32 0.0, %v1443
    %v1445 = vpop.f32.mrf.mxu0
    %1446 = vdwg.mxu0
    %1449 = vrot.lane.b32.xlu0 %v1064, 8
    %v1450 = vpop.permute.xlu0 %1449
    %1451 = vrot.lane.b32.xlu0 %v1140, 8
    %v1452 = vpop.permute.xlu0 %1451
    %1457 = vrot.lane.b32.xlu0 %v1216, 16
    %v1458 = vpop.permute.xlu0 %1457
    %1459 = vrot.lane.b32.xlu0 %v1292, 16
    %v1460 = vpop.permute.xlu0 %1459
    %1465 = vrot.lane.b32.xlu0 %v1368, 24
    %v1466 = vpop.permute.xlu0 %1465
    %1467 = vrot.lane.b32.xlu0 %v1444, 24
    %v1468 = vpop.permute.xlu0 %1467
    %v1471 = vsel %vm176, %v912, %v1450
    %v1472 = vsel %vm176, %v988, %v1452
    %vm1473 = vcmask 130048
    %v1474 = vsel %vm1473, %v1471, %v1458
    %v1475 = vsel %vm1473, %v1472, %v1460
    %vm1476 = vcmask 195584
    %v1477 = vsel %vm1476, %v1474, %v1466
    %v1478 = vsel %vm1476, %v1475, %v1468
    %v1479 = vlaneseq
    %v1480 = vshrl.u32 %v1479, 7
    %v1481 = vsub.s32 0, %v1480
    %v1482 = vrot.slane %v173, %v1481
    %v1484 = vsel %vm73, %v1477, 0
    %v1487 = vsel %vm73, %v1478, 0
    %1489 = vmatprep.subr.mxu0 0.0
    %1490 = vmatpush1.msra.mxu0 0.0
    %1491 = vmatprep.subr.mxu0 0.0
    %1492 = vmatpush1.msra.mxu0 0.0
    %1493 = vmatprep.subr.mxu0 0.0
    %1494 = vmatpush1.msra.mxu0 0.0
    %1495 = vmatprep.subr.mxu0 0.0
    %1496 = vmatpush1.msra.mxu0 0.0
    %1497 = vmatprep.subr.mxu0 0.0
    %1498 = vmatpush1.msra.mxu0 0.0
    %1499 = vmatprep.subr.mxu0 0.0
    %1500 = vmatpush1.msra.mxu0 0.0
    %1501 = vmatprep.subr.mxu0 0.0
    %1502 = vmatpush1.msra.mxu0 0.0
    %1503 = vmatprep.subr.mxu0 0.0
    %1504 = vmatpush1.msra.mxu0 0.0
    %1505 = vmatprep.subr.mxu0 0.0
    %1506 = vmatpush1.msra.mxu0 0.0
    %1507 = vmatprep.subr.mxu0 0.0
    %1508 = vmatpush1.msra.mxu0 0.0
    %1509 = vmatprep.subr.mxu0 0.0
    %1510 = vmatpush1.msra.mxu0 0.0
    %1511 = vmatprep.subr.mxu0 0.0
    %1512 = vmatpush1.msra.mxu0 0.0
    %1513 = vmatprep.subr.mxu0 0.0
    %1514 = vmatpush1.msra.mxu0 %v172
    %1515 = vmatprep.subr.mxu0 0.0
    %1516 = vmatpush1.msra.mxu0 %v171
    %1517 = vmatprep.subr.mxu0 0.0
    %1518 = vmatpush1.msra.mxu0 %v170
    %1519 = vmatprep.subr.mxu0 0.0
    %1520 = vmatpush1.msra.mxu0 %v169
    %1521 = vmatprep.subr.mxu0 0.0
    %1522 = vmatpush2.msra.mxu0 0.0
    %1523 = vmatprep.subr.mxu0 0.0
    %1524 = vmatpush2.msra.mxu0 0.0
    %1525 = vmatprep.subr.mxu0 0.0
    %1526 = vmatpush2.msra.mxu0 0.0
    %1527 = vmatprep.subr.mxu0 0.0
    %1528 = vmatpush2.msra.mxu0 0.0
    %1529 = vmatprep.subr.mxu0 0.0
    %1530 = vmatpush2.msra.mxu0 0.0
    %1531 = vmatprep.subr.mxu0 0.0
    %1532 = vmatpush2.msra.mxu0 0.0
    %1533 = vmatprep.subr.mxu0 0.0
    %1534 = vmatpush2.msra.mxu0 0.0
    %1535 = vmatprep.subr.mxu0 0.0
    %1536 = vmatpush2.msra.mxu0 0.0
    %1537 = vmatprep.subr.mxu0 0.0
    %1538 = vmatpush2.msra.mxu0 0.0
    %1539 = vmatprep.subr.mxu0 0.0
    %1540 = vmatpush2.msra.mxu0 0.0
    %1541 = vmatprep.subr.mxu0 0.0
    %1542 = vmatpush2.msra.mxu0 0.0
    %1543 = vmatprep.subr.mxu0 0.0
    %1544 = vmatpush2.msra.mxu0 0.0
    %1545 = vmatprep.subr.mxu0 0.0
    %1546 = vmatpush2.msra.mxu0 0.0
    %1547 = vmatprep.subr.mxu0 0.0
    %1548 = vmatpush2.msra.mxu0 0.0
    %1549 = vmatprep.subr.mxu0 0.0
    %1550 = vmatpush2.msra.mxu0 0.0
    %1551 = vmatprep.subr.mxu0 0.0
    %1552 = vmatpush2.msra.mxu0 0.0
    %1553 = vmatprep.mubr.f32.mxu0 0.0
    %1554 = vmatmul.mubr.f32.gmra.mxu0 %v1484
    %v1555 = vpop.f32.mrf.mxu0
    %v1556 = vadd.f32 %v1482, %v1555
    %v1557 = vpop.f32.mrf.mxu0
    %1558 = vmatprep.mubr.f32.mxu0 0.0
    %1559 = vmatmul.mubr.f32.gmra.mxu0 %v1487
    %v1560 = vpop.f32.mrf.mxu0
    %v1561 = vadd.f32 %v1482, %v1560
    %v1562 = vpop.f32.mrf.mxu0
    %1563 = vdwg.mxu0
    %v1564 = vsel %vm73, %v1556, 0.0
    %1565 = vadd.xlane.f32.xlu0 %v1564
    %v1566 = vpop.xlane.xlu0 %1565
    %v1567 = vsel %vm73, %v1561, 0.0
    %1568 = vadd.xlane.f32.xlu0 %v1567
    %v1569 = vpop.xlane.xlu0 %1568
    %v1570 = vrcp.pop 32.0
    %v1571 = vmul.f32 %v1566, %v1570
    %v1572 = vmul.f32 %v1569, %v1570
    %v1573 = vsub.f32 %v1556, %v1571
    %v1574 = vsub.f32 %v1561, %v1572
    %v1575 = vmul.f32 %v1573, %v1573
    %v1576 = vmul.f32 %v1574, %v1574
    %v1577 = vsel %vm73, %v1575, 0.0
    %1578 = vadd.xlane.f32.xlu0 %v1577
    %v1579 = vpop.xlane.xlu0 %1578
    %v1580 = vsel %vm73, %v1576, 0.0
    %1581 = vadd.xlane.f32.xlu0 %v1580
    %v1582 = vpop.xlane.xlu0 %1581
    %v1583 = vrcp.pop 31.0
    %v1584 = vmul.f32 %v1579, %v1583
    %v1585 = vmul.f32 %v1582, %v1583
    %v1586 = vrsqrt.pop %v1584
    %v1587 = vmul.f32 %v1584, %v1586
    %vm1588 = vcmp.eq.f32.partialorder %v1584, inf
    %v1589 = vsel %vm1588, %v1584, %v1587
    %vm1590 = vcmp.eq.f32.partialorder %v1584, 0.0
    %v1591 = vand.u32 %v1584, 2147483648
    %v1592 = vsel %vm1590, %v1591, %v1589
    %v1593 = vrsqrt.pop %v1585
    %v1594 = vmul.f32 %v1585, %v1593
    %vm1595 = vcmp.eq.f32.partialorder %v1585, inf
    %v1596 = vsel %vm1595, %v1585, %v1594
    %vm1597 = vcmp.eq.f32.partialorder %v1585, 0.0
    %v1598 = vand.u32 %v1585, 2147483648
    %v1599 = vsel %vm1597, %v1598, %v1596
    %v1600 = vlaneseq
    %v1601 = vshrl.u32 %v1600, 7
    %v1602 = vsub.s32 0, %v1601
    %v1603 = vrot.slane %v60, %v1602
    %v1604 = vmul.f32 %v1603, %v1573
    %v1605 = vmul.f32 %v1603, %v1574
    %v1606 = vadd.f32 %v1592, 1e-08
    %v1607 = vadd.f32 %v1599, 1e-08
    %v1608 = vrcp.pop %v1606
    %v1609 = vmul.f32 %v1604, %v1608
    %v1610 = vrcp.pop %v1607
    %v1611 = vmul.f32 %v1605, %v1610
    %v1612 = vlaneseq
    %v1613 = vshrl.u32 %v1612, 7
    %v1614 = vsub.s32 0, %v1613
    %v1615 = vrot.slane %v61, %v1614
    %v1616 = vadd.f32 %v1609, %v1615
    %v1617 = vadd.f32 %v1611, %v1615
    %v1618 = vadd.f32 %v56, %v1616
    %v1619 = vadd.f32 %v57, %v1617
    %v1620 = vld [vmem:[#allocation7 + $0x40] sm:$0xff]
    %v1621 = vld [vmem:[#allocation7 + $0x48] sm:$0xff]
    %v1622 = vld [vmem:[#allocation7 + $0x50] sm:$0xff]
    %v1623 = vld [vmem:[#allocation7 + $0x58] sm:$0xff]
    %v1624 = vld [vmem:[#allocation7 + $0x60] sm:$0xff]
    %v1625 = vld [vmem:[#allocation7 + $0x68] sm:$0xff]
    %v1626 = vld [vmem:[#allocation7 + $0x70] sm:$0xff]
    %v1627 = vld [vmem:[#allocation7 + $0x78] sm:$0xff]
    %v1628 = vld [vmem:[#allocation7 + $0x102] sm:$0x1]
    %v1629 = vlaneseq
    %v1630 = vshrl.u32 %v1629, 7
    %v1631 = vsub.s32 0, %v1630
    %v1632 = vrot.slane %v1628, %v1631
    %v1634 = vsel %vm73, %v1618, 0
    %v1637 = vsel %vm73, %v1619, 0
    %1639 = vmatprep.subr.mxu0 0.0
    %1640 = vmatpush1.msra.mxu0 0.0
    %1641 = vmatprep.subr.mxu0 0.0
    %1642 = vmatpush1.msra.mxu0 0.0
    %1643 = vmatprep.subr.mxu0 0.0
    %1644 = vmatpush1.msra.mxu0 0.0
    %1645 = vmatprep.subr.mxu0 0.0
    %1646 = vmatpush1.msra.mxu0 0.0
    %1647 = vmatprep.subr.mxu0 0.0
    %1648 = vmatpush1.msra.mxu0 0.0
    %1649 = vmatprep.subr.mxu0 0.0
    %1650 = vmatpush1.msra.mxu0 0.0
    %1651 = vmatprep.subr.mxu0 0.0
    %1652 = vmatpush1.msra.mxu0 0.0
    %1653 = vmatprep.subr.mxu0 0.0
    %1654 = vmatpush1.msra.mxu0 0.0
    %1655 = vmatprep.subr.mxu0 0.0
    %1656 = vmatpush1.msra.mxu0 0.0
    %1657 = vmatprep.subr.mxu0 0.0
    %1658 = vmatpush1.msra.mxu0 0.0
    %1659 = vmatprep.subr.mxu0 0.0
    %1660 = vmatpush1.msra.mxu0 0.0
    %1661 = vmatprep.subr.mxu0 0.0
    %1662 = vmatpush1.msra.mxu0 0.0
    %1663 = vmatprep.subr.mxu0 0.0
    %1664 = vmatpush1.msra.mxu0 %v1623
    %1665 = vmatprep.subr.mxu0 0.0
    %1666 = vmatpush1.msra.mxu0 %v1622
    %1667 = vmatprep.subr.mxu0 0.0
    %1668 = vmatpush1.msra.mxu0 %v1621
    %1669 = vmatprep.subr.mxu0 0.0
    %1670 = vmatpush1.msra.mxu0 %v1620
    %1671 = vmatprep.subr.mxu0 0.0
    %1672 = vmatpush2.msra.mxu0 0.0
    %1673 = vmatprep.subr.mxu0 0.0
    %1674 = vmatpush2.msra.mxu0 0.0
    %1675 = vmatprep.subr.mxu0 0.0
    %1676 = vmatpush2.msra.mxu0 0.0
    %1677 = vmatprep.subr.mxu0 0.0
    %1678 = vmatpush2.msra.mxu0 0.0
    %1679 = vmatprep.subr.mxu0 0.0
    %1680 = vmatpush2.msra.mxu0 0.0
    %1681 = vmatprep.subr.mxu0 0.0
    %1682 = vmatpush2.msra.mxu0 0.0
    %1683 = vmatprep.subr.mxu0 0.0
    %1684 = vmatpush2.msra.mxu0 0.0
    %1685 = vmatprep.subr.mxu0 0.0
    %1686 = vmatpush2.msra.mxu0 0.0
    %1687 = vmatprep.subr.mxu0 0.0
    %1688 = vmatpush2.msra.mxu0 0.0
    %1689 = vmatprep.subr.mxu0 0.0
    %1690 = vmatpush2.msra.mxu0 0.0
    %1691 = vmatprep.subr.mxu0 0.0
    %1692 = vmatpush2.msra.mxu0 0.0
    %1693 = vmatprep.subr.mxu0 0.0
    %1694 = vmatpush2.msra.mxu0 0.0
    %1695 = vmatprep.subr.mxu0 0.0
    %1696 = vmatpush2.msra.mxu0 0.0
    %1697 = vmatprep.subr.mxu0 0.0
    %1698 = vmatpush2.msra.mxu0 0.0
    %1699 = vmatprep.subr.mxu0 0.0
    %1700 = vmatpush2.msra.mxu0 0.0
    %1701 = vmatprep.subr.mxu0 0.0
    %1702 = vmatpush2.msra.mxu0 0.0
    %1703 = vmatprep.mubr.f32.mxu0 0.0
    %1704 = vmatmul.mubr.f32.gmra.mxu0 %v1634
    %v1705 = vpop.f32.mrf.mxu0
    %v1706 = vadd.f32 %v1632, %v1705
    %v1707 = vpop.f32.mrf.mxu0
    %1708 = vmatprep.mubr.f32.mxu0 0.0
    %1709 = vmatmul.mubr.f32.gmra.mxu0 %v1637
    %v1710 = vpop.f32.mrf.mxu0
    %v1711 = vadd.f32 %v1632, %v1710
    %v1712 = vpop.f32.mrf.mxu0
    %1713 = vdwg.mxu0
    %v1714 = vld [vmem:[#allocation7 + $0x103] sm:$0x1]
    %v1715 = vlaneseq
    %v1716 = vshrl.u32 %v1715, 7
    %v1717 = vsub.s32 0, %v1716
    %v1718 = vrot.slane %v1714, %v1717
    %v1720 = vsel %vm73, %v58, 0
    %v1723 = vsel %vm73, %v59, 0
    %1725 = vmatprep.subr.mxu0 0.0
    %1726 = vmatpush1.msra.mxu0 0.0
    %1727 = vmatprep.subr.mxu0 0.0
    %1728 = vmatpush1.msra.mxu0 0.0
    %1729 = vmatprep.subr.mxu0 0.0
    %1730 = vmatpush1.msra.mxu0 0.0
    %1731 = vmatprep.subr.mxu0 0.0
    %1732 = vmatpush1.msra.mxu0 0.0
    %1733 = vmatprep.subr.mxu0 0.0
    %1734 = vmatpush1.msra.mxu0 0.0
    %1735 = vmatprep.subr.mxu0 0.0
    %1736 = vmatpush1.msra.mxu0 0.0
    %1737 = vmatprep.subr.mxu0 0.0
    %1738 = vmatpush1.msra.mxu0 0.0
    %1739 = vmatprep.subr.mxu0 0.0
    %1740 = vmatpush1.msra.mxu0 0.0
    %1741 = vmatprep.subr.mxu0 0.0
    %1742 = vmatpush1.msra.mxu0 0.0
    %1743 = vmatprep.subr.mxu0 0.0
    %1744 = vmatpush1.msra.mxu0 0.0
    %1745 = vmatprep.subr.mxu0 0.0
    %1746 = vmatpush1.msra.mxu0 0.0
    %1747 = vmatprep.subr.mxu0 0.0
    %1748 = vmatpush1.msra.mxu0 0.0
    %1749 = vmatprep.subr.mxu0 0.0
    %1750 = vmatpush1.msra.mxu0 %v1627
    %1751 = vmatprep.subr.mxu0 0.0
    %1752 = vmatpush1.msra.mxu0 %v1626
    %1753 = vmatprep.subr.mxu0 0.0
    %1754 = vmatpush1.msra.mxu0 %v1625
    %1755 = vmatprep.subr.mxu0 0.0
    %1756 = vmatpush1.msra.mxu0 %v1624
    %1757 = vmatprep.subr.mxu0 0.0
    %1758 = vmatpush2.msra.mxu0 0.0
    %1759 = vmatprep.subr.mxu0 0.0
    %1760 = vmatpush2.msra.mxu0 0.0
    %1761 = vmatprep.subr.mxu0 0.0
    %1762 = vmatpush2.msra.mxu0 0.0
    %1763 = vmatprep.subr.mxu0 0.0
    %1764 = vmatpush2.msra.mxu0 0.0
    %1765 = vmatprep.subr.mxu0 0.0
    %1766 = vmatpush2.msra.mxu0 0.0
    %1767 = vmatprep.subr.mxu0 0.0
    %1768 = vmatpush2.msra.mxu0 0.0
    %1769 = vmatprep.subr.mxu0 0.0
    %1770 = vmatpush2.msra.mxu0 0.0
    %1771 = vmatprep.subr.mxu0 0.0
    %1772 = vmatpush2.msra.mxu0 0.0
    %1773 = vmatprep.subr.mxu0 0.0
    %1774 = vmatpush2.msra.mxu0 0.0
    %1775 = vmatprep.subr.mxu0 0.0
    %1776 = vmatpush2.msra.mxu0 0.0
    %1777 = vmatprep.subr.mxu0 0.0
    %1778 = vmatpush2.msra.mxu0 0.0
    %1779 = vmatprep.subr.mxu0 0.0
    %1780 = vmatpush2.msra.mxu0 0.0
    %1781 = vmatprep.subr.mxu0 0.0
    %1782 = vmatpush2.msra.mxu0 0.0
    %1783 = vmatprep.subr.mxu0 0.0
    %1784 = vmatpush2.msra.mxu0 0.0
    %1785 = vmatprep.subr.mxu0 0.0
    %1786 = vmatpush2.msra.mxu0 0.0
    %1787 = vmatprep.subr.mxu0 0.0
    %1788 = vmatpush2.msra.mxu0 0.0
    %1789 = vmatprep.mubr.f32.mxu0 0.0
    %1790 = vmatmul.mubr.f32.gmra.mxu0 %v1720
    %v1791 = vpop.f32.mrf.mxu0
    %v1792 = vadd.f32 %v1718, %v1791
    %v1793 = vpop.f32.mrf.mxu0
    %1794 = vmatprep.mubr.f32.mxu0 0.0
    %1795 = vmatmul.mubr.f32.gmra.mxu0 %v1723
    %v1796 = vpop.f32.mrf.mxu0
    %v1797 = vadd.f32 %v1718, %v1796
    %v1798 = vpop.f32.mrf.mxu0
    %1799 = vdwg.mxu0
    %1802 = vrot.lane.b32.xlu0 %v1706, 120
    %v1803 = vpop.permute.xlu0 %1802
    %1804 = vrot.lane.b32.xlu0 %v1711, 120
    %v1805 = vpop.permute.xlu0 %1804
    %1806 = vrot.lane.b32.xlu0 %v1706, 112
    %v1807 = vpop.permute.xlu0 %1806
    %1808 = vrot.lane.b32.xlu0 %v1711, 112
    %v1809 = vpop.permute.xlu0 %1808
    %1810 = vrot.lane.b32.xlu0 %v1706, 104
    %v1811 = vpop.permute.xlu0 %1810
    %1812 = vrot.lane.b32.xlu0 %v1711, 104
    %v1813 = vpop.permute.xlu0 %1812
    %1816 = vrot.lane.b32.xlu0 %v1792, 120
    %v1817 = vpop.permute.xlu0 %1816
    %1818 = vrot.lane.b32.xlu0 %v1797, 120
    %v1819 = vpop.permute.xlu0 %1818
    %1820 = vrot.lane.b32.xlu0 %v1792, 112
    %v1821 = vpop.permute.xlu0 %1820
    %1822 = vrot.lane.b32.xlu0 %v1797, 112
    %v1823 = vpop.permute.xlu0 %1822
    %1824 = vrot.lane.b32.xlu0 %v1792, 104
    %v1825 = vpop.permute.xlu0 %1824
    %1826 = vrot.lane.b32.xlu0 %v1797, 104
    %v1827 = vpop.permute.xlu0 %1826
    %v1828 = vld [vmem:[#allocation7 + $0x80] sm:$0xff]
    %v1829 = vld [vmem:[#allocation7 + $0x88] sm:$0xff]
    %v1830 = vld [vmem:[#allocation7 + $0x90] sm:$0xff]
    %v1831 = vld [vmem:[#allocation7 + $0x98] sm:$0xff]
    %v1832 = vld [vmem:[#allocation7 + $0x104] sm:$0x1]
    %v1833 = vsel %vm176, %v1706, 0
    %v1835 = vsel %vm176, %v1792, 0
    %1837 = vmatprep.subr.mxu0 0.0
    %1838 = vmatpush1.xpose.msra.mxu0 0.0
    %1839 = vmatprep.subr.mxu0 0.0
    %1840 = vmatpush1.xpose.msra.mxu0 0.0
    %1841 = vmatprep.subr.mxu0 0.0
    %1842 = vmatpush1.xpose.msra.mxu0 0.0
    %1843 = vmatprep.subr.mxu0 0.0
    %1844 = vmatpush1.xpose.msra.mxu0 0.0
    %1845 = vmatprep.subr.mxu0 0.0
    %1846 = vmatpush1.xpose.msra.mxu0 0.0
    %1847 = vmatprep.subr.mxu0 0.0
    %1848 = vmatpush1.xpose.msra.mxu0 0.0
    %1849 = vmatprep.subr.mxu0 0.0
    %1850 = vmatpush1.xpose.msra.mxu0 0.0
    %1851 = vmatprep.subr.mxu0 0.0
    %1852 = vmatpush1.xpose.msra.mxu0 0.0
    %1853 = vmatprep.subr.mxu0 0.0
    %1854 = vmatpush1.xpose.msra.mxu0 0.0
    %1855 = vmatprep.subr.mxu0 0.0
    %1856 = vmatpush1.xpose.msra.mxu0 0.0
    %1857 = vmatprep.subr.mxu0 0.0
    %1858 = vmatpush1.xpose.msra.mxu0 0.0
    %1859 = vmatprep.subr.mxu0 0.0
    %1860 = vmatpush1.xpose.msra.mxu0 0.0
    %1861 = vmatprep.subr.mxu0 0.0
    %1862 = vmatpush1.xpose.msra.mxu0 0.0
    %1863 = vmatprep.subr.mxu0 0.0
    %1864 = vmatpush1.xpose.msra.mxu0 0.0
    %1865 = vmatprep.subr.mxu0 0.0
    %1866 = vmatpush1.xpose.msra.mxu0 0.0
    %1867 = vmatprep.subr.mxu0 0.0
    %1868 = vmatpush1.xpose.msra.mxu0 %v1835
    %1869 = vmatprep.subr.mxu0 0.0
    %1870 = vmatpush2.xpose.msra.mxu0 0.0
    %1871 = vmatprep.subr.mxu0 0.0
    %1872 = vmatpush2.xpose.msra.mxu0 0.0
    %1873 = vmatprep.subr.mxu0 0.0
    %1874 = vmatpush2.xpose.msra.mxu0 0.0
    %1875 = vmatprep.subr.mxu0 0.0
    %1876 = vmatpush2.xpose.msra.mxu0 0.0
    %1877 = vmatprep.subr.mxu0 0.0
    %1878 = vmatpush2.xpose.msra.mxu0 0.0
    %1879 = vmatprep.subr.mxu0 0.0
    %1880 = vmatpush2.xpose.msra.mxu0 0.0
    %1881 = vmatprep.subr.mxu0 0.0
    %1882 = vmatpush2.xpose.msra.mxu0 0.0
    %1883 = vmatprep.subr.mxu0 0.0
    %1884 = vmatpush2.xpose.msra.mxu0 0.0
    %1885 = vmatprep.subr.mxu0 0.0
    %1886 = vmatpush2.xpose.msra.mxu0 0.0
    %1887 = vmatprep.subr.mxu0 0.0
    %1888 = vmatpush2.xpose.msra.mxu0 0.0
    %1889 = vmatprep.subr.mxu0 0.0
    %1890 = vmatpush2.xpose.msra.mxu0 0.0
    %1891 = vmatprep.subr.mxu0 0.0
    %1892 = vmatpush2.xpose.msra.mxu0 0.0
    %1893 = vmatprep.subr.mxu0 0.0
    %1894 = vmatpush2.xpose.msra.mxu0 0.0
    %1895 = vmatprep.subr.mxu0 0.0
    %1896 = vmatpush2.xpose.msra.mxu0 0.0
    %1897 = vmatprep.subr.mxu0 0.0
    %1898 = vmatpush2.xpose.msra.mxu0 0.0
    %1899 = vmatprep.subr.mxu0 0.0
    %1900 = vmatpush2.xpose.msra.mxu0 0.0
    %1901 = vmatprep.mubr.f32.mxu0 0.0
    %1902 = vmatmul.mubr.f32.gmra.mxu0 %v1833
    %v1903 = vpop.f32.mrf.mxu0
    %v1904 = vadd.f32 0.0, %v1903
    %v1905 = vpop.f32.mrf.mxu0
    %1906 = vdwg.mxu0
    %v1907 = vsel %vm176, %v1711, 0
    %v1909 = vsel %vm176, %v1797, 0
    %1911 = vmatprep.subr.mxu0 0.0
    %1912 = vmatpush1.xpose.msra.mxu0 0.0
    %1913 = vmatprep.subr.mxu0 0.0
    %1914 = vmatpush1.xpose.msra.mxu0 0.0
    %1915 = vmatprep.subr.mxu0 0.0
    %1916 = vmatpush1.xpose.msra.mxu0 0.0
    %1917 = vmatprep.subr.mxu0 0.0
    %1918 = vmatpush1.xpose.msra.mxu0 0.0
    %1919 = vmatprep.subr.mxu0 0.0
    %1920 = vmatpush1.xpose.msra.mxu0 0.0
    %1921 = vmatprep.subr.mxu0 0.0
    %1922 = vmatpush1.xpose.msra.mxu0 0.0
    %1923 = vmatprep.subr.mxu0 0.0
    %1924 = vmatpush1.xpose.msra.mxu0 0.0
    %1925 = vmatprep.subr.mxu0 0.0
    %1926 = vmatpush1.xpose.msra.mxu0 0.0
    %1927 = vmatprep.subr.mxu0 0.0
    %1928 = vmatpush1.xpose.msra.mxu0 0.0
    %1929 = vmatprep.subr.mxu0 0.0
    %1930 = vmatpush1.xpose.msra.mxu0 0.0
    %1931 = vmatprep.subr.mxu0 0.0
    %1932 = vmatpush1.xpose.msra.mxu0 0.0
    %1933 = vmatprep.subr.mxu0 0.0
    %1934 = vmatpush1.xpose.msra.mxu0 0.0
    %1935 = vmatprep.subr.mxu0 0.0
    %1936 = vmatpush1.xpose.msra.mxu0 0.0
    %1937 = vmatprep.subr.mxu0 0.0
    %1938 = vmatpush1.xpose.msra.mxu0 0.0
    %1939 = vmatprep.subr.mxu0 0.0
    %1940 = vmatpush1.xpose.msra.mxu0 0.0
    %1941 = vmatprep.subr.mxu0 0.0
    %1942 = vmatpush1.xpose.msra.mxu0 %v1909
    %1943 = vmatprep.subr.mxu0 0.0
    %1944 = vmatpush2.xpose.msra.mxu0 0.0
    %1945 = vmatprep.subr.mxu0 0.0
    %1946 = vmatpush2.xpose.msra.mxu0 0.0
    %1947 = vmatprep.subr.mxu0 0.0
    %1948 = vmatpush2.xpose.msra.mxu0 0.0
    %1949 = vmatprep.subr.mxu0 0.0
    %1950 = vmatpush2.xpose.msra.mxu0 0.0
    %1951 = vmatprep.subr.mxu0 0.0
    %1952 = vmatpush2.xpose.msra.mxu0 0.0
    %1953 = vmatprep.subr.mxu0 0.0
    %1954 = vmatpush2.xpose.msra.mxu0 0.0
    %1955 = vmatprep.subr.mxu0 0.0
    %1956 = vmatpush2.xpose.msra.mxu0 0.0
    %1957 = vmatprep.subr.mxu0 0.0
    %1958 = vmatpush2.xpose.msra.mxu0 0.0
    %1959 = vmatprep.subr.mxu0 0.0
    %1960 = vmatpush2.xpose.msra.mxu0 0.0
    %1961 = vmatprep.subr.mxu0 0.0
    %1962 = vmatpush2.xpose.msra.mxu0 0.0
    %1963 = vmatprep.subr.mxu0 0.0
    %1964 = vmatpush2.xpose.msra.mxu0 0.0
    %1965 = vmatprep.subr.mxu0 0.0
    %1966 = vmatpush2.xpose.msra.mxu0 0.0
    %1967 = vmatprep.subr.mxu0 0.0
    %1968 = vmatpush2.xpose.msra.mxu0 0.0
    %1969 = vmatprep.subr.mxu0 0.0
    %1970 = vmatpush2.xpose.msra.mxu0 0.0
    %1971 = vmatprep.subr.mxu0 0.0
    %1972 = vmatpush2.xpose.msra.mxu0 0.0
    %1973 = vmatprep.subr.mxu0 0.0
    %1974 = vmatpush2.xpose.msra.mxu0 0.0
    %1975 = vmatprep.mubr.f32.mxu0 0.0
    %1976 = vmatmul.mubr.f32.gmra.mxu0 %v1907
    %v1977 = vpop.f32.mrf.mxu0
    %v1978 = vadd.f32 0.0, %v1977
    %v1979 = vpop.f32.mrf.mxu0
    %1980 = vdwg.mxu0
    %v1981 = vsel %vm176, %v1803, 0
    %v1983 = vsel %vm176, %v1817, 0
    %1985 = vmatprep.subr.mxu0 0.0
    %1986 = vmatpush1.xpose.msra.mxu0 0.0
    %1987 = vmatprep.subr.mxu0 0.0
    %1988 = vmatpush1.xpose.msra.mxu0 0.0
    %1989 = vmatprep.subr.mxu0 0.0
    %1990 = vmatpush1.xpose.msra.mxu0 0.0
    %1991 = vmatprep.subr.mxu0 0.0
    %1992 = vmatpush1.xpose.msra.mxu0 0.0
    %1993 = vmatprep.subr.mxu0 0.0
    %1994 = vmatpush1.xpose.msra.mxu0 0.0
    %1995 = vmatprep.subr.mxu0 0.0
    %1996 = vmatpush1.xpose.msra.mxu0 0.0
    %1997 = vmatprep.subr.mxu0 0.0
    %1998 = vmatpush1.xpose.msra.mxu0 0.0
    %1999 = vmatprep.subr.mxu0 0.0
    %2000 = vmatpush1.xpose.msra.mxu0 0.0
    %2001 = vmatprep.subr.mxu0 0.0
    %2002 = vmatpush1.xpose.msra.mxu0 0.0
    %2003 = vmatprep.subr.mxu0 0.0
    %2004 = vmatpush1.xpose.msra.mxu0 0.0
    %2005 = vmatprep.subr.mxu0 0.0
    %2006 = vmatpush1.xpose.msra.mxu0 0.0
    %2007 = vmatprep.subr.mxu0 0.0
    %2008 = vmatpush1.xpose.msra.mxu0 0.0
    %2009 = vmatprep.subr.mxu0 0.0
    %2010 = vmatpush1.xpose.msra.mxu0 0.0
    %2011 = vmatprep.subr.mxu0 0.0
    %2012 = vmatpush1.xpose.msra.mxu0 0.0
    %2013 = vmatprep.subr.mxu0 0.0
    %2014 = vmatpush1.xpose.msra.mxu0 0.0
    %2015 = vmatprep.subr.mxu0 0.0
    %2016 = vmatpush1.xpose.msra.mxu0 %v1983
    %2017 = vmatprep.subr.mxu0 0.0
    %2018 = vmatpush2.xpose.msra.mxu0 0.0
    %2019 = vmatprep.subr.mxu0 0.0
    %2020 = vmatpush2.xpose.msra.mxu0 0.0
    %2021 = vmatprep.subr.mxu0 0.0
    %2022 = vmatpush2.xpose.msra.mxu0 0.0
    %2023 = vmatprep.subr.mxu0 0.0
    %2024 = vmatpush2.xpose.msra.mxu0 0.0
    %2025 = vmatprep.subr.mxu0 0.0
    %2026 = vmatpush2.xpose.msra.mxu0 0.0
    %2027 = vmatprep.subr.mxu0 0.0
    %2028 = vmatpush2.xpose.msra.mxu0 0.0
    %2029 = vmatprep.subr.mxu0 0.0
    %2030 = vmatpush2.xpose.msra.mxu0 0.0
    %2031 = vmatprep.subr.mxu0 0.0
    %2032 = vmatpush2.xpose.msra.mxu0 0.0
    %2033 = vmatprep.subr.mxu0 0.0
    %2034 = vmatpush2.xpose.msra.mxu0 0.0
    %2035 = vmatprep.subr.mxu0 0.0
    %2036 = vmatpush2.xpose.msra.mxu0 0.0
    %2037 = vmatprep.subr.mxu0 0.0
    %2038 = vmatpush2.xpose.msra.mxu0 0.0
    %2039 = vmatprep.subr.mxu0 0.0
    %2040 = vmatpush2.xpose.msra.mxu0 0.0
    %2041 = vmatprep.subr.mxu0 0.0
    %2042 = vmatpush2.xpose.msra.mxu0 0.0
    %2043 = vmatprep.subr.mxu0 0.0
    %2044 = vmatpush2.xpose.msra.mxu0 0.0
    %2045 = vmatprep.subr.mxu0 0.0
    %2046 = vmatpush2.xpose.msra.mxu0 0.0
    %2047 = vmatprep.subr.mxu0 0.0
    %2048 = vmatpush2.xpose.msra.mxu0 0.0
    %2049 = vmatprep.mubr.f32.mxu0 0.0
    %2050 = vmatmul.mubr.f32.gmra.mxu0 %v1981
    %v2051 = vpop.f32.mrf.mxu0
    %v2052 = vadd.f32 0.0, %v2051
    %v2053 = vpop.f32.mrf.mxu0
    %2054 = vdwg.mxu0
    %v2055 = vsel %vm176, %v1805, 0
    %v2057 = vsel %vm176, %v1819, 0
    %2059 = vmatprep.subr.mxu0 0.0
    %2060 = vmatpush1.xpose.msra.mxu0 0.0
    %2061 = vmatprep.subr.mxu0 0.0
    %2062 = vmatpush1.xpose.msra.mxu0 0.0
    %2063 = vmatprep.subr.mxu0 0.0
    %2064 = vmatpush1.xpose.msra.mxu0 0.0
    %2065 = vmatprep.subr.mxu0 0.0
    %2066 = vmatpush1.xpose.msra.mxu0 0.0
    %2067 = vmatprep.subr.mxu0 0.0
    %2068 = vmatpush1.xpose.msra.mxu0 0.0
    %2069 = vmatprep.subr.mxu0 0.0
    %2070 = vmatpush1.xpose.msra.mxu0 0.0
    %2071 = vmatprep.subr.mxu0 0.0
    %2072 = vmatpush1.xpose.msra.mxu0 0.0
    %2073 = vmatprep.subr.mxu0 0.0
    %2074 = vmatpush1.xpose.msra.mxu0 0.0
    %2075 = vmatprep.subr.mxu0 0.0
    %2076 = vmatpush1.xpose.msra.mxu0 0.0
    %2077 = vmatprep.subr.mxu0 0.0
    %2078 = vmatpush1.xpose.msra.mxu0 0.0
    %2079 = vmatprep.subr.mxu0 0.0
    %2080 = vmatpush1.xpose.msra.mxu0 0.0
    %2081 = vmatprep.subr.mxu0 0.0
    %2082 = vmatpush1.xpose.msra.mxu0 0.0
    %2083 = vmatprep.subr.mxu0 0.0
    %2084 = vmatpush1.xpose.msra.mxu0 0.0
    %2085 = vmatprep.subr.mxu0 0.0
    %2086 = vmatpush1.xpose.msra.mxu0 0.0
    %2087 = vmatprep.subr.mxu0 0.0
    %2088 = vmatpush1.xpose.msra.mxu0 0.0
    %2089 = vmatprep.subr.mxu0 0.0
    %2090 = vmatpush1.xpose.msra.mxu0 %v2057
    %2091 = vmatprep.subr.mxu0 0.0
    %2092 = vmatpush2.xpose.msra.mxu0 0.0
    %2093 = vmatprep.subr.mxu0 0.0
    %2094 = vmatpush2.xpose.msra.mxu0 0.0
    %2095 = vmatprep.subr.mxu0 0.0
    %2096 = vmatpush2.xpose.msra.mxu0 0.0
    %2097 = vmatprep.subr.mxu0 0.0
    %2098 = vmatpush2.xpose.msra.mxu0 0.0
    %2099 = vmatprep.subr.mxu0 0.0
    %2100 = vmatpush2.xpose.msra.mxu0 0.0
    %2101 = vmatprep.subr.mxu0 0.0
    %2102 = vmatpush2.xpose.msra.mxu0 0.0
    %2103 = vmatprep.subr.mxu0 0.0
    %2104 = vmatpush2.xpose.msra.mxu0 0.0
    %2105 = vmatprep.subr.mxu0 0.0
    %2106 = vmatpush2.xpose.msra.mxu0 0.0
    %2107 = vmatprep.subr.mxu0 0.0
    %2108 = vmatpush2.xpose.msra.mxu0 0.0
    %2109 = vmatprep.subr.mxu0 0.0
    %2110 = vmatpush2.xpose.msra.mxu0 0.0
    %2111 = vmatprep.subr.mxu0 0.0
    %2112 = vmatpush2.xpose.msra.mxu0 0.0
    %2113 = vmatprep.subr.mxu0 0.0
    %2114 = vmatpush2.xpose.msra.mxu0 0.0
    %2115 = vmatprep.subr.mxu0 0.0
    %2116 = vmatpush2.xpose.msra.mxu0 0.0
    %2117 = vmatprep.subr.mxu0 0.0
    %2118 = vmatpush2.xpose.msra.mxu0 0.0
    %2119 = vmatprep.subr.mxu0 0.0
    %2120 = vmatpush2.xpose.msra.mxu0 0.0
    %2121 = vmatprep.subr.mxu0 0.0
    %2122 = vmatpush2.xpose.msra.mxu0 0.0
    %2123 = vmatprep.mubr.f32.mxu0 0.0
    %2124 = vmatmul.mubr.f32.gmra.mxu0 %v2055
    %v2125 = vpop.f32.mrf.mxu0
    %v2126 = vadd.f32 0.0, %v2125
    %v2127 = vpop.f32.mrf.mxu0
    %2128 = vdwg.mxu0
    %v2129 = vsel %vm176, %v1807, 0
    %v2131 = vsel %vm176, %v1821, 0
    %2133 = vmatprep.subr.mxu0 0.0
    %2134 = vmatpush1.xpose.msra.mxu0 0.0
    %2135 = vmatprep.subr.mxu0 0.0
    %2136 = vmatpush1.xpose.msra.mxu0 0.0
    %2137 = vmatprep.subr.mxu0 0.0
    %2138 = vmatpush1.xpose.msra.mxu0 0.0
    %2139 = vmatprep.subr.mxu0 0.0
    %2140 = vmatpush1.xpose.msra.mxu0 0.0
    %2141 = vmatprep.subr.mxu0 0.0
    %2142 = vmatpush1.xpose.msra.mxu0 0.0
    %2143 = vmatprep.subr.mxu0 0.0
    %2144 = vmatpush1.xpose.msra.mxu0 0.0
    %2145 = vmatprep.subr.mxu0 0.0
    %2146 = vmatpush1.xpose.msra.mxu0 0.0
    %2147 = vmatprep.subr.mxu0 0.0
    %2148 = vmatpush1.xpose.msra.mxu0 0.0
    %2149 = vmatprep.subr.mxu0 0.0
    %2150 = vmatpush1.xpose.msra.mxu0 0.0
    %2151 = vmatprep.subr.mxu0 0.0
    %2152 = vmatpush1.xpose.msra.mxu0 0.0
    %2153 = vmatprep.subr.mxu0 0.0
    %2154 = vmatpush1.xpose.msra.mxu0 0.0
    %2155 = vmatprep.subr.mxu0 0.0
    %2156 = vmatpush1.xpose.msra.mxu0 0.0
    %2157 = vmatprep.subr.mxu0 0.0
    %2158 = vmatpush1.xpose.msra.mxu0 0.0
    %2159 = vmatprep.subr.mxu0 0.0
    %2160 = vmatpush1.xpose.msra.mxu0 0.0
    %2161 = vmatprep.subr.mxu0 0.0
    %2162 = vmatpush1.xpose.msra.mxu0 0.0
    %2163 = vmatprep.subr.mxu0 0.0
    %2164 = vmatpush1.xpose.msra.mxu0 %v2131
    %2165 = vmatprep.subr.mxu0 0.0
    %2166 = vmatpush2.xpose.msra.mxu0 0.0
    %2167 = vmatprep.subr.mxu0 0.0
    %2168 = vmatpush2.xpose.msra.mxu0 0.0
    %2169 = vmatprep.subr.mxu0 0.0
    %2170 = vmatpush2.xpose.msra.mxu0 0.0
    %2171 = vmatprep.subr.mxu0 0.0
    %2172 = vmatpush2.xpose.msra.mxu0 0.0
    %2173 = vmatprep.subr.mxu0 0.0
    %2174 = vmatpush2.xpose.msra.mxu0 0.0
    %2175 = vmatprep.subr.mxu0 0.0
    %2176 = vmatpush2.xpose.msra.mxu0 0.0
    %2177 = vmatprep.subr.mxu0 0.0
    %2178 = vmatpush2.xpose.msra.mxu0 0.0
    %2179 = vmatprep.subr.mxu0 0.0
    %2180 = vmatpush2.xpose.msra.mxu0 0.0
    %2181 = vmatprep.subr.mxu0 0.0
    %2182 = vmatpush2.xpose.msra.mxu0 0.0
    %2183 = vmatprep.subr.mxu0 0.0
    %2184 = vmatpush2.xpose.msra.mxu0 0.0
    %2185 = vmatprep.subr.mxu0 0.0
    %2186 = vmatpush2.xpose.msra.mxu0 0.0
    %2187 = vmatprep.subr.mxu0 0.0
    %2188 = vmatpush2.xpose.msra.mxu0 0.0
    %2189 = vmatprep.subr.mxu0 0.0
    %2190 = vmatpush2.xpose.msra.mxu0 0.0
    %2191 = vmatprep.subr.mxu0 0.0
    %2192 = vmatpush2.xpose.msra.mxu0 0.0
    %2193 = vmatprep.subr.mxu0 0.0
    %2194 = vmatpush2.xpose.msra.mxu0 0.0
    %2195 = vmatprep.subr.mxu0 0.0
    %2196 = vmatpush2.xpose.msra.mxu0 0.0
    %2197 = vmatprep.mubr.f32.mxu0 0.0
    %2198 = vmatmul.mubr.f32.gmra.mxu0 %v2129
    %v2199 = vpop.f32.mrf.mxu0
    %v2200 = vadd.f32 0.0, %v2199
    %v2201 = vpop.f32.mrf.mxu0
    %2202 = vdwg.mxu0
    %v2203 = vsel %vm176, %v1809, 0
    %v2205 = vsel %vm176, %v1823, 0
    %2207 = vmatprep.subr.mxu0 0.0
    %2208 = vmatpush1.xpose.msra.mxu0 0.0
    %2209 = vmatprep.subr.mxu0 0.0
    %2210 = vmatpush1.xpose.msra.mxu0 0.0
    %2211 = vmatprep.subr.mxu0 0.0
    %2212 = vmatpush1.xpose.msra.mxu0 0.0
    %2213 = vmatprep.subr.mxu0 0.0
    %2214 = vmatpush1.xpose.msra.mxu0 0.0
    %2215 = vmatprep.subr.mxu0 0.0
    %2216 = vmatpush1.xpose.msra.mxu0 0.0
    %2217 = vmatprep.subr.mxu0 0.0
    %2218 = vmatpush1.xpose.msra.mxu0 0.0
    %2219 = vmatprep.subr.mxu0 0.0
    %2220 = vmatpush1.xpose.msra.mxu0 0.0
    %2221 = vmatprep.subr.mxu0 0.0
    %2222 = vmatpush1.xpose.msra.mxu0 0.0
    %2223 = vmatprep.subr.mxu0 0.0
    %2224 = vmatpush1.xpose.msra.mxu0 0.0
    %2225 = vmatprep.subr.mxu0 0.0
    %2226 = vmatpush1.xpose.msra.mxu0 0.0
    %2227 = vmatprep.subr.mxu0 0.0
    %2228 = vmatpush1.xpose.msra.mxu0 0.0
    %2229 = vmatprep.subr.mxu0 0.0
    %2230 = vmatpush1.xpose.msra.mxu0 0.0
    %2231 = vmatprep.subr.mxu0 0.0
    %2232 = vmatpush1.xpose.msra.mxu0 0.0
    %2233 = vmatprep.subr.mxu0 0.0
    %2234 = vmatpush1.xpose.msra.mxu0 0.0
    %2235 = vmatprep.subr.mxu0 0.0
    %2236 = vmatpush1.xpose.msra.mxu0 0.0
    %2237 = vmatprep.subr.mxu0 0.0
    %2238 = vmatpush1.xpose.msra.mxu0 %v2205
    %2239 = vmatprep.subr.mxu0 0.0
    %2240 = vmatpush2.xpose.msra.mxu0 0.0
    %2241 = vmatprep.subr.mxu0 0.0
    %2242 = vmatpush2.xpose.msra.mxu0 0.0
    %2243 = vmatprep.subr.mxu0 0.0
    %2244 = vmatpush2.xpose.msra.mxu0 0.0
    %2245 = vmatprep.subr.mxu0 0.0
    %2246 = vmatpush2.xpose.msra.mxu0 0.0
    %2247 = vmatprep.subr.mxu0 0.0
    %2248 = vmatpush2.xpose.msra.mxu0 0.0
    %2249 = vmatprep.subr.mxu0 0.0
    %2250 = vmatpush2.xpose.msra.mxu0 0.0
    %2251 = vmatprep.subr.mxu0 0.0
    %2252 = vmatpush2.xpose.msra.mxu0 0.0
    %2253 = vmatprep.subr.mxu0 0.0
    %2254 = vmatpush2.xpose.msra.mxu0 0.0
    %2255 = vmatprep.subr.mxu0 0.0
    %2256 = vmatpush2.xpose.msra.mxu0 0.0
    %2257 = vmatprep.subr.mxu0 0.0
    %2258 = vmatpush2.xpose.msra.mxu0 0.0
    %2259 = vmatprep.subr.mxu0 0.0
    %2260 = vmatpush2.xpose.msra.mxu0 0.0
    %2261 = vmatprep.subr.mxu0 0.0
    %2262 = vmatpush2.xpose.msra.mxu0 0.0
    %2263 = vmatprep.subr.mxu0 0.0
    %2264 = vmatpush2.xpose.msra.mxu0 0.0
    %2265 = vmatprep.subr.mxu0 0.0
    %2266 = vmatpush2.xpose.msra.mxu0 0.0
    %2267 = vmatprep.subr.mxu0 0.0
    %2268 = vmatpush2.xpose.msra.mxu0 0.0
    %2269 = vmatprep.subr.mxu0 0.0
    %2270 = vmatpush2.xpose.msra.mxu0 0.0
    %2271 = vmatprep.mubr.f32.mxu0 0.0
    %2272 = vmatmul.mubr.f32.gmra.mxu0 %v2203
    %v2273 = vpop.f32.mrf.mxu0
    %v2274 = vadd.f32 0.0, %v2273
    %v2275 = vpop.f32.mrf.mxu0
    %2276 = vdwg.mxu0
    %v2277 = vsel %vm176, %v1811, 0
    %v2279 = vsel %vm176, %v1825, 0
    %2281 = vmatprep.subr.mxu0 0.0
    %2282 = vmatpush1.xpose.msra.mxu0 0.0
    %2283 = vmatprep.subr.mxu0 0.0
    %2284 = vmatpush1.xpose.msra.mxu0 0.0
    %2285 = vmatprep.subr.mxu0 0.0
    %2286 = vmatpush1.xpose.msra.mxu0 0.0
    %2287 = vmatprep.subr.mxu0 0.0
    %2288 = vmatpush1.xpose.msra.mxu0 0.0
    %2289 = vmatprep.subr.mxu0 0.0
    %2290 = vmatpush1.xpose.msra.mxu0 0.0
    %2291 = vmatprep.subr.mxu0 0.0
    %2292 = vmatpush1.xpose.msra.mxu0 0.0
    %2293 = vmatprep.subr.mxu0 0.0
    %2294 = vmatpush1.xpose.msra.mxu0 0.0
    %2295 = vmatprep.subr.mxu0 0.0
    %2296 = vmatpush1.xpose.msra.mxu0 0.0
    %2297 = vmatprep.subr.mxu0 0.0
    %2298 = vmatpush1.xpose.msra.mxu0 0.0
    %2299 = vmatprep.subr.mxu0 0.0
    %2300 = vmatpush1.xpose.msra.mxu0 0.0
    %2301 = vmatprep.subr.mxu0 0.0
    %2302 = vmatpush1.xpose.msra.mxu0 0.0
    %2303 = vmatprep.subr.mxu0 0.0
    %2304 = vmatpush1.xpose.msra.mxu0 0.0
    %2305 = vmatprep.subr.mxu0 0.0
    %2306 = vmatpush1.xpose.msra.mxu0 0.0
    %2307 = vmatprep.subr.mxu0 0.0
    %2308 = vmatpush1.xpose.msra.mxu0 0.0
    %2309 = vmatprep.subr.mxu0 0.0
    %2310 = vmatpush1.xpose.msra.mxu0 0.0
    %2311 = vmatprep.subr.mxu0 0.0
    %2312 = vmatpush1.xpose.msra.mxu0 %v2279
    %2313 = vmatprep.subr.mxu0 0.0
    %2314 = vmatpush2.xpose.msra.mxu0 0.0
    %2315 = vmatprep.subr.mxu0 0.0
    %2316 = vmatpush2.xpose.msra.mxu0 0.0
    %2317 = vmatprep.subr.mxu0 0.0
    %2318 = vmatpush2.xpose.msra.mxu0 0.0
    %2319 = vmatprep.subr.mxu0 0.0
    %2320 = vmatpush2.xpose.msra.mxu0 0.0
    %2321 = vmatprep.subr.mxu0 0.0
    %2322 = vmatpush2.xpose.msra.mxu0 0.0
    %2323 = vmatprep.subr.mxu0 0.0
    %2324 = vmatpush2.xpose.msra.mxu0 0.0
    %2325 = vmatprep.subr.mxu0 0.0
    %2326 = vmatpush2.xpose.msra.mxu0 0.0
    %2327 = vmatprep.subr.mxu0 0.0
    %2328 = vmatpush2.xpose.msra.mxu0 0.0
    %2329 = vmatprep.subr.mxu0 0.0
    %2330 = vmatpush2.xpose.msra.mxu0 0.0
    %2331 = vmatprep.subr.mxu0 0.0
    %2332 = vmatpush2.xpose.msra.mxu0 0.0
    %2333 = vmatprep.subr.mxu0 0.0
    %2334 = vmatpush2.xpose.msra.mxu0 0.0
    %2335 = vmatprep.subr.mxu0 0.0
    %2336 = vmatpush2.xpose.msra.mxu0 0.0
    %2337 = vmatprep.subr.mxu0 0.0
    %2338 = vmatpush2.xpose.msra.mxu0 0.0
    %2339 = vmatprep.subr.mxu0 0.0
    %2340 = vmatpush2.xpose.msra.mxu0 0.0
    %2341 = vmatprep.subr.mxu0 0.0
    %2342 = vmatpush2.xpose.msra.mxu0 0.0
    %2343 = vmatprep.subr.mxu0 0.0
    %2344 = vmatpush2.xpose.msra.mxu0 0.0
    %2345 = vmatprep.mubr.f32.mxu0 0.0
    %2346 = vmatmul.mubr.f32.gmra.mxu0 %v2277
    %v2347 = vpop.f32.mrf.mxu0
    %v2348 = vadd.f32 0.0, %v2347
    %v2349 = vpop.f32.mrf.mxu0
    %2350 = vdwg.mxu0
    %v2351 = vsel %vm176, %v1813, 0
    %v2353 = vsel %vm176, %v1827, 0
    %2355 = vmatprep.subr.mxu0 0.0
    %2356 = vmatpush1.xpose.msra.mxu0 0.0
    %2357 = vmatprep.subr.mxu0 0.0
    %2358 = vmatpush1.xpose.msra.mxu0 0.0
    %2359 = vmatprep.subr.mxu0 0.0
    %2360 = vmatpush1.xpose.msra.mxu0 0.0
    %2361 = vmatprep.subr.mxu0 0.0
    %2362 = vmatpush1.xpose.msra.mxu0 0.0
    %2363 = vmatprep.subr.mxu0 0.0
    %2364 = vmatpush1.xpose.msra.mxu0 0.0
    %2365 = vmatprep.subr.mxu0 0.0
    %2366 = vmatpush1.xpose.msra.mxu0 0.0
    %2367 = vmatprep.subr.mxu0 0.0
    %2368 = vmatpush1.xpose.msra.mxu0 0.0
    %2369 = vmatprep.subr.mxu0 0.0
    %2370 = vmatpush1.xpose.msra.mxu0 0.0
    %2371 = vmatprep.subr.mxu0 0.0
    %2372 = vmatpush1.xpose.msra.mxu0 0.0
    %2373 = vmatprep.subr.mxu0 0.0
    %2374 = vmatpush1.xpose.msra.mxu0 0.0
    %2375 = vmatprep.subr.mxu0 0.0
    %2376 = vmatpush1.xpose.msra.mxu0 0.0
    %2377 = vmatprep.subr.mxu0 0.0
    %2378 = vmatpush1.xpose.msra.mxu0 0.0
    %2379 = vmatprep.subr.mxu0 0.0
    %2380 = vmatpush1.xpose.msra.mxu0 0.0
    %2381 = vmatprep.subr.mxu0 0.0
    %2382 = vmatpush1.xpose.msra.mxu0 0.0
    %2383 = vmatprep.subr.mxu0 0.0
    %2384 = vmatpush1.xpose.msra.mxu0 0.0
    %2385 = vmatprep.subr.mxu0 0.0
    %2386 = vmatpush1.xpose.msra.mxu0 %v2353
    %2387 = vmatprep.subr.mxu0 0.0
    %2388 = vmatpush2.xpose.msra.mxu0 0.0
    %2389 = vmatprep.subr.mxu0 0.0
    %2390 = vmatpush2.xpose.msra.mxu0 0.0
    %2391 = vmatprep.subr.mxu0 0.0
    %2392 = vmatpush2.xpose.msra.mxu0 0.0
    %2393 = vmatprep.subr.mxu0 0.0
    %2394 = vmatpush2.xpose.msra.mxu0 0.0
    %2395 = vmatprep.subr.mxu0 0.0
    %2396 = vmatpush2.xpose.msra.mxu0 0.0
    %2397 = vmatprep.subr.mxu0 0.0
    %2398 = vmatpush2.xpose.msra.mxu0 0.0
    %2399 = vmatprep.subr.mxu0 0.0
    %2400 = vmatpush2.xpose.msra.mxu0 0.0
    %2401 = vmatprep.subr.mxu0 0.0
    %2402 = vmatpush2.xpose.msra.mxu0 0.0
    %2403 = vmatprep.subr.mxu0 0.0
    %2404 = vmatpush2.xpose.msra.mxu0 0.0
    %2405 = vmatprep.subr.mxu0 0.0
    %2406 = vmatpush2.xpose.msra.mxu0 0.0
    %2407 = vmatprep.subr.mxu0 0.0
    %2408 = vmatpush2.xpose.msra.mxu0 0.0
    %2409 = vmatprep.subr.mxu0 0.0
    %2410 = vmatpush2.xpose.msra.mxu0 0.0
    %2411 = vmatprep.subr.mxu0 0.0
    %2412 = vmatpush2.xpose.msra.mxu0 0.0
    %2413 = vmatprep.subr.mxu0 0.0
    %2414 = vmatpush2.xpose.msra.mxu0 0.0
    %2415 = vmatprep.subr.mxu0 0.0
    %2416 = vmatpush2.xpose.msra.mxu0 0.0
    %2417 = vmatprep.subr.mxu0 0.0
    %2418 = vmatpush2.xpose.msra.mxu0 0.0
    %2419 = vmatprep.mubr.f32.mxu0 0.0
    %2420 = vmatmul.mubr.f32.gmra.mxu0 %v2351
    %v2421 = vpop.f32.mrf.mxu0
    %v2422 = vadd.f32 0.0, %v2421
    %v2423 = vpop.f32.mrf.mxu0
    %2424 = vdwg.mxu0
    %v2425 = vmul.f32 %v1904, 1.442695
    %v2426 = vpow.pop %v2425
    %v2427 = vmul.f32 %v1978, 1.442695
    %v2428 = vpow.pop %v2427
    %v2429 = vmul.f32 %v2052, 1.442695
    %v2430 = vpow.pop %v2429
    %v2431 = vmul.f32 %v2126, 1.442695
    %v2432 = vpow.pop %v2431
    %v2433 = vmul.f32 %v2200, 1.442695
    %v2434 = vpow.pop %v2433
    %v2435 = vmul.f32 %v2274, 1.442695
    %v2436 = vpow.pop %v2435
    %v2437 = vmul.f32 %v2348, 1.442695
    %v2438 = vpow.pop %v2437
    %v2439 = vmul.f32 %v2422, 1.442695
    %v2440 = vpow.pop %v2439
    %v2441 = vsel %vm176, %v2426, 0.0
    %2442 = vadd.xlane.f32.xlu0 %v2441
    %v2443 = vpop.xlane.xlu0 %2442
    %v2444 = vsel %vm176, %v2428, 0.0
    %2445 = vadd.xlane.f32.xlu0 %v2444
    %v2446 = vpop.xlane.xlu0 %2445
    %v2447 = vsel %vm176, %v2430, 0.0
    %2448 = vadd.xlane.f32.xlu0 %v2447
    %v2449 = vpop.xlane.xlu0 %2448
    %v2450 = vsel %vm176, %v2432, 0.0
    %2451 = vadd.xlane.f32.xlu0 %v2450
    %v2452 = vpop.xlane.xlu0 %2451
    %v2453 = vsel %vm176, %v2434, 0.0
    %2454 = vadd.xlane.f32.xlu0 %v2453
    %v2455 = vpop.xlane.xlu0 %2454
    %v2456 = vsel %vm176, %v2436, 0.0
    %2457 = vadd.xlane.f32.xlu0 %v2456
    %v2458 = vpop.xlane.xlu0 %2457
    %v2459 = vsel %vm176, %v2438, 0.0
    %2460 = vadd.xlane.f32.xlu0 %v2459
    %v2461 = vpop.xlane.xlu0 %2460
    %v2462 = vsel %vm176, %v2440, 0.0
    %2463 = vadd.xlane.f32.xlu0 %v2462
    %v2464 = vpop.xlane.xlu0 %2463
    %v2465 = vrcp.pop %v2443
    %v2466 = vmul.f32 %v2426, %v2465
    %v2467 = vrcp.pop %v2446
    %v2468 = vmul.f32 %v2428, %v2467
    %v2469 = vrcp.pop %v2449
    %v2470 = vmul.f32 %v2430, %v2469
    %v2471 = vrcp.pop %v2452
    %v2472 = vmul.f32 %v2432, %v2471
    %v2473 = vrcp.pop %v2455
    %v2474 = vmul.f32 %v2434, %v2473
    %v2475 = vrcp.pop %v2458
    %v2476 = vmul.f32 %v2436, %v2475
    %v2477 = vrcp.pop %v2461
    %v2478 = vmul.f32 %v2438, %v2477
    %v2479 = vrcp.pop %v2464
    %v2480 = vmul.f32 %v2440, %v2479
    %2481 = vrot.lane.b32.xlu0 %v1792, 96
    %v2482 = vpop.permute.xlu0 %2481
    %v2485 = vsel %vm176, %v2466, 0
    %2487 = vmatprep.subr.mxu0 0.0
    %2488 = vmatpush1.msra.mxu0 0.0
    %2489 = vmatprep.subr.mxu0 0.0
    %2490 = vmatpush1.msra.mxu0 0.0
    %2491 = vmatprep.subr.mxu0 0.0
    %2492 = vmatpush1.msra.mxu0 0.0
    %2493 = vmatprep.subr.mxu0 0.0
    %2494 = vmatpush1.msra.mxu0 0.0
    %2495 = vmatprep.subr.mxu0 0.0
    %2496 = vmatpush1.msra.mxu0 0.0
    %2497 = vmatprep.subr.mxu0 0.0
    %2498 = vmatpush1.msra.mxu0 0.0
    %2499 = vmatprep.subr.mxu0 0.0
    %2500 = vmatpush1.msra.mxu0 0.0
    %2501 = vmatprep.subr.mxu0 0.0
    %2502 = vmatpush1.msra.mxu0 0.0
    %2503 = vmatprep.subr.mxu0 0.0
    %2504 = vmatpush1.msra.mxu0 0.0
    %2505 = vmatprep.subr.mxu0 0.0
    %2506 = vmatpush1.msra.mxu0 0.0
    %2507 = vmatprep.subr.mxu0 0.0
    %2508 = vmatpush1.msra.mxu0 0.0
    %2509 = vmatprep.subr.mxu0 0.0
    %2510 = vmatpush1.msra.mxu0 0.0
    %2511 = vmatprep.subr.mxu0 0.0
    %2512 = vmatpush1.msra.mxu0 0.0
    %2513 = vmatprep.subr.mxu0 0.0
    %2514 = vmatpush1.msra.mxu0 0.0
    %2515 = vmatprep.subr.mxu0 0.0
    %2516 = vmatpush1.msra.mxu0 0.0
    %2517 = vmatprep.subr.mxu0 0.0
    %2518 = vmatpush1.msra.mxu0 %v2482
    %2519 = vmatprep.subr.mxu0 0.0
    %2520 = vmatpush2.msra.mxu0 0.0
    %2521 = vmatprep.subr.mxu0 0.0
    %2522 = vmatpush2.msra.mxu0 0.0
    %2523 = vmatprep.subr.mxu0 0.0
    %2524 = vmatpush2.msra.mxu0 0.0
    %2525 = vmatprep.subr.mxu0 0.0
    %2526 = vmatpush2.msra.mxu0 0.0
    %2527 = vmatprep.subr.mxu0 0.0
    %2528 = vmatpush2.msra.mxu0 0.0
    %2529 = vmatprep.subr.mxu0 0.0
    %2530 = vmatpush2.msra.mxu0 0.0
    %2531 = vmatprep.subr.mxu0 0.0
    %2532 = vmatpush2.msra.mxu0 0.0
    %2533 = vmatprep.subr.mxu0 0.0
    %2534 = vmatpush2.msra.mxu0 0.0
    %2535 = vmatprep.subr.mxu0 0.0
    %2536 = vmatpush2.msra.mxu0 0.0
    %2537 = vmatprep.subr.mxu0 0.0
    %2538 = vmatpush2.msra.mxu0 0.0
    %2539 = vmatprep.subr.mxu0 0.0
    %2540 = vmatpush2.msra.mxu0 0.0
    %2541 = vmatprep.subr.mxu0 0.0
    %2542 = vmatpush2.msra.mxu0 0.0
    %2543 = vmatprep.subr.mxu0 0.0
    %2544 = vmatpush2.msra.mxu0 0.0
    %2545 = vmatprep.subr.mxu0 0.0
    %2546 = vmatpush2.msra.mxu0 0.0
    %2547 = vmatprep.subr.mxu0 0.0
    %2548 = vmatpush2.msra.mxu0 0.0
    %2549 = vmatprep.subr.mxu0 0.0
    %2550 = vmatpush2.msra.mxu0 0.0
    %2551 = vmatprep.mubr.f32.mxu0 0.0
    %2552 = vmatmul.mubr.f32.gmra.mxu0 %v2485
    %v2553 = vpop.f32.mrf.mxu0
    %v2554 = vadd.f32 0.0, %v2553
    %v2555 = vpop.f32.mrf.mxu0
    %2556 = vdwg.mxu0
    %2557 = vrot.lane.b32.xlu0 %v1797, 96
    %v2558 = vpop.permute.xlu0 %2557
    %v2561 = vsel %vm176, %v2468, 0
    %2563 = vmatprep.subr.mxu0 0.0
    %2564 = vmatpush1.msra.mxu0 0.0
    %2565 = vmatprep.subr.mxu0 0.0
    %2566 = vmatpush1.msra.mxu0 0.0
    %2567 = vmatprep.subr.mxu0 0.0
    %2568 = vmatpush1.msra.mxu0 0.0
    %2569 = vmatprep.subr.mxu0 0.0
    %2570 = vmatpush1.msra.mxu0 0.0
    %2571 = vmatprep.subr.mxu0 0.0
    %2572 = vmatpush1.msra.mxu0 0.0
    %2573 = vmatprep.subr.mxu0 0.0
    %2574 = vmatpush1.msra.mxu0 0.0
    %2575 = vmatprep.subr.mxu0 0.0
    %2576 = vmatpush1.msra.mxu0 0.0
    %2577 = vmatprep.subr.mxu0 0.0
    %2578 = vmatpush1.msra.mxu0 0.0
    %2579 = vmatprep.subr.mxu0 0.0
    %2580 = vmatpush1.msra.mxu0 0.0
    %2581 = vmatprep.subr.mxu0 0.0
    %2582 = vmatpush1.msra.mxu0 0.0
    %2583 = vmatprep.subr.mxu0 0.0
    %2584 = vmatpush1.msra.mxu0 0.0
    %2585 = vmatprep.subr.mxu0 0.0
    %2586 = vmatpush1.msra.mxu0 0.0
    %2587 = vmatprep.subr.mxu0 0.0
    %2588 = vmatpush1.msra.mxu0 0.0
    %2589 = vmatprep.subr.mxu0 0.0
    %2590 = vmatpush1.msra.mxu0 0.0
    %2591 = vmatprep.subr.mxu0 0.0
    %2592 = vmatpush1.msra.mxu0 0.0
    %2593 = vmatprep.subr.mxu0 0.0
    %2594 = vmatpush1.msra.mxu0 %v2558
    %2595 = vmatprep.subr.mxu0 0.0
    %2596 = vmatpush2.msra.mxu0 0.0
    %2597 = vmatprep.subr.mxu0 0.0
    %2598 = vmatpush2.msra.mxu0 0.0
    %2599 = vmatprep.subr.mxu0 0.0
    %2600 = vmatpush2.msra.mxu0 0.0
    %2601 = vmatprep.subr.mxu0 0.0
    %2602 = vmatpush2.msra.mxu0 0.0
    %2603 = vmatprep.subr.mxu0 0.0
    %2604 = vmatpush2.msra.mxu0 0.0
    %2605 = vmatprep.subr.mxu0 0.0
    %2606 = vmatpush2.msra.mxu0 0.0
    %2607 = vmatprep.subr.mxu0 0.0
    %2608 = vmatpush2.msra.mxu0 0.0
    %2609 = vmatprep.subr.mxu0 0.0
    %2610 = vmatpush2.msra.mxu0 0.0
    %2611 = vmatprep.subr.mxu0 0.0
    %2612 = vmatpush2.msra.mxu0 0.0
    %2613 = vmatprep.subr.mxu0 0.0
    %2614 = vmatpush2.msra.mxu0 0.0
    %2615 = vmatprep.subr.mxu0 0.0
    %2616 = vmatpush2.msra.mxu0 0.0
    %2617 = vmatprep.subr.mxu0 0.0
    %2618 = vmatpush2.msra.mxu0 0.0
    %2619 = vmatprep.subr.mxu0 0.0
    %2620 = vmatpush2.msra.mxu0 0.0
    %2621 = vmatprep.subr.mxu0 0.0
    %2622 = vmatpush2.msra.mxu0 0.0
    %2623 = vmatprep.subr.mxu0 0.0
    %2624 = vmatpush2.msra.mxu0 0.0
    %2625 = vmatprep.subr.mxu0 0.0
    %2626 = vmatpush2.msra.mxu0 0.0
    %2627 = vmatprep.mubr.f32.mxu0 0.0
    %2628 = vmatmul.mubr.f32.gmra.mxu0 %v2561
    %v2629 = vpop.f32.mrf.mxu0
    %v2630 = vadd.f32 0.0, %v2629
    %v2631 = vpop.f32.mrf.mxu0
    %2632 = vdwg.mxu0
    %2633 = vrot.lane.b32.xlu0 %v1817, 96
    %v2634 = vpop.permute.xlu0 %2633
    %v2637 = vsel %vm176, %v2470, 0
    %2639 = vmatprep.subr.mxu0 0.0
    %2640 = vmatpush1.msra.mxu0 0.0
    %2641 = vmatprep.subr.mxu0 0.0
    %2642 = vmatpush1.msra.mxu0 0.0
    %2643 = vmatprep.subr.mxu0 0.0
    %2644 = vmatpush1.msra.mxu0 0.0
    %2645 = vmatprep.subr.mxu0 0.0
    %2646 = vmatpush1.msra.mxu0 0.0
    %2647 = vmatprep.subr.mxu0 0.0
    %2648 = vmatpush1.msra.mxu0 0.0
    %2649 = vmatprep.subr.mxu0 0.0
    %2650 = vmatpush1.msra.mxu0 0.0
    %2651 = vmatprep.subr.mxu0 0.0
    %2652 = vmatpush1.msra.mxu0 0.0
    %2653 = vmatprep.subr.mxu0 0.0
    %2654 = vmatpush1.msra.mxu0 0.0
    %2655 = vmatprep.subr.mxu0 0.0
    %2656 = vmatpush1.msra.mxu0 0.0
    %2657 = vmatprep.subr.mxu0 0.0
    %2658 = vmatpush1.msra.mxu0 0.0
    %2659 = vmatprep.subr.mxu0 0.0
    %2660 = vmatpush1.msra.mxu0 0.0
    %2661 = vmatprep.subr.mxu0 0.0
    %2662 = vmatpush1.msra.mxu0 0.0
    %2663 = vmatprep.subr.mxu0 0.0
    %2664 = vmatpush1.msra.mxu0 0.0
    %2665 = vmatprep.subr.mxu0 0.0
    %2666 = vmatpush1.msra.mxu0 0.0
    %2667 = vmatprep.subr.mxu0 0.0
    %2668 = vmatpush1.msra.mxu0 0.0
    %2669 = vmatprep.subr.mxu0 0.0
    %2670 = vmatpush1.msra.mxu0 %v2634
    %2671 = vmatprep.subr.mxu0 0.0
    %2672 = vmatpush2.msra.mxu0 0.0
    %2673 = vmatprep.subr.mxu0 0.0
    %2674 = vmatpush2.msra.mxu0 0.0
    %2675 = vmatprep.subr.mxu0 0.0
    %2676 = vmatpush2.msra.mxu0 0.0
    %2677 = vmatprep.subr.mxu0 0.0
    %2678 = vmatpush2.msra.mxu0 0.0
    %2679 = vmatprep.subr.mxu0 0.0
    %2680 = vmatpush2.msra.mxu0 0.0
    %2681 = vmatprep.subr.mxu0 0.0
    %2682 = vmatpush2.msra.mxu0 0.0
    %2683 = vmatprep.subr.mxu0 0.0
    %2684 = vmatpush2.msra.mxu0 0.0
    %2685 = vmatprep.subr.mxu0 0.0
    %2686 = vmatpush2.msra.mxu0 0.0
    %2687 = vmatprep.subr.mxu0 0.0
    %2688 = vmatpush2.msra.mxu0 0.0
    %2689 = vmatprep.subr.mxu0 0.0
    %2690 = vmatpush2.msra.mxu0 0.0
    %2691 = vmatprep.subr.mxu0 0.0
    %2692 = vmatpush2.msra.mxu0 0.0
    %2693 = vmatprep.subr.mxu0 0.0
    %2694 = vmatpush2.msra.mxu0 0.0
    %2695 = vmatprep.subr.mxu0 0.0
    %2696 = vmatpush2.msra.mxu0 0.0
    %2697 = vmatprep.subr.mxu0 0.0
    %2698 = vmatpush2.msra.mxu0 0.0
    %2699 = vmatprep.subr.mxu0 0.0
    %2700 = vmatpush2.msra.mxu0 0.0
    %2701 = vmatprep.subr.mxu0 0.0
    %2702 = vmatpush2.msra.mxu0 0.0
    %2703 = vmatprep.mubr.f32.mxu0 0.0
    %2704 = vmatmul.mubr.f32.gmra.mxu0 %v2637
    %v2705 = vpop.f32.mrf.mxu0
    %v2706 = vadd.f32 0.0, %v2705
    %v2707 = vpop.f32.mrf.mxu0
    %2708 = vdwg.mxu0
    %2709 = vrot.lane.b32.xlu0 %v1819, 96
    %v2710 = vpop.permute.xlu0 %2709
    %v2713 = vsel %vm176, %v2472, 0
    %2715 = vmatprep.subr.mxu0 0.0
    %2716 = vmatpush1.msra.mxu0 0.0
    %2717 = vmatprep.subr.mxu0 0.0
    %2718 = vmatpush1.msra.mxu0 0.0
    %2719 = vmatprep.subr.mxu0 0.0
    %2720 = vmatpush1.msra.mxu0 0.0
    %2721 = vmatprep.subr.mxu0 0.0
    %2722 = vmatpush1.msra.mxu0 0.0
    %2723 = vmatprep.subr.mxu0 0.0
    %2724 = vmatpush1.msra.mxu0 0.0
    %2725 = vmatprep.subr.mxu0 0.0
    %2726 = vmatpush1.msra.mxu0 0.0
    %2727 = vmatprep.subr.mxu0 0.0
    %2728 = vmatpush1.msra.mxu0 0.0
    %2729 = vmatprep.subr.mxu0 0.0
    %2730 = vmatpush1.msra.mxu0 0.0
    %2731 = vmatprep.subr.mxu0 0.0
    %2732 = vmatpush1.msra.mxu0 0.0
    %2733 = vmatprep.subr.mxu0 0.0
    %2734 = vmatpush1.msra.mxu0 0.0
    %2735 = vmatprep.subr.mxu0 0.0
    %2736 = vmatpush1.msra.mxu0 0.0
    %2737 = vmatprep.subr.mxu0 0.0
    %2738 = vmatpush1.msra.mxu0 0.0
    %2739 = vmatprep.subr.mxu0 0.0
    %2740 = vmatpush1.msra.mxu0 0.0
    %2741 = vmatprep.subr.mxu0 0.0
    %2742 = vmatpush1.msra.mxu0 0.0
    %2743 = vmatprep.subr.mxu0 0.0
    %2744 = vmatpush1.msra.mxu0 0.0
    %2745 = vmatprep.subr.mxu0 0.0
    %2746 = vmatpush1.msra.mxu0 %v2710
    %2747 = vmatprep.subr.mxu0 0.0
    %2748 = vmatpush2.msra.mxu0 0.0
    %2749 = vmatprep.subr.mxu0 0.0
    %2750 = vmatpush2.msra.mxu0 0.0
    %2751 = vmatprep.subr.mxu0 0.0
    %2752 = vmatpush2.msra.mxu0 0.0
    %2753 = vmatprep.subr.mxu0 0.0
    %2754 = vmatpush2.msra.mxu0 0.0
    %2755 = vmatprep.subr.mxu0 0.0
    %2756 = vmatpush2.msra.mxu0 0.0
    %2757 = vmatprep.subr.mxu0 0.0
    %2758 = vmatpush2.msra.mxu0 0.0
    %2759 = vmatprep.subr.mxu0 0.0
    %2760 = vmatpush2.msra.mxu0 0.0
    %2761 = vmatprep.subr.mxu0 0.0
    %2762 = vmatpush2.msra.mxu0 0.0
    %2763 = vmatprep.subr.mxu0 0.0
    %2764 = vmatpush2.msra.mxu0 0.0
    %2765 = vmatprep.subr.mxu0 0.0
    %2766 = vmatpush2.msra.mxu0 0.0
    %2767 = vmatprep.subr.mxu0 0.0
    %2768 = vmatpush2.msra.mxu0 0.0
    %2769 = vmatprep.subr.mxu0 0.0
    %2770 = vmatpush2.msra.mxu0 0.0
    %2771 = vmatprep.subr.mxu0 0.0
    %2772 = vmatpush2.msra.mxu0 0.0
    %2773 = vmatprep.subr.mxu0 0.0
    %2774 = vmatpush2.msra.mxu0 0.0
    %2775 = vmatprep.subr.mxu0 0.0
    %2776 = vmatpush2.msra.mxu0 0.0
    %2777 = vmatprep.subr.mxu0 0.0
    %2778 = vmatpush2.msra.mxu0 0.0
    %2779 = vmatprep.mubr.f32.mxu0 0.0
    %2780 = vmatmul.mubr.f32.gmra.mxu0 %v2713
    %v2781 = vpop.f32.mrf.mxu0
    %v2782 = vadd.f32 0.0, %v2781
    %v2783 = vpop.f32.mrf.mxu0
    %2784 = vdwg.mxu0
    %2785 = vrot.lane.b32.xlu0 %v1821, 96
    %v2786 = vpop.permute.xlu0 %2785
    %v2789 = vsel %vm176, %v2474, 0
    %2791 = vmatprep.subr.mxu0 0.0
    %2792 = vmatpush1.msra.mxu0 0.0
    %2793 = vmatprep.subr.mxu0 0.0
    %2794 = vmatpush1.msra.mxu0 0.0
    %2795 = vmatprep.subr.mxu0 0.0
    %2796 = vmatpush1.msra.mxu0 0.0
    %2797 = vmatprep.subr.mxu0 0.0
    %2798 = vmatpush1.msra.mxu0 0.0
    %2799 = vmatprep.subr.mxu0 0.0
    %2800 = vmatpush1.msra.mxu0 0.0
    %2801 = vmatprep.subr.mxu0 0.0
    %2802 = vmatpush1.msra.mxu0 0.0
    %2803 = vmatprep.subr.mxu0 0.0
    %2804 = vmatpush1.msra.mxu0 0.0
    %2805 = vmatprep.subr.mxu0 0.0
    %2806 = vmatpush1.msra.mxu0 0.0
    %2807 = vmatprep.subr.mxu0 0.0
    %2808 = vmatpush1.msra.mxu0 0.0
    %2809 = vmatprep.subr.mxu0 0.0
    %2810 = vmatpush1.msra.mxu0 0.0
    %2811 = vmatprep.subr.mxu0 0.0
    %2812 = vmatpush1.msra.mxu0 0.0
    %2813 = vmatprep.subr.mxu0 0.0
    %2814 = vmatpush1.msra.mxu0 0.0
    %2815 = vmatprep.subr.mxu0 0.0
    %2816 = vmatpush1.msra.mxu0 0.0
    %2817 = vmatprep.subr.mxu0 0.0
    %2818 = vmatpush1.msra.mxu0 0.0
    %2819 = vmatprep.subr.mxu0 0.0
    %2820 = vmatpush1.msra.mxu0 0.0
    %2821 = vmatprep.subr.mxu0 0.0
    %2822 = vmatpush1.msra.mxu0 %v2786
    %2823 = vmatprep.subr.mxu0 0.0
    %2824 = vmatpush2.msra.mxu0 0.0
    %2825 = vmatprep.subr.mxu0 0.0
    %2826 = vmatpush2.msra.mxu0 0.0
    %2827 = vmatprep.subr.mxu0 0.0
    %2828 = vmatpush2.msra.mxu0 0.0
    %2829 = vmatprep.subr.mxu0 0.0
    %2830 = vmatpush2.msra.mxu0 0.0
    %2831 = vmatprep.subr.mxu0 0.0
    %2832 = vmatpush2.msra.mxu0 0.0
    %2833 = vmatprep.subr.mxu0 0.0
    %2834 = vmatpush2.msra.mxu0 0.0
    %2835 = vmatprep.subr.mxu0 0.0
    %2836 = vmatpush2.msra.mxu0 0.0
    %2837 = vmatprep.subr.mxu0 0.0
    %2838 = vmatpush2.msra.mxu0 0.0
    %2839 = vmatprep.subr.mxu0 0.0
    %2840 = vmatpush2.msra.mxu0 0.0
    %2841 = vmatprep.subr.mxu0 0.0
    %2842 = vmatpush2.msra.mxu0 0.0
    %2843 = vmatprep.subr.mxu0 0.0
    %2844 = vmatpush2.msra.mxu0 0.0
    %2845 = vmatprep.subr.mxu0 0.0
    %2846 = vmatpush2.msra.mxu0 0.0
    %2847 = vmatprep.subr.mxu0 0.0
    %2848 = vmatpush2.msra.mxu0 0.0
    %2849 = vmatprep.subr.mxu0 0.0
    %2850 = vmatpush2.msra.mxu0 0.0
    %2851 = vmatprep.subr.mxu0 0.0
    %2852 = vmatpush2.msra.mxu0 0.0
    %2853 = vmatprep.subr.mxu0 0.0
    %2854 = vmatpush2.msra.mxu0 0.0
    %2855 = vmatprep.mubr.f32.mxu0 0.0
    %2856 = vmatmul.mubr.f32.gmra.mxu0 %v2789
    %v2857 = vpop.f32.mrf.mxu0
    %v2858 = vadd.f32 0.0, %v2857
    %v2859 = vpop.f32.mrf.mxu0
    %2860 = vdwg.mxu0
    %2861 = vrot.lane.b32.xlu0 %v1823, 96
    %v2862 = vpop.permute.xlu0 %2861
    %v2865 = vsel %vm176, %v2476, 0
    %2867 = vmatprep.subr.mxu0 0.0
    %2868 = vmatpush1.msra.mxu0 0.0
    %2869 = vmatprep.subr.mxu0 0.0
    %2870 = vmatpush1.msra.mxu0 0.0
    %2871 = vmatprep.subr.mxu0 0.0
    %2872 = vmatpush1.msra.mxu0 0.0
    %2873 = vmatprep.subr.mxu0 0.0
    %2874 = vmatpush1.msra.mxu0 0.0
    %2875 = vmatprep.subr.mxu0 0.0
    %2876 = vmatpush1.msra.mxu0 0.0
    %2877 = vmatprep.subr.mxu0 0.0
    %2878 = vmatpush1.msra.mxu0 0.0
    %2879 = vmatprep.subr.mxu0 0.0
    %2880 = vmatpush1.msra.mxu0 0.0
    %2881 = vmatprep.subr.mxu0 0.0
    %2882 = vmatpush1.msra.mxu0 0.0
    %2883 = vmatprep.subr.mxu0 0.0
    %2884 = vmatpush1.msra.mxu0 0.0
    %2885 = vmatprep.subr.mxu0 0.0
    %2886 = vmatpush1.msra.mxu0 0.0
    %2887 = vmatprep.subr.mxu0 0.0
    %2888 = vmatpush1.msra.mxu0 0.0
    %2889 = vmatprep.subr.mxu0 0.0
    %2890 = vmatpush1.msra.mxu0 0.0
    %2891 = vmatprep.subr.mxu0 0.0
    %2892 = vmatpush1.msra.mxu0 0.0
    %2893 = vmatprep.subr.mxu0 0.0
    %2894 = vmatpush1.msra.mxu0 0.0
    %2895 = vmatprep.subr.mxu0 0.0
    %2896 = vmatpush1.msra.mxu0 0.0
    %2897 = vmatprep.subr.mxu0 0.0
    %2898 = vmatpush1.msra.mxu0 %v2862
    %2899 = vmatprep.subr.mxu0 0.0
    %2900 = vmatpush2.msra.mxu0 0.0
    %2901 = vmatprep.subr.mxu0 0.0
    %2902 = vmatpush2.msra.mxu0 0.0
    %2903 = vmatprep.subr.mxu0 0.0
    %2904 = vmatpush2.msra.mxu0 0.0
    %2905 = vmatprep.subr.mxu0 0.0
    %2906 = vmatpush2.msra.mxu0 0.0
    %2907 = vmatprep.subr.mxu0 0.0
    %2908 = vmatpush2.msra.mxu0 0.0
    %2909 = vmatprep.subr.mxu0 0.0
    %2910 = vmatpush2.msra.mxu0 0.0
    %2911 = vmatprep.subr.mxu0 0.0
    %2912 = vmatpush2.msra.mxu0 0.0
    %2913 = vmatprep.subr.mxu0 0.0
    %2914 = vmatpush2.msra.mxu0 0.0
    %2915 = vmatprep.subr.mxu0 0.0
    %2916 = vmatpush2.msra.mxu0 0.0
    %2917 = vmatprep.subr.mxu0 0.0
    %2918 = vmatpush2.msra.mxu0 0.0
    %2919 = vmatprep.subr.mxu0 0.0
    %2920 = vmatpush2.msra.mxu0 0.0
    %2921 = vmatprep.subr.mxu0 0.0
    %2922 = vmatpush2.msra.mxu0 0.0
    %2923 = vmatprep.subr.mxu0 0.0
    %2924 = vmatpush2.msra.mxu0 0.0
    %2925 = vmatprep.subr.mxu0 0.0
    %2926 = vmatpush2.msra.mxu0 0.0
    %2927 = vmatprep.subr.mxu0 0.0
    %2928 = vmatpush2.msra.mxu0 0.0
    %2929 = vmatprep.subr.mxu0 0.0
    %2930 = vmatpush2.msra.mxu0 0.0
    %2931 = vmatprep.mubr.f32.mxu0 0.0
    %2932 = vmatmul.mubr.f32.gmra.mxu0 %v2865
    %v2933 = vpop.f32.mrf.mxu0
    %v2934 = vadd.f32 0.0, %v2933
    %v2935 = vpop.f32.mrf.mxu0
    %2936 = vdwg.mxu0
    %2937 = vrot.lane.b32.xlu0 %v1825, 96
    %v2938 = vpop.permute.xlu0 %2937
    %v2941 = vsel %vm176, %v2478, 0
    %2943 = vmatprep.subr.mxu0 0.0
    %2944 = vmatpush1.msra.mxu0 0.0
    %2945 = vmatprep.subr.mxu0 0.0
    %2946 = vmatpush1.msra.mxu0 0.0
    %2947 = vmatprep.subr.mxu0 0.0
    %2948 = vmatpush1.msra.mxu0 0.0
    %2949 = vmatprep.subr.mxu0 0.0
    %2950 = vmatpush1.msra.mxu0 0.0
    %2951 = vmatprep.subr.mxu0 0.0
    %2952 = vmatpush1.msra.mxu0 0.0
    %2953 = vmatprep.subr.mxu0 0.0
    %2954 = vmatpush1.msra.mxu0 0.0
    %2955 = vmatprep.subr.mxu0 0.0
    %2956 = vmatpush1.msra.mxu0 0.0
    %2957 = vmatprep.subr.mxu0 0.0
    %2958 = vmatpush1.msra.mxu0 0.0
    %2959 = vmatprep.subr.mxu0 0.0
    %2960 = vmatpush1.msra.mxu0 0.0
    %2961 = vmatprep.subr.mxu0 0.0
    %2962 = vmatpush1.msra.mxu0 0.0
    %2963 = vmatprep.subr.mxu0 0.0
    %2964 = vmatpush1.msra.mxu0 0.0
    %2965 = vmatprep.subr.mxu0 0.0
    %2966 = vmatpush1.msra.mxu0 0.0
    %2967 = vmatprep.subr.mxu0 0.0
    %2968 = vmatpush1.msra.mxu0 0.0
    %2969 = vmatprep.subr.mxu0 0.0
    %2970 = vmatpush1.msra.mxu0 0.0
    %2971 = vmatprep.subr.mxu0 0.0
    %2972 = vmatpush1.msra.mxu0 0.0
    %2973 = vmatprep.subr.mxu0 0.0
    %2974 = vmatpush1.msra.mxu0 %v2938
    %2975 = vmatprep.subr.mxu0 0.0
    %2976 = vmatpush2.msra.mxu0 0.0
    %2977 = vmatprep.subr.mxu0 0.0
    %2978 = vmatpush2.msra.mxu0 0.0
    %2979 = vmatprep.subr.mxu0 0.0
    %2980 = vmatpush2.msra.mxu0 0.0
    %2981 = vmatprep.subr.mxu0 0.0
    %2982 = vmatpush2.msra.mxu0 0.0
    %2983 = vmatprep.subr.mxu0 0.0
    %2984 = vmatpush2.msra.mxu0 0.0
    %2985 = vmatprep.subr.mxu0 0.0
    %2986 = vmatpush2.msra.mxu0 0.0
    %2987 = vmatprep.subr.mxu0 0.0
    %2988 = vmatpush2.msra.mxu0 0.0
    %2989 = vmatprep.subr.mxu0 0.0
    %2990 = vmatpush2.msra.mxu0 0.0
    %2991 = vmatprep.subr.mxu0 0.0
    %2992 = vmatpush2.msra.mxu0 0.0
    %2993 = vmatprep.subr.mxu0 0.0
    %2994 = vmatpush2.msra.mxu0 0.0
    %2995 = vmatprep.subr.mxu0 0.0
    %2996 = vmatpush2.msra.mxu0 0.0
    %2997 = vmatprep.subr.mxu0 0.0
    %2998 = vmatpush2.msra.mxu0 0.0
    %2999 = vmatprep.subr.mxu0 0.0
    %3000 = vmatpush2.msra.mxu0 0.0
    %3001 = vmatprep.subr.mxu0 0.0
    %3002 = vmatpush2.msra.mxu0 0.0
    %3003 = vmatprep.subr.mxu0 0.0
    %3004 = vmatpush2.msra.mxu0 0.0
    %3005 = vmatprep.subr.mxu0 0.0
    %3006 = vmatpush2.msra.mxu0 0.0
    %3007 = vmatprep.mubr.f32.mxu0 0.0
    %3008 = vmatmul.mubr.f32.gmra.mxu0 %v2941
    %v3009 = vpop.f32.mrf.mxu0
    %v3010 = vadd.f32 0.0, %v3009
    %v3011 = vpop.f32.mrf.mxu0
    %3012 = vdwg.mxu0
    %3013 = vrot.lane.b32.xlu0 %v1827, 96
    %v3014 = vpop.permute.xlu0 %3013
    %v3017 = vsel %vm176, %v2480, 0
    %3019 = vmatprep.subr.mxu0 0.0
    %3020 = vmatpush1.msra.mxu0 0.0
    %3021 = vmatprep.subr.mxu0 0.0
    %3022 = vmatpush1.msra.mxu0 0.0
    %3023 = vmatprep.subr.mxu0 0.0
    %3024 = vmatpush1.msra.mxu0 0.0
    %3025 = vmatprep.subr.mxu0 0.0
    %3026 = vmatpush1.msra.mxu0 0.0
    %3027 = vmatprep.subr.mxu0 0.0
    %3028 = vmatpush1.msra.mxu0 0.0
    %3029 = vmatprep.subr.mxu0 0.0
    %3030 = vmatpush1.msra.mxu0 0.0
    %3031 = vmatprep.subr.mxu0 0.0
    %3032 = vmatpush1.msra.mxu0 0.0
    %3033 = vmatprep.subr.mxu0 0.0
    %3034 = vmatpush1.msra.mxu0 0.0
    %3035 = vmatprep.subr.mxu0 0.0
    %3036 = vmatpush1.msra.mxu0 0.0
    %3037 = vmatprep.subr.mxu0 0.0
    %3038 = vmatpush1.msra.mxu0 0.0
    %3039 = vmatprep.subr.mxu0 0.0
    %3040 = vmatpush1.msra.mxu0 0.0
    %3041 = vmatprep.subr.mxu0 0.0
    %3042 = vmatpush1.msra.mxu0 0.0
    %3043 = vmatprep.subr.mxu0 0.0
    %3044 = vmatpush1.msra.mxu0 0.0
    %3045 = vmatprep.subr.mxu0 0.0
    %3046 = vmatpush1.msra.mxu0 0.0
    %3047 = vmatprep.subr.mxu0 0.0
    %3048 = vmatpush1.msra.mxu0 0.0
    %3049 = vmatprep.subr.mxu0 0.0
    %3050 = vmatpush1.msra.mxu0 %v3014
    %3051 = vmatprep.subr.mxu0 0.0
    %3052 = vmatpush2.msra.mxu0 0.0
    %3053 = vmatprep.subr.mxu0 0.0
    %3054 = vmatpush2.msra.mxu0 0.0
    %3055 = vmatprep.subr.mxu0 0.0
    %3056 = vmatpush2.msra.mxu0 0.0
    %3057 = vmatprep.subr.mxu0 0.0
    %3058 = vmatpush2.msra.mxu0 0.0
    %3059 = vmatprep.subr.mxu0 0.0
    %3060 = vmatpush2.msra.mxu0 0.0
    %3061 = vmatprep.subr.mxu0 0.0
    %3062 = vmatpush2.msra.mxu0 0.0
    %3063 = vmatprep.subr.mxu0 0.0
    %3064 = vmatpush2.msra.mxu0 0.0
    %3065 = vmatprep.subr.mxu0 0.0
    %3066 = vmatpush2.msra.mxu0 0.0
    %3067 = vmatprep.subr.mxu0 0.0
    %3068 = vmatpush2.msra.mxu0 0.0
    %3069 = vmatprep.subr.mxu0 0.0
    %3070 = vmatpush2.msra.mxu0 0.0
    %3071 = vmatprep.subr.mxu0 0.0
    %3072 = vmatpush2.msra.mxu0 0.0
    %3073 = vmatprep.subr.mxu0 0.0
    %3074 = vmatpush2.msra.mxu0 0.0
    %3075 = vmatprep.subr.mxu0 0.0
    %3076 = vmatpush2.msra.mxu0 0.0
    %3077 = vmatprep.subr.mxu0 0.0
    %3078 = vmatpush2.msra.mxu0 0.0
    %3079 = vmatprep.subr.mxu0 0.0
    %3080 = vmatpush2.msra.mxu0 0.0
    %3081 = vmatprep.subr.mxu0 0.0
    %3082 = vmatpush2.msra.mxu0 0.0
    %3083 = vmatprep.mubr.f32.mxu0 0.0
    %3084 = vmatmul.mubr.f32.gmra.mxu0 %v3017
    %v3085 = vpop.f32.mrf.mxu0
    %v3086 = vadd.f32 0.0, %v3085
    %v3087 = vpop.f32.mrf.mxu0
    %3088 = vdwg.mxu0
    %3091 = vrot.lane.b32.xlu0 %v2706, 8
    %v3092 = vpop.permute.xlu0 %3091
    %3093 = vrot.lane.b32.xlu0 %v2782, 8
    %v3094 = vpop.permute.xlu0 %3093
    %3099 = vrot.lane.b32.xlu0 %v2858, 16
    %v3100 = vpop.permute.xlu0 %3099
    %3101 = vrot.lane.b32.xlu0 %v2934, 16
    %v3102 = vpop.permute.xlu0 %3101
    %3107 = vrot.lane.b32.xlu0 %v3010, 24
    %v3108 = vpop.permute.xlu0 %3107
    %3109 = vrot.lane.b32.xlu0 %v3086, 24
    %v3110 = vpop.permute.xlu0 %3109
    %v3113 = vsel %vm176, %v2554, %v3092
    %v3114 = vsel %vm176, %v2630, %v3094
    %v3115 = vsel %vm1473, %v3113, %v3100
    %v3116 = vsel %vm1473, %v3114, %v3102
    %v3117 = vsel %vm1476, %v3115, %v3108
    %v3118 = vsel %vm1476, %v3116, %v3110
    %v3119 = vlaneseq
    %v3120 = vshrl.u32 %v3119, 7
    %v3121 = vsub.s32 0, %v3120
    %v3122 = vrot.slane %v1832, %v3121
    %v3124 = vsel %vm73, %v3117, 0
    %v3127 = vsel %vm73, %v3118, 0
    %3129 = vmatprep.subr.mxu0 0.0
    %3130 = vmatpush1.msra.mxu0 0.0
    %3131 = vmatprep.subr.mxu0 0.0
    %3132 = vmatpush1.msra.mxu0 0.0
    %3133 = vmatprep.subr.mxu0 0.0
    %3134 = vmatpush1.msra.mxu0 0.0
    %3135 = vmatprep.subr.mxu0 0.0
    %3136 = vmatpush1.msra.mxu0 0.0
    %3137 = vmatprep.subr.mxu0 0.0
    %3138 = vmatpush1.msra.mxu0 0.0
    %3139 = vmatprep.subr.mxu0 0.0
    %3140 = vmatpush1.msra.mxu0 0.0
    %3141 = vmatprep.subr.mxu0 0.0
    %3142 = vmatpush1.msra.mxu0 0.0
    %3143 = vmatprep.subr.mxu0 0.0
    %3144 = vmatpush1.msra.mxu0 0.0
    %3145 = vmatprep.subr.mxu0 0.0
    %3146 = vmatpush1.msra.mxu0 0.0
    %3147 = vmatprep.subr.mxu0 0.0
    %3148 = vmatpush1.msra.mxu0 0.0
    %3149 = vmatprep.subr.mxu0 0.0
    %3150 = vmatpush1.msra.mxu0 0.0
    %3151 = vmatprep.subr.mxu0 0.0
    %3152 = vmatpush1.msra.mxu0 0.0
    %3153 = vmatprep.subr.mxu0 0.0
    %3154 = vmatpush1.msra.mxu0 %v1831
    %3155 = vmatprep.subr.mxu0 0.0
    %3156 = vmatpush1.msra.mxu0 %v1830
    %3157 = vmatprep.subr.mxu0 0.0
    %3158 = vmatpush1.msra.mxu0 %v1829
    %3159 = vmatprep.subr.mxu0 0.0
    %3160 = vmatpush1.msra.mxu0 %v1828
    %3161 = vmatprep.subr.mxu0 0.0
    %3162 = vmatpush2.msra.mxu0 0.0
    %3163 = vmatprep.subr.mxu0 0.0
    %3164 = vmatpush2.msra.mxu0 0.0
    %3165 = vmatprep.subr.mxu0 0.0
    %3166 = vmatpush2.msra.mxu0 0.0
    %3167 = vmatprep.subr.mxu0 0.0
    %3168 = vmatpush2.msra.mxu0 0.0
    %3169 = vmatprep.subr.mxu0 0.0
    %3170 = vmatpush2.msra.mxu0 0.0
    %3171 = vmatprep.subr.mxu0 0.0
    %3172 = vmatpush2.msra.mxu0 0.0
    %3173 = vmatprep.subr.mxu0 0.0
    %3174 = vmatpush2.msra.mxu0 0.0
    %3175 = vmatprep.subr.mxu0 0.0
    %3176 = vmatpush2.msra.mxu0 0.0
    %3177 = vmatprep.subr.mxu0 0.0
    %3178 = vmatpush2.msra.mxu0 0.0
    %3179 = vmatprep.subr.mxu0 0.0
    %3180 = vmatpush2.msra.mxu0 0.0
    %3181 = vmatprep.subr.mxu0 0.0
    %3182 = vmatpush2.msra.mxu0 0.0
    %3183 = vmatprep.subr.mxu0 0.0
    %3184 = vmatpush2.msra.mxu0 0.0
    %3185 = vmatprep.subr.mxu0 0.0
    %3186 = vmatpush2.msra.mxu0 0.0
    %3187 = vmatprep.subr.mxu0 0.0
    %3188 = vmatpush2.msra.mxu0 0.0
    %3189 = vmatprep.subr.mxu0 0.0
    %3190 = vmatpush2.msra.mxu0 0.0
    %3191 = vmatprep.subr.mxu0 0.0
    %3192 = vmatpush2.msra.mxu0 0.0
    %3193 = vmatprep.mubr.f32.mxu0 0.0
    %3194 = vmatmul.mubr.f32.gmra.mxu0 %v3124
    %v3195 = vpop.f32.mrf.mxu0
    %v3196 = vadd.f32 %v3122, %v3195
    %v3197 = vpop.f32.mrf.mxu0
    %3198 = vmatprep.mubr.f32.mxu0 0.0
    %3199 = vmatmul.mubr.f32.gmra.mxu0 %v3127
    %v3200 = vpop.f32.mrf.mxu0
    %v3201 = vadd.f32 %v3122, %v3200
    %v3202 = vpop.f32.mrf.mxu0
    %3203 = vdwg.mxu0
    %v3204 = vsel %vm73, %v3196, 0.0
    %3205 = vadd.xlane.f32.xlu0 %v3204
    %v3206 = vpop.xlane.xlu0 %3205
    %v3207 = vsel %vm73, %v3201, 0.0
    %3208 = vadd.xlane.f32.xlu0 %v3207
    %v3209 = vpop.xlane.xlu0 %3208
    %v3210 = vmul.f32 %v3206, %v1570
    %v3211 = vmul.f32 %v3209, %v1570
    %v3212 = vsub.f32 %v3196, %v3210
    %v3213 = vsub.f32 %v3201, %v3211
    %v3214 = vmul.f32 %v3212, %v3212
    %v3215 = vmul.f32 %v3213, %v3213
    %v3216 = vsel %vm73, %v3214, 0.0
    %3217 = vadd.xlane.f32.xlu0 %v3216
    %v3218 = vpop.xlane.xlu0 %3217
    %v3219 = vsel %vm73, %v3215, 0.0
    %3220 = vadd.xlane.f32.xlu0 %v3219
    %v3221 = vpop.xlane.xlu0 %3220
    %v3222 = vmul.f32 %v3218, %v1583
    %v3223 = vmul.f32 %v3221, %v1583
    %v3224 = vrsqrt.pop %v3222
    %v3225 = vmul.f32 %v3222, %v3224
    %vm3226 = vcmp.eq.f32.partialorder %v3222, inf
    %v3227 = vsel %vm3226, %v3222, %v3225
    %vm3228 = vcmp.eq.f32.partialorder %v3222, 0.0
    %v3229 = vand.u32 %v3222, 2147483648
    %v3230 = vsel %vm3228, %v3229, %v3227
    %v3231 = vrsqrt.pop %v3223
    %v3232 = vmul.f32 %v3223, %v3231
    %vm3233 = vcmp.eq.f32.partialorder %v3223, inf
    %v3234 = vsel %vm3233, %v3223, %v3232
    %vm3235 = vcmp.eq.f32.partialorder %v3223, 0.0
    %v3236 = vand.u32 %v3223, 2147483648
    %v3237 = vsel %vm3235, %v3236, %v3234
    %v3238 = vlaneseq
    %v3239 = vshrl.u32 %v3238, 7
    %v3240 = vsub.s32 0, %v3239
    %v3241 = vrot.slane %v62, %v3240
    %v3242 = vmul.f32 %v3241, %v3212
    %v3243 = vmul.f32 %v3241, %v3213
    %v3244 = vadd.f32 %v3230, 1e-08
    %v3245 = vadd.f32 %v3237, 1e-08
    %v3246 = vrcp.pop %v3244
    %v3247 = vmul.f32 %v3242, %v3246
    %v3248 = vrcp.pop %v3245
    %v3249 = vmul.f32 %v3243, %v3248
    %v3250 = vlaneseq
    %v3251 = vshrl.u32 %v3250, 7
    %v3252 = vsub.s32 0, %v3251
    %v3253 = vrot.slane %v63, %v3252
    %v3254 = vadd.f32 %v3247, %v3253
    %v3255 = vadd.f32 %v3249, %v3253
    %v3256 = vadd.f32 %v1618, %v3254
    %v3257 = vadd.f32 %v1619, %v3255
    %v3258 = vld [vmem:[#allocation7 + $0xa0] sm:$0xff]
    %v3259 = vld [vmem:[#allocation7 + $0xa8] sm:$0xff]
    %v3260 = vld [vmem:[#allocation7 + $0xb0] sm:$0xff]
    %v3261 = vld [vmem:[#allocation7 + $0xb8] sm:$0xff]
    %v3262 = vld [vmem:[#allocation7 + $0xc0] sm:$0xff]
    %v3263 = vld [vmem:[#allocation7 + $0xc8] sm:$0xff]
    %v3264 = vld [vmem:[#allocation7 + $0xd0] sm:$0xff]
    %v3265 = vld [vmem:[#allocation7 + $0xd8] sm:$0xff]
    %v3266 = vld [vmem:[#allocation7 + $0xe0] sm:$0xff]
    %v3267 = vld [vmem:[#allocation7 + $0xe8] sm:$0xff]
    %v3268 = vld [vmem:[#allocation7 + $0xf0] sm:$0xff]
    %v3269 = vld [vmem:[#allocation7 + $0xf8] sm:$0xff]
    %v3270 = vld [vmem:[#allocation7 + $0x109] sm:$0x1]
    %v3271 = vlaneseq
    %v3272 = vshrl.u32 %v3271, 7
    %v3273 = vsub.s32 0, %v3272
    %v3274 = vrot.slane %v3270, %v3273
    %v3276 = vsel %vm73, %v3256, 0
    %v3279 = vsel %vm73, %v3257, 0
    %3281 = vmatprep.subr.mxu0 0.0
    %3282 = vmatpush1.msra.mxu0 0.0
    %3283 = vmatprep.subr.mxu0 0.0
    %3284 = vmatpush1.msra.mxu0 0.0
    %3285 = vmatprep.subr.mxu0 0.0
    %3286 = vmatpush1.msra.mxu0 0.0
    %3287 = vmatprep.subr.mxu0 0.0
    %3288 = vmatpush1.msra.mxu0 0.0
    %3289 = vmatprep.subr.mxu0 0.0
    %3290 = vmatpush1.msra.mxu0 0.0
    %3291 = vmatprep.subr.mxu0 0.0
    %3292 = vmatpush1.msra.mxu0 0.0
    %3293 = vmatprep.subr.mxu0 0.0
    %3294 = vmatpush1.msra.mxu0 0.0
    %3295 = vmatprep.subr.mxu0 0.0
    %3296 = vmatpush1.msra.mxu0 0.0
    %3297 = vmatprep.subr.mxu0 0.0
    %3298 = vmatpush1.msra.mxu0 0.0
    %3299 = vmatprep.subr.mxu0 0.0
    %3300 = vmatpush1.msra.mxu0 0.0
    %3301 = vmatprep.subr.mxu0 0.0
    %3302 = vmatpush1.msra.mxu0 0.0
    %3303 = vmatprep.subr.mxu0 0.0
    %3304 = vmatpush1.msra.mxu0 0.0
    %3305 = vmatprep.subr.mxu0 0.0
    %3306 = vmatpush1.msra.mxu0 %v3261
    %3307 = vmatprep.subr.mxu0 0.0
    %3308 = vmatpush1.msra.mxu0 %v3260
    %3309 = vmatprep.subr.mxu0 0.0
    %3310 = vmatpush1.msra.mxu0 %v3259
    %3311 = vmatprep.subr.mxu0 0.0
    %3312 = vmatpush1.msra.mxu0 %v3258
    %3313 = vmatprep.subr.mxu0 0.0
    %3314 = vmatpush2.msra.mxu0 0.0
    %3315 = vmatprep.subr.mxu0 0.0
    %3316 = vmatpush2.msra.mxu0 0.0
    %3317 = vmatprep.subr.mxu0 0.0
    %3318 = vmatpush2.msra.mxu0 0.0
    %3319 = vmatprep.subr.mxu0 0.0
    %3320 = vmatpush2.msra.mxu0 0.0
    %3321 = vmatprep.subr.mxu0 0.0
    %3322 = vmatpush2.msra.mxu0 0.0
    %3323 = vmatprep.subr.mxu0 0.0
    %3324 = vmatpush2.msra.mxu0 0.0
    %3325 = vmatprep.subr.mxu0 0.0
    %3326 = vmatpush2.msra.mxu0 0.0
    %3327 = vmatprep.subr.mxu0 0.0
    %3328 = vmatpush2.msra.mxu0 0.0
    %3329 = vmatprep.subr.mxu0 0.0
    %3330 = vmatpush2.msra.mxu0 0.0
    %3331 = vmatprep.subr.mxu0 0.0
    %3332 = vmatpush2.msra.mxu0 0.0
    %3333 = vmatprep.subr.mxu0 0.0
    %3334 = vmatpush2.msra.mxu0 0.0
    %3335 = vmatprep.subr.mxu0 0.0
    %3336 = vmatpush2.msra.mxu0 0.0
    %3337 = vmatprep.subr.mxu0 0.0
    %3338 = vmatpush2.msra.mxu0 0.0
    %3339 = vmatprep.subr.mxu0 0.0
    %3340 = vmatpush2.msra.mxu0 0.0
    %3341 = vmatprep.subr.mxu0 0.0
    %3342 = vmatpush2.msra.mxu0 0.0
    %3343 = vmatprep.subr.mxu0 0.0
    %3344 = vmatpush2.msra.mxu0 0.0
    %3345 = vmatprep.mubr.f32.mxu0 0.0
    %3346 = vmatmul.mubr.f32.gmra.mxu0 %v3276
    %v3347 = vpop.f32.mrf.mxu0
    %v3348 = vadd.f32 %v3274, %v3347
    %v3349 = vpop.f32.mrf.mxu0
    %3350 = vmatprep.mubr.f32.mxu0 0.0
    %3351 = vmatmul.mubr.f32.gmra.mxu0 %v3279
    %v3352 = vpop.f32.mrf.mxu0
    %v3353 = vadd.f32 %v3274, %v3352
    %v3354 = vpop.f32.mrf.mxu0
    %3355 = vdwg.mxu0
    %v3356 = vmax.f32 %v3348, 0.0
    %v3357 = vmax.f32 %v3353, 0.0
    %v3358 = vld [vmem:[#allocation7 + $0x10a] sm:$0x1]
    %v3359 = vlaneseq
    %v3360 = vshrl.u32 %v3359, 7
    %v3361 = vsub.s32 0, %v3360
    %v3362 = vrot.slane %v3358, %v3361
    %vm3363 = vcmask 523264
    %v3365 = vsel %vm3363, %v3356, 0
    %v3368 = vsel %vm3363, %v3357, 0
    %3370 = vmatprep.subr.mxu0 0.0
    %3371 = vmatpush1.msra.mxu0 0.0
    %3372 = vmatprep.subr.mxu0 0.0
    %3373 = vmatpush1.msra.mxu0 0.0
    %3374 = vmatprep.subr.mxu0 0.0
    %3375 = vmatpush1.msra.mxu0 0.0
    %3376 = vmatprep.subr.mxu0 0.0
    %3377 = vmatpush1.msra.mxu0 0.0
    %3378 = vmatprep.subr.mxu0 0.0
    %3379 = vmatpush1.msra.mxu0 0.0
    %3380 = vmatprep.subr.mxu0 0.0
    %3381 = vmatpush1.msra.mxu0 0.0
    %3382 = vmatprep.subr.mxu0 0.0
    %3383 = vmatpush1.msra.mxu0 0.0
    %3384 = vmatprep.subr.mxu0 0.0
    %3385 = vmatpush1.msra.mxu0 0.0
    %3386 = vmatprep.subr.mxu0 0.0
    %3387 = vmatpush1.msra.mxu0 %v3269
    %3388 = vmatprep.subr.mxu0 0.0
    %3389 = vmatpush1.msra.mxu0 %v3268
    %3390 = vmatprep.subr.mxu0 0.0
    %3391 = vmatpush1.msra.mxu0 %v3267
    %3392 = vmatprep.subr.mxu0 0.0
    %3393 = vmatpush1.msra.mxu0 %v3266
    %3394 = vmatprep.subr.mxu0 0.0
    %3395 = vmatpush1.msra.mxu0 %v3265
    %3396 = vmatprep.subr.mxu0 0.0
    %3397 = vmatpush1.msra.mxu0 %v3264
    %3398 = vmatprep.subr.mxu0 0.0
    %3399 = vmatpush1.msra.mxu0 %v3263
    %3400 = vmatprep.subr.mxu0 0.0
    %3401 = vmatpush1.msra.mxu0 %v3262
    %3402 = vmatprep.subr.mxu0 0.0
    %3403 = vmatpush2.msra.mxu0 0.0
    %3404 = vmatprep.subr.mxu0 0.0
    %3405 = vmatpush2.msra.mxu0 0.0
    %3406 = vmatprep.subr.mxu0 0.0
    %3407 = vmatpush2.msra.mxu0 0.0
    %3408 = vmatprep.subr.mxu0 0.0
    %3409 = vmatpush2.msra.mxu0 0.0
    %3410 = vmatprep.subr.mxu0 0.0
    %3411 = vmatpush2.msra.mxu0 0.0
    %3412 = vmatprep.subr.mxu0 0.0
    %3413 = vmatpush2.msra.mxu0 0.0
    %3414 = vmatprep.subr.mxu0 0.0
    %3415 = vmatpush2.msra.mxu0 0.0
    %3416 = vmatprep.subr.mxu0 0.0
    %3417 = vmatpush2.msra.mxu0 0.0
    %3418 = vmatprep.subr.mxu0 0.0
    %3419 = vmatpush2.msra.mxu0 0.0
    %3420 = vmatprep.subr.mxu0 0.0
    %3421 = vmatpush2.msra.mxu0 0.0
    %3422 = vmatprep.subr.mxu0 0.0
    %3423 = vmatpush2.msra.mxu0 0.0
    %3424 = vmatprep.subr.mxu0 0.0
    %3425 = vmatpush2.msra.mxu0 0.0
    %3426 = vmatprep.subr.mxu0 0.0
    %3427 = vmatpush2.msra.mxu0 0.0
    %3428 = vmatprep.subr.mxu0 0.0
    %3429 = vmatpush2.msra.mxu0 0.0
    %3430 = vmatprep.subr.mxu0 0.0
    %3431 = vmatpush2.msra.mxu0 0.0
    %3432 = vmatprep.subr.mxu0 0.0
    %3433 = vmatpush2.msra.mxu0 0.0
    %3434 = vmatprep.mubr.f32.mxu0 0.0
    %3435 = vmatmul.mubr.f32.gmra.mxu0 %v3365
    %v3436 = vpop.f32.mrf.mxu0
    %v3437 = vadd.f32 %v3362, %v3436
    %v3438 = vpop.f32.mrf.mxu0
    %3439 = vmatprep.mubr.f32.mxu0 0.0
    %3440 = vmatmul.mubr.f32.gmra.mxu0 %v3368
    %v3441 = vpop.f32.mrf.mxu0
    %v3442 = vadd.f32 %v3362, %v3441
    %v3443 = vpop.f32.mrf.mxu0
    %3444 = vdwg.mxu0
    %v3445 = vsel %vm73, %v3437, 0.0
    %3446 = vadd.xlane.f32.xlu0 %v3445
    %v3447 = vpop.xlane.xlu0 %3446
    %v3448 = vsel %vm73, %v3442, 0.0
    %3449 = vadd.xlane.f32.xlu0 %v3448
    %v3450 = vpop.xlane.xlu0 %3449
    %v3451 = vmul.f32 %v3447, %v1570
    %v3452 = vmul.f32 %v3450, %v1570
    %v3453 = vsub.f32 %v3437, %v3451
    %v3454 = vsub.f32 %v3442, %v3452
    %v3455 = vmul.f32 %v3453, %v3453
    %v3456 = vmul.f32 %v3454, %v3454
    %v3457 = vsel %vm73, %v3455, 0.0
    %3458 = vadd.xlane.f32.xlu0 %v3457
    %v3459 = vpop.xlane.xlu0 %3458
    %v3460 = vsel %vm73, %v3456, 0.0
    %3461 = vadd.xlane.f32.xlu0 %v3460
    %v3462 = vpop.xlane.xlu0 %3461
    %v3463 = vmul.f32 %v3459, %v1583
    %v3464 = vmul.f32 %v3462, %v1583
    %v3465 = vrsqrt.pop %v3463
    %v3466 = vmul.f32 %v3463, %v3465
    %vm3467 = vcmp.eq.f32.partialorder %v3463, inf
    %v3468 = vsel %vm3467, %v3463, %v3466
    %vm3469 = vcmp.eq.f32.partialorder %v3463, 0.0
    %v3470 = vand.u32 %v3463, 2147483648
    %v3471 = vsel %vm3469, %v3470, %v3468
    %v3472 = vrsqrt.pop %v3464
    %v3473 = vmul.f32 %v3464, %v3472
    %vm3474 = vcmp.eq.f32.partialorder %v3464, inf
    %v3475 = vsel %vm3474, %v3464, %v3473
    %vm3476 = vcmp.eq.f32.partialorder %v3464, 0.0
    %v3477 = vand.u32 %v3464, 2147483648
    %v3478 = vsel %vm3476, %v3477, %v3475
    %v3479 = vmul.f32 %v3241, %v3453
    %v3480 = vmul.f32 %v3241, %v3454
    %v3481 = vadd.f32 %v3471, 1e-08
    %v3482 = vadd.f32 %v3478, 1e-08
    %v3483 = vrcp.pop %v3481
    %v3484 = vmul.f32 %v3479, %v3483
    %v3485 = vrcp.pop %v3482
    %v3486 = vmul.f32 %v3480, %v3485
    %v3487 = vadd.f32 %v3484, %v3253
    %v3488 = vadd.f32 %v3486, %v3253
    %v3489 = vadd.f32 %v3256, %v3487
    %v3490 = vadd.f32 %v3257, %v3488
    %3491 = vst.msk [vmem:[#allocation8] sm:$0xff] %vm73, %v3489
    %3492 = vst.msk [vmem:[#allocation8 + $0x8] sm:$0xff] %vm73, %v3490
    // Predicated region
    $region26: #{tpu_custom_call.1} parent=1 // pred_check
      _
    $region27: #{tpu_custom_call.1} parent=1 // pred_check_branch
      %3494 = sbr.rel (0) target = $region29
    $region28: #{tpu_custom_call.1} parent=1 // pred_region
      %s3496 = ssub.s32 256, 256
      %3497 = vsyncadd [#allocation4], %s3496
      %s3498 = sshll.u32 [#allocation8], 4
      %s3499 = int_to_ptr.vmem [resolvable:$true] %s3498
      %3504 = dma.vmem_to_hbm [thread:$0]  %s3499, 256, %s3, [#allocation4], 128, 128, 8
    $region29: #{tpu_custom_call.1} parent=1 // pred_fallthru
      _
    // Predicated region
    $region30: #{tpu_custom_call.1} parent=1 // pred_check
      _
    $region31: #{tpu_custom_call.1} parent=1 // pred_check_branch
      %3506 = sbr.rel (0) target = $region33
    $region32: #{tpu_custom_call.1} parent=1 // pred_region
      %3507 = dma.done [#allocation4], 256
    $region33: #{tpu_custom_call.1} parent=1 // pred_fallthru
      _
    %3508 = vsyncpa [#allocation3], 1
    %3509 = vsyncpa [#allocation6], 1
    %3510 = vsyncpa [#allocation4], 1

</llo_original>
